<compile_context>
chip_gen: v6e
topology: v6e:2x2x1
jax: 0.10.0
libtpu: 0.0.40
codegen_flags: <defaults>
</compile_context>

<pallas_src>
import functools
import math

import jax
import jax.numpy as jnp
from jax.experimental import pallas as pl
from jax.experimental.pallas import tpu as pltpu


# ------------------------------- the kernel --------------------------------

def decoder_layer_kernel(
    tgt_ref, src_ref, bias_ref,
    wqkv1_ref, bqkv1_ref, wo1_ref, bo1_ref,
    wq2_ref, bq2_ref, wkv2_ref, bkv2_ref, wo2_ref, bo2_ref,
    fw1_ref, fb1_ref, fw2_ref, fb2_ref,
    lnw_ref, lnb_ref,
    out_ref, *, n_head, d_k, d_v,
):
    H, dk, dv = n_head, d_k, d_v
    scale = 1.0 / math.sqrt(dk)

    x = tgt_ref[0]        # (T, D)
    src = src_ref[0]      # (S, D)
    bias = bias_ref[0]    # (T, S) additive mask bias (0 = keep, -1e9 = masked)

    def layer_norm(y, idx):
        w = lnw_ref[idx:idx + 1, :]          # (1, D)
        b = lnb_ref[idx:idx + 1, :]
        mu = jnp.mean(y, axis=-1, keepdims=True)
        var = jnp.mean((y - mu) ** 2, axis=-1, keepdims=True)
        return (y - mu) * jax.lax.rsqrt(var + 1e-5) * w + b

    def attention(q3, k3, v3, attn_bias):
        # q3: (H, Tq, dk), k3: (H, Tk, dk), v3: (H, Tk, dv)
        s = jnp.einsum('hqd,hkd->hqk', q3, k3,
                       preferred_element_type=jnp.float32) * scale
        if attn_bias is not None:
            s = s + attn_bias[None, :, :]
        m = jnp.max(s, axis=-1, keepdims=True)
        p = jnp.exp(s - m)
        l = jnp.sum(p, axis=-1, keepdims=True)
        inv = pl.reciprocal(l, approx=True)     # EUP slot
        inv = inv * (2.0 - l * inv)             # one Newton step -> ~f32 accuracy
        p = p * inv
        return jnp.einsum('hqk,hkd->hqd', p, v3,
                          preferred_element_type=jnp.float32)   # (H, Tq, dv)

    def out_proj(o3, wo_r, bo_r):
        # concat(heads) @ Wo  ==  sum_h  o3[h] @ Wo[h]
        per_head = jnp.einsum('hqd,hdf->hqf', o3, wo_r[...],
                              preferred_element_type=jnp.float32)
        return jnp.sum(per_head, axis=0) + bo_r[...]

    # ---- self attention block ----
    xb = jnp.broadcast_to(x, (H,) + x.shape)               # (H, T, D)
    qkv = jnp.einsum('htd,hdf->htf', xb, wqkv1_ref[...],
                     preferred_element_type=jnp.float32) + bqkv1_ref[...]
    q3 = qkv[..., :dk]
    k3 = qkv[..., dk:2 * dk]
    v3 = qkv[..., 2 * dk:2 * dk + dv]
    sa = out_proj(attention(q3, k3, v3, None), wo1_ref, bo1_ref)
    x = layer_norm(x + sa, 0)

    # ---- encoder-decoder (cross) attention block ----
    xb = jnp.broadcast_to(x, (H,) + x.shape)                # (H, T, D)
    sb = jnp.broadcast_to(src, (H,) + src.shape)            # (H, S, D)
    q3 = jnp.einsum('htd,hdf->htf', xb, wq2_ref[...],
                    preferred_element_type=jnp.float32) + bq2_ref[...]
    kv = jnp.einsum('hsd,hdf->hsf', sb, wkv2_ref[...],
                    preferred_element_type=jnp.float32) + bkv2_ref[...]
    k3 = kv[..., :dk]
    v3 = kv[..., dk:dk + dv]
    ca = out_proj(attention(q3, k3, v3, bias), wo2_ref, bo2_ref)
    x = layer_norm(x + ca, 1)

    # ---- position-wise feed-forward block ----
    h = jnp.maximum(
        jnp.dot(x, fw1_ref[...], preferred_element_type=jnp.float32) + fb1_ref[...],
        0.0)
    ff = jnp.dot(h, fw2_ref[...], preferred_element_type=jnp.float32) + fb2_ref[...]
    x = layer_norm(x + ff, 2)

    out_ref[0] = x


# --------------------------- host-side weight packing ------------------------

def pack_params(p, d_model, n_head):
    """Pack the logical (PyTorch-layout) params into the kernel operand list."""
    H = n_head
    dk = dv = d_model // n_head

    def head_major(w, dh):   # (D, H*dh) -> (H, D, dh)
        return jnp.transpose(w.reshape(d_model, H, dh), (1, 0, 2))

    def head_bias(b, dh):    # (1, H*dh) -> (H, 1, dh)
        return b.reshape(H, dh)[:, None, :]

    wqkv1 = jnp.concatenate([head_major(p["wq1"], dk),
                             head_major(p["wk1"], dk),
                             head_major(p["wv1"], dv)], axis=-1)   # (H, D, 3*dk)
    bqkv1 = jnp.concatenate([head_bias(p["bq1"], dk),
                             head_bias(p["bk1"], dk),
                             head_bias(p["bv1"], dv)], axis=-1)    # (H, 1, 3*dk)
    wo1 = p["wo1"].reshape(H, dv, d_model)                         # (H, dv, D)

    wq2 = head_major(p["wq2"], dk)                                 # (H, D, dk)
    bq2 = head_bias(p["bq2"], dk)                                  # (H, 1, dk)
    wkv2 = jnp.concatenate([head_major(p["wk2"], dk),
                            head_major(p["wv2"], dv)], axis=-1)    # (H, D, 2*dk)
    bkv2 = jnp.concatenate([head_bias(p["bk2"], dk),
                            head_bias(p["bv2"], dv)], axis=-1)     # (H, 1, 2*dk)
    wo2 = p["wo2"].reshape(H, dv, d_model)

    lnw = jnp.concatenate([p["ln1w"], p["ln2w"], p["ln3w"]], axis=0)  # (3, D)
    lnb = jnp.concatenate([p["ln1b"], p["ln2b"], p["ln3b"]], axis=0)  # (3, D)

    return [wqkv1, bqkv1, wo1, p["bo1"],
            wq2, bq2, wkv2, bkv2, wo2, p["bo2"],
            p["fw1"], p["fb1"], p["fw2"], p["fb2"],
            lnw, lnb]


# ------------------------------ host wrapper --------------------------------

def transformer_decoder_layer(tgt, src, mask, params, n_head):
    B, T, D = tgt.shape
    S = src.shape[1]
    d_k = D // n_head
    d_v = D // n_head

    # Additive attention bias precomputed on the host (f32): 0 keep, -1e9 masked.
    bias = (mask - 1.0) * 1e9

    weights = pack_params(params, D, n_head)

    def full_spec(arr):
        shp = arr.shape
        return pl.BlockSpec(shp, lambda b, _s=shp: (0,) * len(_s))

    in_specs = [
        pl.BlockSpec((1, T, D), lambda b: (b, 0, 0)),   # tgt
        pl.BlockSpec((1, S, D), lambda b: (b, 0, 0)),   # encoded_src
        pl.BlockSpec((1, T, S), lambda b: (b, 0, 0)),   # additive mask bias
    ] + [full_spec(w) for w in weights]

    out_specs = pl.BlockSpec((1, T, D), lambda b: (b, 0, 0))

    kernel = functools.partial(decoder_layer_kernel,
                               n_head=n_head, d_k=d_k, d_v=d_v)

    return pl.pallas_call(
        kernel,
        out_shape=jax.ShapeDtypeStruct((B, T, D), jnp.float32),
        grid=(B,),
        in_specs=in_specs,
        out_specs=out_specs,
        compiler_params=pltpu.CompilerParams(
            dimension_semantics=("parallel",),      # batch axis -> both v7x TCs
            vmem_limit_bytes=32 * 1024 * 1024),
    )(tgt, src, bias, *weights)


# --------------------------- parameter creation ------------------------------

def init_params(key, d_model, n_head, dim_feedforward):
    d_k = d_model // n_head
    d_v = d_model // n_head
    hk = d_k * n_head
    hv = d_v * n_head

    keys = jax.random.split(key, 16)
    std = 0.05

    def lin(k, fan_in, fan_out):
        # stored as (in, out) so the math is y = x @ W + b
        return (std * jax.random.normal(k, (fan_in, fan_out), jnp.float32),
                jnp.zeros((1, fan_out), jnp.float32))

    p = {}
    # self attention
    p["wq1"], p["bq1"] = lin(keys[0], d_model, hk)
    p["wk1"], p["bk1"] = lin(keys[1], d_model, hk)
    p["wv1"], p["bv1"] = lin(keys[2], d_model, hv)
    p["wo1"], p["bo1"] = lin(keys[3], hv, d_model)
    p["ln1w"] = jnp.ones((1, d_model), jnp.float32)
    p["ln1b"] = jnp.zeros((1, d_model), jnp.float32)
    # cross attention
    p["wq2"], p["bq2"] = lin(keys[4], d_model, hk)
    p["wk2"], p["bk2"] = lin(keys[5], d_model, hk)
    p["wv2"], p["bv2"] = lin(keys[6], d_model, hv)
    p["wo2"], p["bo2"] = lin(keys[7], hv, d_model)
    p["ln2w"] = jnp.ones((1, d_model), jnp.float32)
    p["ln2b"] = jnp.zeros((1, d_model), jnp.float32)
    # feed-forward
    p["fw1"], p["fb1"] = lin(keys[8], d_model, dim_feedforward)
    p["fw2"], p["fb2"] = lin(keys[9], dim_feedforward, d_model)
    p["ln3w"] = jnp.ones((1, d_model), jnp.float32)
    p["ln3b"] = jnp.zeros((1, d_model), jnp.float32)
    return p


# ------------------------------ pure-JAX reference ---------------------------

def ref_forward(tgt, src, mask, p, n_head):
    d_model = tgt.shape[-1]
    d_k = d_model // n_head
    d_v = d_model // n_head
    bias = (mask - 1.0) * 1e9   # same additive-mask semantics as the kernel

    def ln(x, w, b):
        mu = jnp.mean(x, -1, keepdims=True)
        var = jnp.mean((x - mu) ** 2, -1, keepdims=True)
        return (x - mu) * jax.lax.rsqrt(var + 1e-5) * w + b

    def mha(xq, xkv, wq, bq, wk, bk, wv, bv, wo, bo, m):
        B, Tq, _ = xq.shape
        Tk = xkv.shape[1]
        q = (xq @ wq + bq).reshape(B, Tq, n_head, d_k).transpose(0, 2, 1, 3)
        k = (xkv @ wk + bk).reshape(B, Tk, n_head, d_k).transpose(0, 2, 1, 3)
        v = (xkv @ wv + bv).reshape(B, Tk, n_head, d_v).transpose(0, 2, 1, 3)
        s = jnp.einsum("bhqd,bhkd->bhqk", q, k) / math.sqrt(d_k)
        if m is not None:
            s = s + m[:, None]
        a = jax.nn.softmax(s, axis=-1)
        o = jnp.einsum("bhqk,bhkd->bhqd", a, v).transpose(0, 2, 1, 3).reshape(B, Tq, -1)
        return o @ wo + bo

    x = tgt
    x = ln(x + mha(x, x, p["wq1"], p["bq1"], p["wk1"], p["bk1"], p["wv1"],
                   p["bv1"], p["wo1"], p["bo1"], None), p["ln1w"], p["ln1b"])
    x = ln(x + mha(x, src, p["wq2"], p["bq2"], p["wk2"], p["bk2"], p["wv2"],
                   p["bv2"], p["wo2"], p["bo2"], bias), p["ln2w"], p["ln2b"])
    h = jnp.maximum(x @ p["fw1"] + p["fb1"], 0.0)
    x = ln(x + (h @ p["fw2"] + p["fb2"]), p["ln3w"], p["ln3b"])
    return x


# ----------------------------------- main ------------------------------------

if __name__ == "__main__":
    B, T, S = 2, 8, 8
    d_model, n_head, dim_ff = 32, 4, 64

    key = jax.random.PRNGKey(0)
    k_tgt, k_src, k_mask, k_par = jax.random.split(key, 4)

    tgt = jax.random.normal(k_tgt, (B, T, d_model), jnp.float32)
    src = jax.random.normal(k_src, (B, S, d_model), jnp.float32)
    # mask: 1.0 = attend, 0.0 = masked (applied in cross-attention only, matching
    # `self.multi_head_attention(tgt, encoded_src, encoded_src, mask)`)
    mask = (jax.random.uniform(k_mask, (B, T, S)) > 0.2).astype(jnp.float32)

    params = init_params(k_par, d_model, n_head, dim_ff)

    out = transformer_decoder_layer(tgt, src, mask, params, n_head)
    out = jax.block_until_ready(out)

    ref = ref_forward(tgt, src, mask, params, n_head)
    assert out.shape == (B, T, d_model)
    # Tolerance slightly looser than pure-f32 to cover the EUP approximate
    # reciprocal (Newton-refined) in the softmax; structural bugs would be >>1e-3.
    assert jnp.allclose(out, ref, atol=1e-3, rtol=1e-3), "mismatch vs reference"

    print("KERNEL_OK")
</pallas_src>

<mosaic_0001>
module attributes {stable_mosaic.version = 11 : i64} {
  func.func @decoder_layer_kernel(%arg0: i32, %arg1: memref<1x8x32xf32, #tpu.memory_space<vmem>>, %arg2: memref<1x8x32xf32, #tpu.memory_space<vmem>>, %arg3: memref<1x8x8xf32, #tpu.memory_space<vmem>>, %arg4: memref<4x32x24xf32, #tpu.memory_space<vmem>>, %arg5: memref<4x1x24xf32, #tpu.memory_space<vmem>>, %arg6: memref<4x8x32xf32, #tpu.memory_space<vmem>>, %arg7: memref<1x32xf32, #tpu.memory_space<vmem>>, %arg8: memref<4x32x8xf32, #tpu.memory_space<vmem>>, %arg9: memref<4x1x8xf32, #tpu.memory_space<vmem>>, %arg10: memref<4x32x16xf32, #tpu.memory_space<vmem>>, %arg11: memref<4x1x16xf32, #tpu.memory_space<vmem>>, %arg12: memref<4x8x32xf32, #tpu.memory_space<vmem>>, %arg13: memref<1x32xf32, #tpu.memory_space<vmem>>, %arg14: memref<32x64xf32, #tpu.memory_space<vmem>>, %arg15: memref<1x64xf32, #tpu.memory_space<vmem>>, %arg16: memref<64x32xf32, #tpu.memory_space<vmem>>, %arg17: memref<1x32xf32, #tpu.memory_space<vmem>>, %arg18: memref<3x32xf32, #tpu.memory_space<vmem>>, %arg19: memref<3x32xf32, #tpu.memory_space<vmem>>, %arg20: memref<1x8x32xf32, #tpu.memory_space<vmem>>) attributes {dimension_semantics = [#tpu.dimension_semantics<parallel>], iteration_bounds = array<i64: 2>, scalar_prefetch = 0 : i64, scratch_operands = 0 : i64, tpu.core_type = #tpu.core_type<tc>, window_params = [{transform_indices = @transform_0, window_bounds = array<i64: 1, 8, 32>}, {transform_indices = @transform_1, window_bounds = array<i64: 1, 8, 32>}, {transform_indices = @transform_2, window_bounds = array<i64: 1, 8, 8>}, {pipeline_mode = #tpu.pipeline_mode<synchronous>, transform_indices = @transform_3, window_bounds = array<i64: 4, 32, 24>}, {pipeline_mode = #tpu.pipeline_mode<synchronous>, transform_indices = @transform_4, window_bounds = array<i64: 4, 1, 24>}, {pipeline_mode = #tpu.pipeline_mode<synchronous>, transform_indices = @transform_5, window_bounds = array<i64: 4, 8, 32>}, {pipeline_mode = #tpu.pipeline_mode<synchronous>, transform_indices = @transform_6, window_bounds = array<i64: 1, 32>}, {pipeline_mode = #tpu.pipeline_mode<synchronous>, transform_indices = @transform_7, window_bounds = array<i64: 4, 32, 8>}, {pipeline_mode = #tpu.pipeline_mode<synchronous>, transform_indices = @transform_8, window_bounds = array<i64: 4, 1, 8>}, {pipeline_mode = #tpu.pipeline_mode<synchronous>, transform_indices = @transform_9, window_bounds = array<i64: 4, 32, 16>}, {pipeline_mode = #tpu.pipeline_mode<synchronous>, transform_indices = @transform_10, window_bounds = array<i64: 4, 1, 16>}, {pipeline_mode = #tpu.pipeline_mode<synchronous>, transform_indices = @transform_11, window_bounds = array<i64: 4, 8, 32>}, {pipeline_mode = #tpu.pipeline_mode<synchronous>, transform_indices = @transform_12, window_bounds = array<i64: 1, 32>}, {pipeline_mode = #tpu.pipeline_mode<synchronous>, transform_indices = @transform_13, window_bounds = array<i64: 32, 64>}, {pipeline_mode = #tpu.pipeline_mode<synchronous>, transform_indices = @transform_14, window_bounds = array<i64: 1, 64>}, {pipeline_mode = #tpu.pipeline_mode<synchronous>, transform_indices = @transform_15, window_bounds = array<i64: 64, 32>}, {pipeline_mode = #tpu.pipeline_mode<synchronous>, transform_indices = @transform_16, window_bounds = array<i64: 1, 32>}, {pipeline_mode = #tpu.pipeline_mode<synchronous>, transform_indices = @transform_17, window_bounds = array<i64: 3, 32>}, {pipeline_mode = #tpu.pipeline_mode<synchronous>, transform_indices = @transform_18, window_bounds = array<i64: 3, 32>}, {transform_indices = @transform_19, window_bounds = array<i64: 1, 8, 32>}]} {
    %c0 = arith.constant 0 : index
    %c0_0 = arith.constant 0 : index
    %c0_1 = arith.constant 0 : index
    %0 = vector.load %arg1[%c0, %c0_0, %c0_1] : memref<1x8x32xf32, #tpu.memory_space<vmem>>, vector<1x8x32xf32>
    %1 = vector.shape_cast %0 : vector<1x8x32xf32> to vector<8x32xf32>
    %c0_2 = arith.constant 0 : index
    %c0_3 = arith.constant 0 : index
    %c0_4 = arith.constant 0 : index
    %2 = vector.load %arg2[%c0_2, %c0_3, %c0_4] : memref<1x8x32xf32, #tpu.memory_space<vmem>>, vector<1x8x32xf32>
    %3 = vector.shape_cast %2 : vector<1x8x32xf32> to vector<8x32xf32>
    %c0_5 = arith.constant 0 : index
    %c0_6 = arith.constant 0 : index
    %c0_7 = arith.constant 0 : index
    %4 = vector.load %arg3[%c0_5, %c0_6, %c0_7] : memref<1x8x8xf32, #tpu.memory_space<vmem>>, vector<1x8x8xf32>
    %5 = vector.shape_cast %4 : vector<1x8x8xf32> to vector<8x8xf32>
    %6 = vector.shape_cast %1 : vector<8x32xf32> to vector<1x8x32xf32>
    %7 = vector.broadcast %6 : vector<1x8x32xf32> to vector<4x8x32xf32>
    %c0_8 = arith.constant 0 : index
    %c0_9 = arith.constant 0 : index
    %c0_10 = arith.constant 0 : index
    %8 = vector.load %arg4[%c0_8, %c0_9, %c0_10] : memref<4x32x24xf32, #tpu.memory_space<vmem>>, vector<4x32x24xf32>
    "tpu.trace_start"() <{level = 10 : i32, message = "htd,hdf->htf"}> : () -> ()
    %cst = arith.constant dense<0.000000e+00> : vector<4x8x24xf32>
    %9 = tpu.matmul %7, %8, %cst {dimension_numbers = #tpu.dot_dimension_numbers<[2], [1], [1], [2], [0, 0, 0, 1, 1, 2], [0], [0]>} : vector<4x8x32xf32>, vector<4x32x24xf32>, vector<4x8x24xf32> -> vector<4x8x24xf32>
    "tpu.trace_stop"() : () -> ()
    %c0_11 = arith.constant 0 : index
    %c0_12 = arith.constant 0 : index
    %c0_13 = arith.constant 0 : index
    %10 = vector.load %arg5[%c0_11, %c0_12, %c0_13] : memref<4x1x24xf32, #tpu.memory_space<vmem>>, vector<4x1x24xf32>
    %11 = vector.broadcast %10 : vector<4x1x24xf32> to vector<4x8x24xf32>
    %12 = arith.addf %9, %11 : vector<4x8x24xf32>
    %13 = vector.extract_strided_slice %12 {offsets = [0, 0, 0], sizes = [4, 8, 8], strides = [1, 1, 1]} : vector<4x8x24xf32> to vector<4x8x8xf32>
    %14 = vector.extract_strided_slice %12 {offsets = [0, 0, 8], sizes = [4, 8, 8], strides = [1, 1, 1]} : vector<4x8x24xf32> to vector<4x8x8xf32>
    %15 = vector.extract_strided_slice %12 {offsets = [0, 0, 16], sizes = [4, 8, 8], strides = [1, 1, 1]} : vector<4x8x24xf32> to vector<4x8x8xf32>
    "tpu.trace_start"() <{level = 10 : i32, message = "hqd,hkd->hqk"}> : () -> ()
    %cst_14 = arith.constant dense<0.000000e+00> : vector<4x8x8xf32>
    %16 = tpu.matmul %13, %14, %cst_14 {dimension_numbers = #tpu.dot_dimension_numbers<[2], [2], [1], [1], [0, 0, 0, 1, 1, 1], [0], [0]>} : vector<4x8x8xf32>, vector<4x8x8xf32>, vector<4x8x8xf32> -> vector<4x8x8xf32>
    "tpu.trace_stop"() : () -> ()
    %cst_15 = arith.constant 0.353553385 : f32
    %17 = vector.broadcast %cst_15 : f32 to vector<4x8x8xf32>
    %18 = arith.mulf %16, %17 : vector<4x8x8xf32>
    %cst_16 = arith.constant dense<0xFF800000> : vector<4x8xf32>
    %19 = vector.multi_reduction <maximumf>, %18, %cst_16 [2] : vector<4x8x8xf32> to vector<4x8xf32>
    %20 = vector.shape_cast %19 : vector<4x8xf32> to vector<4x8x1xf32>
    %21 = vector.broadcast %20 : vector<4x8x1xf32> to vector<4x8x8xf32>
    %22 = arith.subf %18, %21 : vector<4x8x8xf32>
    %23 = math.exp %22 : vector<4x8x8xf32>
    %cst_17 = arith.constant dense<0.000000e+00> : vector<4x8xf32>
    %24 = vector.multi_reduction <add>, %23, %cst_17 [2] : vector<4x8x8xf32> to vector<4x8xf32>
    %25 = vector.shape_cast %24 : vector<4x8xf32> to vector<4x8x1xf32>
    %26 = tpu.reciprocal %25 {approx = true} : vector<4x8x1xf32> -> vector<4x8x1xf32>
    %27 = arith.mulf %25, %26 : vector<4x8x1xf32>
    %cst_18 = arith.constant 2.000000e+00 : f32
    %28 = vector.broadcast %cst_18 : f32 to vector<4x8x1xf32>
    %29 = arith.subf %28, %27 : vector<4x8x1xf32>
    %30 = arith.mulf %26, %29 : vector<4x8x1xf32>
    %31 = vector.broadcast %30 : vector<4x8x1xf32> to vector<4x8x8xf32>
    %32 = arith.mulf %23, %31 : vector<4x8x8xf32>
    "tpu.trace_start"() <{level = 10 : i32, message = "hqk,hkd->hqd"}> : () -> ()
    %cst_19 = arith.constant dense<0.000000e+00> : vector<4x8x8xf32>
    %33 = tpu.matmul %32, %15, %cst_19 {dimension_numbers = #tpu.dot_dimension_numbers<[2], [1], [1], [2], [0, 0, 0, 1, 1, 2], [0], [0]>} : vector<4x8x8xf32>, vector<4x8x8xf32>, vector<4x8x8xf32> -> vector<4x8x8xf32>
    "tpu.trace_stop"() : () -> ()
    %c0_20 = arith.constant 0 : index
    %c0_21 = arith.constant 0 : index
    %c0_22 = arith.constant 0 : index
    %34 = vector.load %arg6[%c0_20, %c0_21, %c0_22] : memref<4x8x32xf32, #tpu.memory_space<vmem>>, vector<4x8x32xf32>
    "tpu.trace_start"() <{level = 10 : i32, message = "hqd,hdf->hqf"}> : () -> ()
    %cst_23 = arith.constant dense<0.000000e+00> : vector<4x8x32xf32>
    %35 = tpu.matmul %33, %34, %cst_23 {dimension_numbers = #tpu.dot_dimension_numbers<[2], [1], [1], [2], [0, 0, 0, 1, 1, 2], [0], [0]>} : vector<4x8x8xf32>, vector<4x8x32xf32>, vector<4x8x32xf32> -> vector<4x8x32xf32>
    "tpu.trace_stop"() : () -> ()
    %cst_24 = arith.constant dense<0.000000e+00> : vector<8x32xf32>
    %36 = vector.multi_reduction <add>, %35, %cst_24 [0] : vector<4x8x32xf32> to vector<8x32xf32>
    %c0_25 = arith.constant 0 : index
    %c0_26 = arith.constant 0 : index
    %37 = vector.load %arg7[%c0_25, %c0_26] : memref<1x32xf32, #tpu.memory_space<vmem>>, vector<1x32xf32>
    %38 = vector.broadcast %37 : vector<1x32xf32> to vector<8x32xf32>
    %39 = arith.addf %36, %38 : vector<8x32xf32>
    %40 = arith.addf %1, %39 : vector<8x32xf32>
    %c0_27 = arith.constant 0 : index
    %c0_28 = arith.constant 0 : index
    %41 = vector.load %arg18[%c0_27, %c0_28] : memref<3x32xf32, #tpu.memory_space<vmem>>, vector<1x32xf32>
    %c0_29 = arith.constant 0 : index
    %c0_30 = arith.constant 0 : index
    %42 = vector.load %arg19[%c0_29, %c0_30] : memref<3x32xf32, #tpu.memory_space<vmem>>, vector<1x32xf32>
    %cst_31 = arith.constant dense<0.000000e+00> : vector<8xf32>
    %43 = vector.multi_reduction <add>, %40, %cst_31 [1] : vector<8x32xf32> to vector<8xf32>
    %44 = vector.shape_cast %43 : vector<8xf32> to vector<8x1xf32>
    %cst_32 = arith.constant 3.200000e+01 : f32
    %45 = vector.broadcast %cst_32 : f32 to vector<8x1xf32>
    %46 = arith.divf %44, %45 : vector<8x1xf32>
    %47 = vector.broadcast %46 : vector<8x1xf32> to vector<8x32xf32>
    %48 = arith.subf %40, %47 : vector<8x32xf32>
    %49 = arith.mulf %48, %48 : vector<8x32xf32>
    %cst_33 = arith.constant dense<0.000000e+00> : vector<8xf32>
    %50 = vector.multi_reduction <add>, %49, %cst_33 [1] : vector<8x32xf32> to vector<8xf32>
    %51 = vector.shape_cast %50 : vector<8xf32> to vector<8x1xf32>
    %cst_34 = arith.constant 3.200000e+01 : f32
    %52 = vector.broadcast %cst_34 : f32 to vector<8x1xf32>
    %53 = arith.divf %51, %52 : vector<8x1xf32>
    %54 = vector.broadcast %46 : vector<8x1xf32> to vector<8x32xf32>
    %55 = arith.subf %40, %54 : vector<8x32xf32>
    %cst_35 = arith.constant 9.99999974E-6 : f32
    %56 = vector.broadcast %cst_35 : f32 to vector<8x1xf32>
    %57 = arith.addf %53, %56 : vector<8x1xf32>
    %58 = math.rsqrt %57 : vector<8x1xf32>
    %59 = vector.broadcast %58 : vector<8x1xf32> to vector<8x32xf32>
    %60 = arith.mulf %55, %59 : vector<8x32xf32>
    %61 = vector.broadcast %41 : vector<1x32xf32> to vector<8x32xf32>
    %62 = arith.mulf %60, %61 : vector<8x32xf32>
    %63 = vector.broadcast %42 : vector<1x32xf32> to vector<8x32xf32>
    %64 = arith.addf %62, %63 : vector<8x32xf32>
    %65 = vector.shape_cast %64 : vector<8x32xf32> to vector<1x8x32xf32>
    %66 = vector.broadcast %65 : vector<1x8x32xf32> to vector<4x8x32xf32>
    %67 = vector.shape_cast %3 : vector<8x32xf32> to vector<1x8x32xf32>
    %68 = vector.broadcast %67 : vector<1x8x32xf32> to vector<4x8x32xf32>
    %c0_36 = arith.constant 0 : index
    %c0_37 = arith.constant 0 : index
    %c0_38 = arith.constant 0 : index
    %69 = vector.load %arg8[%c0_36, %c0_37, %c0_38] : memref<4x32x8xf32, #tpu.memory_space<vmem>>, vector<4x32x8xf32>
    "tpu.trace_start"() <{level = 10 : i32, message = "htd,hdf->htf"}> : () -> ()
    %cst_39 = arith.constant dense<0.000000e+00> : vector<4x8x8xf32>
    %70 = tpu.matmul %66, %69, %cst_39 {dimension_numbers = #tpu.dot_dimension_numbers<[2], [1], [1], [2], [0, 0, 0, 1, 1, 2], [0], [0]>} : vector<4x8x32xf32>, vector<4x32x8xf32>, vector<4x8x8xf32> -> vector<4x8x8xf32>
    "tpu.trace_stop"() : () -> ()
    %c0_40 = arith.constant 0 : index
    %c0_41 = arith.constant 0 : index
    %c0_42 = arith.constant 0 : index
    %71 = vector.load %arg9[%c0_40, %c0_41, %c0_42] : memref<4x1x8xf32, #tpu.memory_space<vmem>>, vector<4x1x8xf32>
    %72 = vector.broadcast %71 : vector<4x1x8xf32> to vector<4x8x8xf32>
    %73 = arith.addf %70, %72 : vector<4x8x8xf32>
    %c0_43 = arith.constant 0 : index
    %c0_44 = arith.constant 0 : index
    %c0_45 = arith.constant 0 : index
    %74 = vector.load %arg10[%c0_43, %c0_44, %c0_45] : memref<4x32x16xf32, #tpu.memory_space<vmem>>, vector<4x32x16xf32>
    "tpu.trace_start"() <{level = 10 : i32, message = "hsd,hdf->hsf"}> : () -> ()
    %cst_46 = arith.constant dense<0.000000e+00> : vector<4x8x16xf32>
    %75 = tpu.matmul %68, %74, %cst_46 {dimension_numbers = #tpu.dot_dimension_numbers<[2], [1], [1], [2], [0, 0, 0, 1, 1, 2], [0], [0]>} : vector<4x8x32xf32>, vector<4x32x16xf32>, vector<4x8x16xf32> -> vector<4x8x16xf32>
    "tpu.trace_stop"() : () -> ()
    %c0_47 = arith.constant 0 : index
    %c0_48 = arith.constant 0 : index
    %c0_49 = arith.constant 0 : index
    %76 = vector.load %arg11[%c0_47, %c0_48, %c0_49] : memref<4x1x16xf32, #tpu.memory_space<vmem>>, vector<4x1x16xf32>
    %77 = vector.broadcast %76 : vector<4x1x16xf32> to vector<4x8x16xf32>
    %78 = arith.addf %75, %77 : vector<4x8x16xf32>
    %79 = vector.extract_strided_slice %78 {offsets = [0, 0, 0], sizes = [4, 8, 8], strides = [1, 1, 1]} : vector<4x8x16xf32> to vector<4x8x8xf32>
    %80 = vector.extract_strided_slice %78 {offsets = [0, 0, 8], sizes = [4, 8, 8], strides = [1, 1, 1]} : vector<4x8x16xf32> to vector<4x8x8xf32>
    "tpu.trace_start"() <{level = 10 : i32, message = "hqd,hkd->hqk"}> : () -> ()
    %cst_50 = arith.constant dense<0.000000e+00> : vector<4x8x8xf32>
    %81 = tpu.matmul %73, %79, %cst_50 {dimension_numbers = #tpu.dot_dimension_numbers<[2], [2], [1], [1], [0, 0, 0, 1, 1, 1], [0], [0]>} : vector<4x8x8xf32>, vector<4x8x8xf32>, vector<4x8x8xf32> -> vector<4x8x8xf32>
    "tpu.trace_stop"() : () -> ()
    %cst_51 = arith.constant 0.353553385 : f32
    %82 = vector.broadcast %cst_51 : f32 to vector<4x8x8xf32>
    %83 = arith.mulf %81, %82 : vector<4x8x8xf32>
    %84 = vector.shape_cast %5 : vector<8x8xf32> to vector<1x8x8xf32>
    %85 = vector.broadcast %84 : vector<1x8x8xf32> to vector<4x8x8xf32>
    %86 = arith.addf %83, %85 : vector<4x8x8xf32>
    %cst_52 = arith.constant dense<0xFF800000> : vector<4x8xf32>
    %87 = vector.multi_reduction <maximumf>, %86, %cst_52 [2] : vector<4x8x8xf32> to vector<4x8xf32>
    %88 = vector.shape_cast %87 : vector<4x8xf32> to vector<4x8x1xf32>
    %89 = vector.broadcast %88 : vector<4x8x1xf32> to vector<4x8x8xf32>
    %90 = arith.subf %86, %89 : vector<4x8x8xf32>
    %91 = math.exp %90 : vector<4x8x8xf32>
    %cst_53 = arith.constant dense<0.000000e+00> : vector<4x8xf32>
    %92 = vector.multi_reduction <add>, %91, %cst_53 [2] : vector<4x8x8xf32> to vector<4x8xf32>
    %93 = vector.shape_cast %92 : vector<4x8xf32> to vector<4x8x1xf32>
    %94 = tpu.reciprocal %93 {approx = true} : vector<4x8x1xf32> -> vector<4x8x1xf32>
    %95 = arith.mulf %93, %94 : vector<4x8x1xf32>
    %cst_54 = arith.constant 2.000000e+00 : f32
    %96 = vector.broadcast %cst_54 : f32 to vector<4x8x1xf32>
    %97 = arith.subf %96, %95 : vector<4x8x1xf32>
    %98 = arith.mulf %94, %97 : vector<4x8x1xf32>
    %99 = vector.broadcast %98 : vector<4x8x1xf32> to vector<4x8x8xf32>
    %100 = arith.mulf %91, %99 : vector<4x8x8xf32>
    "tpu.trace_start"() <{level = 10 : i32, message = "hqk,hkd->hqd"}> : () -> ()
    %cst_55 = arith.constant dense<0.000000e+00> : vector<4x8x8xf32>
    %101 = tpu.matmul %100, %80, %cst_55 {dimension_numbers = #tpu.dot_dimension_numbers<[2], [1], [1], [2], [0, 0, 0, 1, 1, 2], [0], [0]>} : vector<4x8x8xf32>, vector<4x8x8xf32>, vector<4x8x8xf32> -> vector<4x8x8xf32>
    "tpu.trace_stop"() : () -> ()
    %c0_56 = arith.constant 0 : index
    %c0_57 = arith.constant 0 : index
    %c0_58 = arith.constant 0 : index
    %102 = vector.load %arg12[%c0_56, %c0_57, %c0_58] : memref<4x8x32xf32, #tpu.memory_space<vmem>>, vector<4x8x32xf32>
    "tpu.trace_start"() <{level = 10 : i32, message = "hqd,hdf->hqf"}> : () -> ()
    %cst_59 = arith.constant dense<0.000000e+00> : vector<4x8x32xf32>
    %103 = tpu.matmul %101, %102, %cst_59 {dimension_numbers = #tpu.dot_dimension_numbers<[2], [1], [1], [2], [0, 0, 0, 1, 1, 2], [0], [0]>} : vector<4x8x8xf32>, vector<4x8x32xf32>, vector<4x8x32xf32> -> vector<4x8x32xf32>
    "tpu.trace_stop"() : () -> ()
    %cst_60 = arith.constant dense<0.000000e+00> : vector<8x32xf32>
    %104 = vector.multi_reduction <add>, %103, %cst_60 [0] : vector<4x8x32xf32> to vector<8x32xf32>
    %c0_61 = arith.constant 0 : index
    %c0_62 = arith.constant 0 : index
    %105 = vector.load %arg13[%c0_61, %c0_62] : memref<1x32xf32, #tpu.memory_space<vmem>>, vector<1x32xf32>
    %106 = vector.broadcast %105 : vector<1x32xf32> to vector<8x32xf32>
    %107 = arith.addf %104, %106 : vector<8x32xf32>
    %108 = arith.addf %64, %107 : vector<8x32xf32>
    %c1 = arith.constant 1 : index
    %c0_63 = arith.constant 0 : index
    %109 = vector.load %arg18[%c1, %c0_63] : memref<3x32xf32, #tpu.memory_space<vmem>>, vector<1x32xf32>
    %c1_64 = arith.constant 1 : index
    %c0_65 = arith.constant 0 : index
    %110 = vector.load %arg19[%c1_64, %c0_65] : memref<3x32xf32, #tpu.memory_space<vmem>>, vector<1x32xf32>
    %cst_66 = arith.constant dense<0.000000e+00> : vector<8xf32>
    %111 = vector.multi_reduction <add>, %108, %cst_66 [1] : vector<8x32xf32> to vector<8xf32>
    %112 = vector.shape_cast %111 : vector<8xf32> to vector<8x1xf32>
    %cst_67 = arith.constant 3.200000e+01 : f32
    %113 = vector.broadcast %cst_67 : f32 to vector<8x1xf32>
    %114 = arith.divf %112, %113 : vector<8x1xf32>
    %115 = vector.broadcast %114 : vector<8x1xf32> to vector<8x32xf32>
    %116 = arith.subf %108, %115 : vector<8x32xf32>
    %117 = arith.mulf %116, %116 : vector<8x32xf32>
    %cst_68 = arith.constant dense<0.000000e+00> : vector<8xf32>
    %118 = vector.multi_reduction <add>, %117, %cst_68 [1] : vector<8x32xf32> to vector<8xf32>
    %119 = vector.shape_cast %118 : vector<8xf32> to vector<8x1xf32>
    %cst_69 = arith.constant 3.200000e+01 : f32
    %120 = vector.broadcast %cst_69 : f32 to vector<8x1xf32>
    %121 = arith.divf %119, %120 : vector<8x1xf32>
    %122 = vector.broadcast %114 : vector<8x1xf32> to vector<8x32xf32>
    %123 = arith.subf %108, %122 : vector<8x32xf32>
    %cst_70 = arith.constant 9.99999974E-6 : f32
    %124 = vector.broadcast %cst_70 : f32 to vector<8x1xf32>
    %125 = arith.addf %121, %124 : vector<8x1xf32>
    %126 = math.rsqrt %125 : vector<8x1xf32>
    %127 = vector.broadcast %126 : vector<8x1xf32> to vector<8x32xf32>
    %128 = arith.mulf %123, %127 : vector<8x32xf32>
    %129 = vector.broadcast %109 : vector<1x32xf32> to vector<8x32xf32>
    %130 = arith.mulf %128, %129 : vector<8x32xf32>
    %131 = vector.broadcast %110 : vector<1x32xf32> to vector<8x32xf32>
    %132 = arith.addf %130, %131 : vector<8x32xf32>
    %c0_71 = arith.constant 0 : index
    %c0_72 = arith.constant 0 : index
    %133 = vector.load %arg14[%c0_71, %c0_72] : memref<32x64xf32, #tpu.memory_space<vmem>>, vector<32x64xf32>
    %cst_73 = arith.constant dense<0.000000e+00> : vector<8x64xf32>
    %134 = tpu.matmul %132, %133, %cst_73 {dimension_numbers = #tpu.dot_dimension_numbers<[1], [0], [0], [1], [0, 0, 1, 1], [], []>} : vector<8x32xf32>, vector<32x64xf32>, vector<8x64xf32> -> vector<8x64xf32>
    %c0_74 = arith.constant 0 : index
    %c0_75 = arith.constant 0 : index
    %135 = vector.load %arg15[%c0_74, %c0_75] : memref<1x64xf32, #tpu.memory_space<vmem>>, vector<1x64xf32>
    %136 = vector.broadcast %135 : vector<1x64xf32> to vector<8x64xf32>
    %137 = arith.addf %134, %136 : vector<8x64xf32>
    %cst_76 = arith.constant 0.000000e+00 : f32
    %138 = vector.broadcast %cst_76 : f32 to vector<8x64xf32>
    %139 = arith.maximumf %137, %138 : vector<8x64xf32>
    %c0_77 = arith.constant 0 : index
    %c0_78 = arith.constant 0 : index
    %140 = vector.load %arg16[%c0_77, %c0_78] : memref<64x32xf32, #tpu.memory_space<vmem>>, vector<64x32xf32>
    %cst_79 = arith.constant dense<0.000000e+00> : vector<8x32xf32>
    %141 = tpu.matmul %139, %140, %cst_79 {dimension_numbers = #tpu.dot_dimension_numbers<[1], [0], [0], [1], [0, 0, 1, 1], [], []>} : vector<8x64xf32>, vector<64x32xf32>, vector<8x32xf32> -> vector<8x32xf32>
    %c0_80 = arith.constant 0 : index
    %c0_81 = arith.constant 0 : index
    %142 = vector.load %arg17[%c0_80, %c0_81] : memref<1x32xf32, #tpu.memory_space<vmem>>, vector<1x32xf32>
    %143 = vector.broadcast %142 : vector<1x32xf32> to vector<8x32xf32>
    %144 = arith.addf %141, %143 : vector<8x32xf32>
    %145 = arith.addf %132, %144 : vector<8x32xf32>
    %c2 = arith.constant 2 : index
    %c0_82 = arith.constant 0 : index
    %146 = vector.load %arg18[%c2, %c0_82] : memref<3x32xf32, #tpu.memory_space<vmem>>, vector<1x32xf32>
    %c2_83 = arith.constant 2 : index
    %c0_84 = arith.constant 0 : index
    %147 = vector.load %arg19[%c2_83, %c0_84] : memref<3x32xf32, #tpu.memory_space<vmem>>, vector<1x32xf32>
    %cst_85 = arith.constant dense<0.000000e+00> : vector<8xf32>
    %148 = vector.multi_reduction <add>, %145, %cst_85 [1] : vector<8x32xf32> to vector<8xf32>
    %149 = vector.shape_cast %148 : vector<8xf32> to vector<8x1xf32>
    %cst_86 = arith.constant 3.200000e+01 : f32
    %150 = vector.broadcast %cst_86 : f32 to vector<8x1xf32>
    %151 = arith.divf %149, %150 : vector<8x1xf32>
    %152 = vector.broadcast %151 : vector<8x1xf32> to vector<8x32xf32>
    %153 = arith.subf %145, %152 : vector<8x32xf32>
    %154 = arith.mulf %153, %153 : vector<8x32xf32>
    %cst_87 = arith.constant dense<0.000000e+00> : vector<8xf32>
    %155 = vector.multi_reduction <add>, %154, %cst_87 [1] : vector<8x32xf32> to vector<8xf32>
    %156 = vector.shape_cast %155 : vector<8xf32> to vector<8x1xf32>
    %cst_88 = arith.constant 3.200000e+01 : f32
    %157 = vector.broadcast %cst_88 : f32 to vector<8x1xf32>
    %158 = arith.divf %156, %157 : vector<8x1xf32>
    %159 = vector.broadcast %151 : vector<8x1xf32> to vector<8x32xf32>
    %160 = arith.subf %145, %159 : vector<8x32xf32>
    %cst_89 = arith.constant 9.99999974E-6 : f32
    %161 = vector.broadcast %cst_89 : f32 to vector<8x1xf32>
    %162 = arith.addf %158, %161 : vector<8x1xf32>
    %163 = math.rsqrt %162 : vector<8x1xf32>
    %164 = vector.broadcast %163 : vector<8x1xf32> to vector<8x32xf32>
    %165 = arith.mulf %160, %164 : vector<8x32xf32>
    %166 = vector.broadcast %146 : vector<1x32xf32> to vector<8x32xf32>
    %167 = arith.mulf %165, %166 : vector<8x32xf32>
    %168 = vector.broadcast %147 : vector<1x32xf32> to vector<8x32xf32>
    %169 = arith.addf %167, %168 : vector<8x32xf32>
    %c0_90 = arith.constant 0 : index
    %c0_91 = arith.constant 0 : index
    %c0_92 = arith.constant 0 : index
    %170 = vector.load %arg20[%c0_90, %c0_91, %c0_92] : memref<1x8x32xf32, #tpu.memory_space<vmem>>, vector<1x8x32xf32>
    %171 = vector.shape_cast %170 : vector<1x8x32xf32> to vector<8x32xf32>
    %172 = vector.shape_cast %169 : vector<8x32xf32> to vector<1x8x32xf32>
    tpu.vector_store %arg20[%c0_90, %c0_91, %c0_92], %172 {strides = array<i32>} : memref<1x8x32xf32, #tpu.memory_space<vmem>>, vector<1x8x32xf32>,
    return
  }
  func.func @transform_0(%arg0: i32) -> (i32, i32, i32) {
    %c0_i32 = arith.constant 0 : i32
    %c0_i32_0 = arith.constant 0 : i32
    %c0_i32_1 = arith.constant 0 : i32
    return %arg0, %c0_i32, %c0_i32_0 : i32, i32, i32
  }
  func.func @transform_1(%arg0: i32) -> (i32, i32, i32) {
    %c0_i32 = arith.constant 0 : i32
    %c0_i32_0 = arith.constant 0 : i32
    %c0_i32_1 = arith.constant 0 : i32
    return %arg0, %c0_i32, %c0_i32_0 : i32, i32, i32
  }
  func.func @transform_2(%arg0: i32) -> (i32, i32, i32) {
    %c0_i32 = arith.constant 0 : i32
    %c0_i32_0 = arith.constant 0 : i32
    %c0_i32_1 = arith.constant 0 : i32
    return %arg0, %c0_i32, %c0_i32_0 : i32, i32, i32
  }
  func.func @transform_3(%arg0: i32) -> (i32, i32, i32) {
    %c0_i32 = arith.constant 0 : i32
    %c0_i32_0 = arith.constant 0 : i32
    %c0_i32_1 = arith.constant 0 : i32
    %c0_i32_2 = arith.constant 0 : i32
    return %c0_i32, %c0_i32_0, %c0_i32_1 : i32, i32, i32
  }
  func.func @transform_4(%arg0: i32) -> (i32, i32, i32) {
    %c0_i32 = arith.constant 0 : i32
    %c0_i32_0 = arith.constant 0 : i32
    %c0_i32_1 = arith.constant 0 : i32
    %c0_i32_2 = arith.constant 0 : i32
    return %c0_i32, %c0_i32_0, %c0_i32_1 : i32, i32, i32
  }
  func.func @transform_5(%arg0: i32) -> (i32, i32, i32) {
    %c0_i32 = arith.constant 0 : i32
    %c0_i32_0 = arith.constant 0 : i32
    %c0_i32_1 = arith.constant 0 : i32
    %c0_i32_2 = arith.constant 0 : i32
    return %c0_i32, %c0_i32_0, %c0_i32_1 : i32, i32, i32
  }
  func.func @transform_6(%arg0: i32) -> (i32, i32) {
    %c0_i32 = arith.constant 0 : i32
    %c0_i32_0 = arith.constant 0 : i32
    %c0_i32_1 = arith.constant 0 : i32
    return %c0_i32, %c0_i32_0 : i32, i32
  }
  func.func @transform_7(%arg0: i32) -> (i32, i32, i32) {
    %c0_i32 = arith.constant 0 : i32
    %c0_i32_0 = arith.constant 0 : i32
    %c0_i32_1 = arith.constant 0 : i32
    %c0_i32_2 = arith.constant 0 : i32
    return %c0_i32, %c0_i32_0, %c0_i32_1 : i32, i32, i32
  }
  func.func @transform_8(%arg0: i32) -> (i32, i32, i32) {
    %c0_i32 = arith.constant 0 : i32
    %c0_i32_0 = arith.constant 0 : i32
    %c0_i32_1 = arith.constant 0 : i32
    %c0_i32_2 = arith.constant 0 : i32
    return %c0_i32, %c0_i32_0, %c0_i32_1 : i32, i32, i32
  }
  func.func @transform_9(%arg0: i32) -> (i32, i32, i32) {
    %c0_i32 = arith.constant 0 : i32
    %c0_i32_0 = arith.constant 0 : i32
    %c0_i32_1 = arith.constant 0 : i32
    %c0_i32_2 = arith.constant 0 : i32
    return %c0_i32, %c0_i32_0, %c0_i32_1 : i32, i32, i32
  }
  func.func @transform_10(%arg0: i32) -> (i32, i32, i32) {
    %c0_i32 = arith.constant 0 : i32
    %c0_i32_0 = arith.constant 0 : i32
    %c0_i32_1 = arith.constant 0 : i32
    %c0_i32_2 = arith.constant 0 : i32
    return %c0_i32, %c0_i32_0, %c0_i32_1 : i32, i32, i32
  }
  func.func @transform_11(%arg0: i32) -> (i32, i32, i32) {
    %c0_i32 = arith.constant 0 : i32
    %c0_i32_0 = arith.constant 0 : i32
    %c0_i32_1 = arith.constant 0 : i32
    %c0_i32_2 = arith.constant 0 : i32
    return %c0_i32, %c0_i32_0, %c0_i32_1 : i32, i32, i32
  }
  func.func @transform_12(%arg0: i32) -> (i32, i32) {
    %c0_i32 = arith.constant 0 : i32
    %c0_i32_0 = arith.constant 0 : i32
    %c0_i32_1 = arith.constant 0 : i32
    return %c0_i32, %c0_i32_0 : i32, i32
  }
  func.func @transform_13(%arg0: i32) -> (i32, i32) {
    %c0_i32 = arith.constant 0 : i32
    %c0_i32_0 = arith.constant 0 : i32
    %c0_i32_1 = arith.constant 0 : i32
    return %c0_i32, %c0_i32_0 : i32, i32
  }
  func.func @transform_14(%arg0: i32) -> (i32, i32) {
    %c0_i32 = arith.constant 0 : i32
    %c0_i32_0 = arith.constant 0 : i32
    %c0_i32_1 = arith.constant 0 : i32
    return %c0_i32, %c0_i32_0 : i32, i32
  }
  func.func @transform_15(%arg0: i32) -> (i32, i32) {
    %c0_i32 = arith.constant 0 : i32
    %c0_i32_0 = arith.constant 0 : i32
    %c0_i32_1 = arith.constant 0 : i32
    return %c0_i32, %c0_i32_0 : i32, i32
  }
  func.func @transform_16(%arg0: i32) -> (i32, i32) {
    %c0_i32 = arith.constant 0 : i32
    %c0_i32_0 = arith.constant 0 : i32
    %c0_i32_1 = arith.constant 0 : i32
    return %c0_i32, %c0_i32_0 : i32, i32
  }
  func.func @transform_17(%arg0: i32) -> (i32, i32) {
    %c0_i32 = arith.constant 0 : i32
    %c0_i32_0 = arith.constant 0 : i32
    %c0_i32_1 = arith.constant 0 : i32
    return %c0_i32, %c0_i32_0 : i32, i32
  }
  func.func @transform_18(%arg0: i32) -> (i32, i32) {
    %c0_i32 = arith.constant 0 : i32
    %c0_i32_0 = arith.constant 0 : i32
    %c0_i32_1 = arith.constant 0 : i32
    return %c0_i32, %c0_i32_0 : i32, i32
  }
  func.func @transform_19(%arg0: i32) -> (i32, i32, i32) {
    %c0_i32 = arith.constant 0 : i32
    %c0_i32_0 = arith.constant 0 : i32
    %c0_i32_1 = arith.constant 0 : i32
    return %arg0, %c0_i32, %c0_i32_0 : i32, i32, i32
  }
}

</mosaic_0001>

<llo_original>
// kernel: tpu_custom_call.1
$region0: #{tpu_custom_call.1}
  #allocation0 [shape = 'u32[]', space=smem, size = 0x4, offset = 0x4, fixed_abs, tag = 'smem constant byte address 0x4 - core index']
  #allocation1 [shape = 'u32[144,128]{1,0:T(1,128)}', space=vmem, size = 0x12000, scoped, tag = 'internal scratch']
  %s0 = inlined_call_operand.vmem [shape: f32[2,8,32], index: 0, kind: input, shape index: {}]
  %s1 = inlined_call_operand.vmem [shape: f32[2,8,32], index: 1, kind: input, shape index: {}]
  %s2 = inlined_call_operand.vmem [shape: f32[2,8,8], index: 2, kind: input, shape index: {}]
  %s3 = inlined_call_operand.vmem [shape: f32[4,32,24], index: 3, kind: input, shape index: {}]
  %s4 = inlined_call_operand.vmem [shape: f32[4,1,24], index: 4, kind: input, shape index: {}]
  %s5 = inlined_call_operand.vmem [shape: f32[4,8,32], index: 5, kind: input, shape index: {}]
  %s6 = inlined_call_operand.vmem [shape: f32[1,32], index: 6, kind: input, shape index: {}]
  %s7 = inlined_call_operand.vmem [shape: f32[4,32,8], index: 7, kind: input, shape index: {}]
  %s8 = inlined_call_operand.vmem [shape: f32[4,1,8], index: 8, kind: input, shape index: {}]
  %s9 = inlined_call_operand.vmem [shape: f32[4,32,16], index: 9, kind: input, shape index: {}]
  %s10 = inlined_call_operand.vmem [shape: f32[4,1,16], index: 10, kind: input, shape index: {}]
  %s11 = inlined_call_operand.vmem [shape: f32[4,8,32], index: 11, kind: input, shape index: {}]
  %s12 = inlined_call_operand.vmem [shape: f32[1,32], index: 12, kind: input, shape index: {}]
  %s13 = inlined_call_operand.vmem [shape: f32[32,64], index: 13, kind: input, shape index: {}]
  %s14 = inlined_call_operand.vmem [shape: f32[1,64], index: 14, kind: input, shape index: {}]
  %s15 = inlined_call_operand.vmem [shape: f32[64,32], index: 15, kind: input, shape index: {}]
  %s16 = inlined_call_operand.vmem [shape: f32[1,32], index: 16, kind: input, shape index: {}]
  %s17 = inlined_call_operand.vmem [shape: f32[3,32], index: 17, kind: input, shape index: {}]
  %s18 = inlined_call_operand.vmem [shape: f32[3,32], index: 18, kind: input, shape index: {}]
  %s19 = inlined_call_operand.hbm [shape: f32[2,8,32], index: 19, kind: output, shape index: {}]
  %s20 = sld [smem:[#allocation0]]
  $region109: #{tpu_custom_call.1} parent=0
    _
  %s22 = ssub.s32 1, %s20
  %s23 = scalar_select 0, %s22, %s20
  $region1: #{tpu_custom_call.1} parent=0
    #allocation2 [shape = 'u8[8192]{0}', space=vmem, size = 0x2000, scoped, tag = 'output window, operand 0']
    #allocation3 [shape = 's32[2]{0}', space=sflag, size = 0x8, scoped, tag = 'scoped memory for tpu_custom_call.1']
    %24 = vsyncpa [#allocation3], 0
    %s25 = scalar_lea.sflag [#allocation3], 1
    %26 = vsyncpa %s25, 0
    loop: start=0, step=1, limit=4
    $region2: #{tpu_custom_call.1} parent=1 // loop_pre_header
      _
    $region3: #{tpu_custom_call.1} parent=1 // loop_header
      %s28 = sphi 0, %s32
      %p29 = scmp.ge.s32.totalorder %s28, 4
      %s38 = sphi 0, %s40
      %s41 = sphi 0, %s38
      %s42 = sphi 0, %s41
      %s58 = sphi 0, %s42
      %s64 = sphi 0, %s66
      %s67 = sphi 0, %s64
      %s68 = sphi 0, %s67
      %s84 = sphi 0, %s68
      %s90 = sphi 0, %s92
      %s93 = sphi 0, %s90
      %s94 = sphi 0, %s93
      %s110 = sphi 0, %s94
      %s114 = sphi 0, %s114
      %s116 = sphi 0, %s114
      %s117 = sphi 0, %s116
      %s131 = sphi 0, %s117
      %s135 = sphi 0, %s135
      %s137 = sphi 0, %s135
      %s138 = sphi 0, %s137
      %s152 = sphi 0, %s138
      %s156 = sphi 0, %s156
      %s158 = sphi 0, %s156
      %s159 = sphi 0, %s158
      %s173 = sphi 0, %s159
      %s177 = sphi 0, %s177
      %s179 = sphi 0, %s177
      %s180 = sphi 0, %s179
      %s194 = sphi 0, %s180
      %s198 = sphi 0, %s198
      %s200 = sphi 0, %s198
      %s201 = sphi 0, %s200
      %s215 = sphi 0, %s201
      %s219 = sphi 0, %s219
      %s221 = sphi 0, %s219
      %s222 = sphi 0, %s221
      %s236 = sphi 0, %s222
      %s240 = sphi 0, %s240
      %s242 = sphi 0, %s240
      %s243 = sphi 0, %s242
      %s257 = sphi 0, %s243
      %s261 = sphi 0, %s261
      %s263 = sphi 0, %s261
      %s264 = sphi 0, %s263
      %s278 = sphi 0, %s264
      %s282 = sphi 0, %s282
      %s284 = sphi 0, %s282
      %s285 = sphi 0, %s284
      %s299 = sphi 0, %s285
      %s303 = sphi 0, %s303
      %s305 = sphi 0, %s303
      %s306 = sphi 0, %s305
      %s320 = sphi 0, %s306
      %s324 = sphi 0, %s324
      %s326 = sphi 0, %s324
      %s327 = sphi 0, %s326
      %s341 = sphi 0, %s327
      %s345 = sphi 0, %s345
      %s347 = sphi 0, %s345
      %s348 = sphi 0, %s347
      %s362 = sphi 0, %s348
      %s366 = sphi 0, %s366
      %s368 = sphi 0, %s366
      %s369 = sphi 0, %s368
      %s383 = sphi 0, %s369
      %s387 = sphi 0, %s387
      %s389 = sphi 0, %s387
      %s390 = sphi 0, %s389
      %s404 = sphi 0, %s390
      %s408 = sphi 0, %s408
      %s410 = sphi 0, %s408
      %s411 = sphi 0, %s410
      %s425 = sphi 0, %s411
      %s429 = sphi 0, %s429
      %s431 = sphi 0, %s429
      %s432 = sphi 0, %s431
      %s446 = sphi 0, %s432
      %s452 = sphi 0, %s454
      %s455 = sphi 0, %s452
      %s456 = sphi 0, %s455
      %s472 = sphi 0, %s456
    $region4: #{tpu_custom_call.1} parent=1 // loop_header_branch
      %31 = sbr.rel (%p29) target = $region8
    $region5: #{tpu_custom_call.1} parent=1 // loop_body
      %s33 = ssub.s32 %s28, 1
      %s34 = ssub.s32 %s28, 2
      %s35 = sadd.s32 %s28, 1
      %s36 = ssub.s32 %s28, %s35
      %p37 = scmp.eq.s32.totalorder %s36, 0
      %s39 = sadd.s32 %s38, 1
      %s40 = scalar_select %p37, %s38, %s39
      %p43 = pneg %p37
      %p44 = scmp.eq.s32.totalorder %s28, 1
      %p45 = por %p43, %p44
      %p46 = scmp.ne.s32.totalorder %s38, %s41
      %p47 = scmp.eq.s32.totalorder %s28, 0
      %p48 = por %p46, %p47
      %p49 = scmp.ne.s32.totalorder %s38, %s41
      %p50 = scmp.eq.s32.totalorder %s33, 1
      %p51 = por %p49, %p50
      %p52 = scmp.ne.s32.totalorder %s41, %s42
      %p53 = scmp.eq.s32.totalorder %s33, 0
      %p54 = por %p52, %p53
      %p55 = scmp.ne.s32.totalorder %s41, %s42
      %p56 = scmp.eq.s32.totalorder %s34, 1
      %p57 = por %p55, %p56
      %p59 = scmp.ne.s32.totalorder %s42, %s58
      %p60 = scmp.eq.s32.totalorder %s34, 0
      %p61 = por %p59, %p60
      %s62 = ssub.s32 %s28, %s35
      %p63 = scmp.eq.s32.totalorder %s62, 0
      %s65 = sadd.s32 %s64, 1
      %s66 = scalar_select %p63, %s64, %s65
      %p69 = pneg %p63
      %p70 = scmp.eq.s32.totalorder %s28, 1
      %p71 = por %p69, %p70
      %p72 = scmp.ne.s32.totalorder %s64, %s67
      %p73 = scmp.eq.s32.totalorder %s28, 0
      %p74 = por %p72, %p73
      %p75 = scmp.ne.s32.totalorder %s64, %s67
      %p76 = scmp.eq.s32.totalorder %s33, 1
      %p77 = por %p75, %p76
      %p78 = scmp.ne.s32.totalorder %s67, %s68
      %p79 = scmp.eq.s32.totalorder %s33, 0
      %p80 = por %p78, %p79
      %p81 = scmp.ne.s32.totalorder %s67, %s68
      %p82 = scmp.eq.s32.totalorder %s34, 1
      %p83 = por %p81, %p82
      %p85 = scmp.ne.s32.totalorder %s68, %s84
      %p86 = scmp.eq.s32.totalorder %s34, 0
      %p87 = por %p85, %p86
      %s88 = ssub.s32 %s28, %s35
      %p89 = scmp.eq.s32.totalorder %s88, 0
      %s91 = sadd.s32 %s90, 1
      %s92 = scalar_select %p89, %s90, %s91
      %p95 = pneg %p89
      %p96 = scmp.eq.s32.totalorder %s28, 1
      %p97 = por %p95, %p96
      %p98 = scmp.ne.s32.totalorder %s90, %s93
      %p99 = scmp.eq.s32.totalorder %s28, 0
      %p100 = por %p98, %p99
      %p101 = scmp.ne.s32.totalorder %s90, %s93
      %p102 = scmp.eq.s32.totalorder %s33, 1
      %p103 = por %p101, %p102
      %p104 = scmp.ne.s32.totalorder %s93, %s94
      %p105 = scmp.eq.s32.totalorder %s33, 0
      %p106 = por %p104, %p105
      %p107 = scmp.ne.s32.totalorder %s93, %s94
      %p108 = scmp.eq.s32.totalorder %s34, 1
      %p109 = por %p107, %p108
      %p111 = scmp.ne.s32.totalorder %s94, %s110
      %p112 = scmp.eq.s32.totalorder %s34, 0
      %p113 = por %p111, %p112
      %s115 = sadd.s32 %s114, 1
      %p118 = scmp.eq.s32.totalorder %s28, 1
      %p119 = scmp.ne.s32.totalorder %s114, %s116
      %p120 = scmp.eq.s32.totalorder %s28, 0
      %p121 = por %p119, %p120
      %p122 = scmp.ne.s32.totalorder %s114, %s116
      %p123 = scmp.eq.s32.totalorder %s33, 1
      %p124 = por %p122, %p123
      %p125 = scmp.ne.s32.totalorder %s116, %s117
      %p126 = scmp.eq.s32.totalorder %s33, 0
      %p127 = por %p125, %p126
      %p128 = scmp.ne.s32.totalorder %s116, %s117
      %p129 = scmp.eq.s32.totalorder %s34, 1
      %p130 = por %p128, %p129
      %p132 = scmp.ne.s32.totalorder %s117, %s131
      %p133 = scmp.eq.s32.totalorder %s34, 0
      %p134 = por %p132, %p133
      %s136 = sadd.s32 %s135, 1
      %p139 = scmp.eq.s32.totalorder %s28, 1
      %p140 = scmp.ne.s32.totalorder %s135, %s137
      %p141 = scmp.eq.s32.totalorder %s28, 0
      %p142 = por %p140, %p141
      %p143 = scmp.ne.s32.totalorder %s135, %s137
      %p144 = scmp.eq.s32.totalorder %s33, 1
      %p145 = por %p143, %p144
      %p146 = scmp.ne.s32.totalorder %s137, %s138
      %p147 = scmp.eq.s32.totalorder %s33, 0
      %p148 = por %p146, %p147
      %p149 = scmp.ne.s32.totalorder %s137, %s138
      %p150 = scmp.eq.s32.totalorder %s34, 1
      %p151 = por %p149, %p150
      %p153 = scmp.ne.s32.totalorder %s138, %s152
      %p154 = scmp.eq.s32.totalorder %s34, 0
      %p155 = por %p153, %p154
      %s157 = sadd.s32 %s156, 1
      %p160 = scmp.eq.s32.totalorder %s28, 1
      %p161 = scmp.ne.s32.totalorder %s156, %s158
      %p162 = scmp.eq.s32.totalorder %s28, 0
      %p163 = por %p161, %p162
      %p164 = scmp.ne.s32.totalorder %s156, %s158
      %p165 = scmp.eq.s32.totalorder %s33, 1
      %p166 = por %p164, %p165
      %p167 = scmp.ne.s32.totalorder %s158, %s159
      %p168 = scmp.eq.s32.totalorder %s33, 0
      %p169 = por %p167, %p168
      %p170 = scmp.ne.s32.totalorder %s158, %s159
      %p171 = scmp.eq.s32.totalorder %s34, 1
      %p172 = por %p170, %p171
      %p174 = scmp.ne.s32.totalorder %s159, %s173
      %p175 = scmp.eq.s32.totalorder %s34, 0
      %p176 = por %p174, %p175
      %s178 = sadd.s32 %s177, 1
      %p181 = scmp.eq.s32.totalorder %s28, 1
      %p182 = scmp.ne.s32.totalorder %s177, %s179
      %p183 = scmp.eq.s32.totalorder %s28, 0
      %p184 = por %p182, %p183
      %p185 = scmp.ne.s32.totalorder %s177, %s179
      %p186 = scmp.eq.s32.totalorder %s33, 1
      %p187 = por %p185, %p186
      %p188 = scmp.ne.s32.totalorder %s179, %s180
      %p189 = scmp.eq.s32.totalorder %s33, 0
      %p190 = por %p188, %p189
      %p191 = scmp.ne.s32.totalorder %s179, %s180
      %p192 = scmp.eq.s32.totalorder %s34, 1
      %p193 = por %p191, %p192
      %p195 = scmp.ne.s32.totalorder %s180, %s194
      %p196 = scmp.eq.s32.totalorder %s34, 0
      %p197 = por %p195, %p196
      %s199 = sadd.s32 %s198, 1
      %p202 = scmp.eq.s32.totalorder %s28, 1
      %p203 = scmp.ne.s32.totalorder %s198, %s200
      %p204 = scmp.eq.s32.totalorder %s28, 0
      %p205 = por %p203, %p204
      %p206 = scmp.ne.s32.totalorder %s198, %s200
      %p207 = scmp.eq.s32.totalorder %s33, 1
      %p208 = por %p206, %p207
      %p209 = scmp.ne.s32.totalorder %s200, %s201
      %p210 = scmp.eq.s32.totalorder %s33, 0
      %p211 = por %p209, %p210
      %p212 = scmp.ne.s32.totalorder %s200, %s201
      %p213 = scmp.eq.s32.totalorder %s34, 1
      %p214 = por %p212, %p213
      %p216 = scmp.ne.s32.totalorder %s201, %s215
      %p217 = scmp.eq.s32.totalorder %s34, 0
      %p218 = por %p216, %p217
      %s220 = sadd.s32 %s219, 1
      %p223 = scmp.eq.s32.totalorder %s28, 1
      %p224 = scmp.ne.s32.totalorder %s219, %s221
      %p225 = scmp.eq.s32.totalorder %s28, 0
      %p226 = por %p224, %p225
      %p227 = scmp.ne.s32.totalorder %s219, %s221
      %p228 = scmp.eq.s32.totalorder %s33, 1
      %p229 = por %p227, %p228
      %p230 = scmp.ne.s32.totalorder %s221, %s222
      %p231 = scmp.eq.s32.totalorder %s33, 0
      %p232 = por %p230, %p231
      %p233 = scmp.ne.s32.totalorder %s221, %s222
      %p234 = scmp.eq.s32.totalorder %s34, 1
      %p235 = por %p233, %p234
      %p237 = scmp.ne.s32.totalorder %s222, %s236
      %p238 = scmp.eq.s32.totalorder %s34, 0
      %p239 = por %p237, %p238
      %s241 = sadd.s32 %s240, 1
      %p244 = scmp.eq.s32.totalorder %s28, 1
      %p245 = scmp.ne.s32.totalorder %s240, %s242
      %p246 = scmp.eq.s32.totalorder %s28, 0
      %p247 = por %p245, %p246
      %p248 = scmp.ne.s32.totalorder %s240, %s242
      %p249 = scmp.eq.s32.totalorder %s33, 1
      %p250 = por %p248, %p249
      %p251 = scmp.ne.s32.totalorder %s242, %s243
      %p252 = scmp.eq.s32.totalorder %s33, 0
      %p253 = por %p251, %p252
      %p254 = scmp.ne.s32.totalorder %s242, %s243
      %p255 = scmp.eq.s32.totalorder %s34, 1
      %p256 = por %p254, %p255
      %p258 = scmp.ne.s32.totalorder %s243, %s257
      %p259 = scmp.eq.s32.totalorder %s34, 0
      %p260 = por %p258, %p259
      %s262 = sadd.s32 %s261, 1
      %p265 = scmp.eq.s32.totalorder %s28, 1
      %p266 = scmp.ne.s32.totalorder %s261, %s263
      %p267 = scmp.eq.s32.totalorder %s28, 0
      %p268 = por %p266, %p267
      %p269 = scmp.ne.s32.totalorder %s261, %s263
      %p270 = scmp.eq.s32.totalorder %s33, 1
      %p271 = por %p269, %p270
      %p272 = scmp.ne.s32.totalorder %s263, %s264
      %p273 = scmp.eq.s32.totalorder %s33, 0
      %p274 = por %p272, %p273
      %p275 = scmp.ne.s32.totalorder %s263, %s264
      %p276 = scmp.eq.s32.totalorder %s34, 1
      %p277 = por %p275, %p276
      %p279 = scmp.ne.s32.totalorder %s264, %s278
      %p280 = scmp.eq.s32.totalorder %s34, 0
      %p281 = por %p279, %p280
      %s283 = sadd.s32 %s282, 1
      %p286 = scmp.eq.s32.totalorder %s28, 1
      %p287 = scmp.ne.s32.totalorder %s282, %s284
      %p288 = scmp.eq.s32.totalorder %s28, 0
      %p289 = por %p287, %p288
      %p290 = scmp.ne.s32.totalorder %s282, %s284
      %p291 = scmp.eq.s32.totalorder %s33, 1
      %p292 = por %p290, %p291
      %p293 = scmp.ne.s32.totalorder %s284, %s285
      %p294 = scmp.eq.s32.totalorder %s33, 0
      %p295 = por %p293, %p294
      %p296 = scmp.ne.s32.totalorder %s284, %s285
      %p297 = scmp.eq.s32.totalorder %s34, 1
      %p298 = por %p296, %p297
      %p300 = scmp.ne.s32.totalorder %s285, %s299
      %p301 = scmp.eq.s32.totalorder %s34, 0
      %p302 = por %p300, %p301
      %s304 = sadd.s32 %s303, 1
      %p307 = scmp.eq.s32.totalorder %s28, 1
      %p308 = scmp.ne.s32.totalorder %s303, %s305
      %p309 = scmp.eq.s32.totalorder %s28, 0
      %p310 = por %p308, %p309
      %p311 = scmp.ne.s32.totalorder %s303, %s305
      %p312 = scmp.eq.s32.totalorder %s33, 1
      %p313 = por %p311, %p312
      %p314 = scmp.ne.s32.totalorder %s305, %s306
      %p315 = scmp.eq.s32.totalorder %s33, 0
      %p316 = por %p314, %p315
      %p317 = scmp.ne.s32.totalorder %s305, %s306
      %p318 = scmp.eq.s32.totalorder %s34, 1
      %p319 = por %p317, %p318
      %p321 = scmp.ne.s32.totalorder %s306, %s320
      %p322 = scmp.eq.s32.totalorder %s34, 0
      %p323 = por %p321, %p322
      %s325 = sadd.s32 %s324, 1
      %p328 = scmp.eq.s32.totalorder %s28, 1
      %p329 = scmp.ne.s32.totalorder %s324, %s326
      %p330 = scmp.eq.s32.totalorder %s28, 0
      %p331 = por %p329, %p330
      %p332 = scmp.ne.s32.totalorder %s324, %s326
      %p333 = scmp.eq.s32.totalorder %s33, 1
      %p334 = por %p332, %p333
      %p335 = scmp.ne.s32.totalorder %s326, %s327
      %p336 = scmp.eq.s32.totalorder %s33, 0
      %p337 = por %p335, %p336
      %p338 = scmp.ne.s32.totalorder %s326, %s327
      %p339 = scmp.eq.s32.totalorder %s34, 1
      %p340 = por %p338, %p339
      %p342 = scmp.ne.s32.totalorder %s327, %s341
      %p343 = scmp.eq.s32.totalorder %s34, 0
      %p344 = por %p342, %p343
      %s346 = sadd.s32 %s345, 1
      %p349 = scmp.eq.s32.totalorder %s28, 1
      %p350 = scmp.ne.s32.totalorder %s345, %s347
      %p351 = scmp.eq.s32.totalorder %s28, 0
      %p352 = por %p350, %p351
      %p353 = scmp.ne.s32.totalorder %s345, %s347
      %p354 = scmp.eq.s32.totalorder %s33, 1
      %p355 = por %p353, %p354
      %p356 = scmp.ne.s32.totalorder %s347, %s348
      %p357 = scmp.eq.s32.totalorder %s33, 0
      %p358 = por %p356, %p357
      %p359 = scmp.ne.s32.totalorder %s347, %s348
      %p360 = scmp.eq.s32.totalorder %s34, 1
      %p361 = por %p359, %p360
      %p363 = scmp.ne.s32.totalorder %s348, %s362
      %p364 = scmp.eq.s32.totalorder %s34, 0
      %p365 = por %p363, %p364
      %s367 = sadd.s32 %s366, 1
      %p370 = scmp.eq.s32.totalorder %s28, 1
      %p371 = scmp.ne.s32.totalorder %s366, %s368
      %p372 = scmp.eq.s32.totalorder %s28, 0
      %p373 = por %p371, %p372
      %p374 = scmp.ne.s32.totalorder %s366, %s368
      %p375 = scmp.eq.s32.totalorder %s33, 1
      %p376 = por %p374, %p375
      %p377 = scmp.ne.s32.totalorder %s368, %s369
      %p378 = scmp.eq.s32.totalorder %s33, 0
      %p379 = por %p377, %p378
      %p380 = scmp.ne.s32.totalorder %s368, %s369
      %p381 = scmp.eq.s32.totalorder %s34, 1
      %p382 = por %p380, %p381
      %p384 = scmp.ne.s32.totalorder %s369, %s383
      %p385 = scmp.eq.s32.totalorder %s34, 0
      %p386 = por %p384, %p385
      %s388 = sadd.s32 %s387, 1
      %p391 = scmp.eq.s32.totalorder %s28, 1
      %p392 = scmp.ne.s32.totalorder %s387, %s389
      %p393 = scmp.eq.s32.totalorder %s28, 0
      %p394 = por %p392, %p393
      %p395 = scmp.ne.s32.totalorder %s387, %s389
      %p396 = scmp.eq.s32.totalorder %s33, 1
      %p397 = por %p395, %p396
      %p398 = scmp.ne.s32.totalorder %s389, %s390
      %p399 = scmp.eq.s32.totalorder %s33, 0
      %p400 = por %p398, %p399
      %p401 = scmp.ne.s32.totalorder %s389, %s390
      %p402 = scmp.eq.s32.totalorder %s34, 1
      %p403 = por %p401, %p402
      %p405 = scmp.ne.s32.totalorder %s390, %s404
      %p406 = scmp.eq.s32.totalorder %s34, 0
      %p407 = por %p405, %p406
      %s409 = sadd.s32 %s408, 1
      %p412 = scmp.eq.s32.totalorder %s28, 1
      %p413 = scmp.ne.s32.totalorder %s408, %s410
      %p414 = scmp.eq.s32.totalorder %s28, 0
      %p415 = por %p413, %p414
      %p416 = scmp.ne.s32.totalorder %s408, %s410
      %p417 = scmp.eq.s32.totalorder %s33, 1
      %p418 = por %p416, %p417
      %p419 = scmp.ne.s32.totalorder %s410, %s411
      %p420 = scmp.eq.s32.totalorder %s33, 0
      %p421 = por %p419, %p420
      %p422 = scmp.ne.s32.totalorder %s410, %s411
      %p423 = scmp.eq.s32.totalorder %s34, 1
      %p424 = por %p422, %p423
      %p426 = scmp.ne.s32.totalorder %s411, %s425
      %p427 = scmp.eq.s32.totalorder %s34, 0
      %p428 = por %p426, %p427
      %s430 = sadd.s32 %s429, 1
      %p433 = scmp.eq.s32.totalorder %s28, 1
      %p434 = scmp.ne.s32.totalorder %s429, %s431
      %p435 = scmp.eq.s32.totalorder %s28, 0
      %p436 = por %p434, %p435
      %p437 = scmp.ne.s32.totalorder %s429, %s431
      %p438 = scmp.eq.s32.totalorder %s33, 1
      %p439 = por %p437, %p438
      %p440 = scmp.ne.s32.totalorder %s431, %s432
      %p441 = scmp.eq.s32.totalorder %s33, 0
      %p442 = por %p440, %p441
      %p443 = scmp.ne.s32.totalorder %s431, %s432
      %p444 = scmp.eq.s32.totalorder %s34, 1
      %p445 = por %p443, %p444
      %p447 = scmp.ne.s32.totalorder %s432, %s446
      %p448 = scmp.eq.s32.totalorder %s34, 0
      %p449 = por %p447, %p448
      %s450 = ssub.s32 %s28, %s35
      %p451 = scmp.eq.s32.totalorder %s450, 0
      %s453 = sadd.s32 %s452, 1
      %s454 = scalar_select %p451, %s452, %s453
      %p457 = pneg %p451
      %p458 = scmp.eq.s32.totalorder %s28, 1
      %p459 = por %p457, %p458
      %p460 = scmp.ne.s32.totalorder %s452, %s455
      %p461 = scmp.eq.s32.totalorder %s28, 0
      %p462 = por %p460, %p461
      %p463 = scmp.ne.s32.totalorder %s452, %s455
      %p464 = scmp.eq.s32.totalorder %s33, 1
      %p465 = por %p463, %p464
      %p466 = scmp.ne.s32.totalorder %s455, %s456
      %p467 = scmp.eq.s32.totalorder %s33, 0
      %p468 = por %p466, %p467
      %p469 = scmp.ne.s32.totalorder %s455, %s456
      %p470 = scmp.eq.s32.totalorder %s34, 1
      %p471 = por %p469, %p470
      %p473 = scmp.ne.s32.totalorder %s456, %s472
      %p474 = scmp.eq.s32.totalorder %s34, 0
      %p475 = por %p473, %p474
      %p476 = scmp.le.s32.totalorder 1, %s28
      %p477 = scmp.lt.s32.totalorder %s28, 3
      %p478 = pnand %p476, %p477
      %p479 = pneg %p478
      // Predicated region
      $region9: #{tpu_custom_call.1} parent=5 // pred_check
        _
      $region10: #{tpu_custom_call.1} parent=5 // pred_check_branch
        %481 = sbr.rel (%p478) target = $region12
      $region11: #{tpu_custom_call.1} parent=5 // pred_region
        %s482 = ssub.s32 %s28, 1
        // Predicated region
        $region13: #{tpu_custom_call.1} parent=11 // pred_check
          %p483 = pneg %p127
        $region14: #{tpu_custom_call.1} parent=11 // pred_check_branch
          %485 = sbr.rel (%p483) target = $region16
        $region15: #{tpu_custom_call.1} parent=11 // pred_region
          _
        $region16: #{tpu_custom_call.1} parent=11 // pred_fallthru
          _
        // Predicated region
        $region17: #{tpu_custom_call.1} parent=11 // pred_check
          %p486 = pneg %p148
        $region18: #{tpu_custom_call.1} parent=11 // pred_check_branch
          %488 = sbr.rel (%p486) target = $region20
        $region19: #{tpu_custom_call.1} parent=11 // pred_region
          _
        $region20: #{tpu_custom_call.1} parent=11 // pred_fallthru
          _
        // Predicated region
        $region21: #{tpu_custom_call.1} parent=11 // pred_check
          %p489 = pneg %p169
        $region22: #{tpu_custom_call.1} parent=11 // pred_check_branch
          %491 = sbr.rel (%p489) target = $region24
        $region23: #{tpu_custom_call.1} parent=11 // pred_region
          _
        $region24: #{tpu_custom_call.1} parent=11 // pred_fallthru
          _
        // Predicated region
        $region25: #{tpu_custom_call.1} parent=11 // pred_check
          %p492 = pneg %p190
        $region26: #{tpu_custom_call.1} parent=11 // pred_check_branch
          %494 = sbr.rel (%p492) target = $region28
        $region27: #{tpu_custom_call.1} parent=11 // pred_region
          _
        $region28: #{tpu_custom_call.1} parent=11 // pred_fallthru
          _
        // Predicated region
        $region29: #{tpu_custom_call.1} parent=11 // pred_check
          %p495 = pneg %p211
        $region30: #{tpu_custom_call.1} parent=11 // pred_check_branch
          %497 = sbr.rel (%p495) target = $region32
        $region31: #{tpu_custom_call.1} parent=11 // pred_region
          _
        $region32: #{tpu_custom_call.1} parent=11 // pred_fallthru
          _
        // Predicated region
        $region33: #{tpu_custom_call.1} parent=11 // pred_check
          %p498 = pneg %p232
        $region34: #{tpu_custom_call.1} parent=11 // pred_check_branch
          %500 = sbr.rel (%p498) target = $region36
        $region35: #{tpu_custom_call.1} parent=11 // pred_region
          _
        $region36: #{tpu_custom_call.1} parent=11 // pred_fallthru
          _
        // Predicated region
        $region37: #{tpu_custom_call.1} parent=11 // pred_check
          %p501 = pneg %p253
        $region38: #{tpu_custom_call.1} parent=11 // pred_check_branch
          %503 = sbr.rel (%p501) target = $region40
        $region39: #{tpu_custom_call.1} parent=11 // pred_region
          _
        $region40: #{tpu_custom_call.1} parent=11 // pred_fallthru
          _
        // Predicated region
        $region41: #{tpu_custom_call.1} parent=11 // pred_check
          %p504 = pneg %p274
        $region42: #{tpu_custom_call.1} parent=11 // pred_check_branch
          %506 = sbr.rel (%p504) target = $region44
        $region43: #{tpu_custom_call.1} parent=11 // pred_region
          _
        $region44: #{tpu_custom_call.1} parent=11 // pred_fallthru
          _
        // Predicated region
        $region45: #{tpu_custom_call.1} parent=11 // pred_check
          %p507 = pneg %p295
        $region46: #{tpu_custom_call.1} parent=11 // pred_check_branch
          %509 = sbr.rel (%p507) target = $region48
        $region47: #{tpu_custom_call.1} parent=11 // pred_region
          _
        $region48: #{tpu_custom_call.1} parent=11 // pred_fallthru
          _
        // Predicated region
        $region49: #{tpu_custom_call.1} parent=11 // pred_check
          %p510 = pneg %p316
        $region50: #{tpu_custom_call.1} parent=11 // pred_check_branch
          %512 = sbr.rel (%p510) target = $region52
        $region51: #{tpu_custom_call.1} parent=11 // pred_region
          _
        $region52: #{tpu_custom_call.1} parent=11 // pred_fallthru
          _
        // Predicated region
        $region53: #{tpu_custom_call.1} parent=11 // pred_check
          %p513 = pneg %p337
        $region54: #{tpu_custom_call.1} parent=11 // pred_check_branch
          %515 = sbr.rel (%p513) target = $region56
        $region55: #{tpu_custom_call.1} parent=11 // pred_region
          _
        $region56: #{tpu_custom_call.1} parent=11 // pred_fallthru
          _
        // Predicated region
        $region57: #{tpu_custom_call.1} parent=11 // pred_check
          %p516 = pneg %p358
        $region58: #{tpu_custom_call.1} parent=11 // pred_check_branch
          %518 = sbr.rel (%p516) target = $region60
        $region59: #{tpu_custom_call.1} parent=11 // pred_region
          _
        $region60: #{tpu_custom_call.1} parent=11 // pred_fallthru
          _
        // Predicated region
        $region61: #{tpu_custom_call.1} parent=11 // pred_check
          %p519 = pneg %p379
        $region62: #{tpu_custom_call.1} parent=11 // pred_check_branch
          %521 = sbr.rel (%p519) target = $region64
        $region63: #{tpu_custom_call.1} parent=11 // pred_region
          _
        $region64: #{tpu_custom_call.1} parent=11 // pred_fallthru
          _
        // Predicated region
        $region65: #{tpu_custom_call.1} parent=11 // pred_check
          %p522 = pneg %p400
        $region66: #{tpu_custom_call.1} parent=11 // pred_check_branch
          %524 = sbr.rel (%p522) target = $region68
        $region67: #{tpu_custom_call.1} parent=11 // pred_region
          _
        $region68: #{tpu_custom_call.1} parent=11 // pred_fallthru
          _
        // Predicated region
        $region69: #{tpu_custom_call.1} parent=11 // pred_check
          %p525 = pneg %p421
        $region70: #{tpu_custom_call.1} parent=11 // pred_check_branch
          %527 = sbr.rel (%p525) target = $region72
        $region71: #{tpu_custom_call.1} parent=11 // pred_region
          _
        $region72: #{tpu_custom_call.1} parent=11 // pred_fallthru
          _
        // Predicated region
        $region73: #{tpu_custom_call.1} parent=11 // pred_check
          %p528 = pneg %p442
        $region74: #{tpu_custom_call.1} parent=11 // pred_check_branch
          %530 = sbr.rel (%p528) target = $region76
        $region75: #{tpu_custom_call.1} parent=11 // pred_region
          _
        $region76: #{tpu_custom_call.1} parent=11 // pred_fallthru
          _
      $region12: #{tpu_custom_call.1} parent=5 // pred_fallthru
        _
      %p531 = scmp.lt.s32.totalorder %s28, 2
      // Predicated region
      $region77: #{tpu_custom_call.1} parent=5 // pred_check
        %p532 = pneg %p531
      $region78: #{tpu_custom_call.1} parent=5 // pred_check_branch
        %534 = sbr.rel (%p532) target = $region80
      $region79: #{tpu_custom_call.1} parent=5 // pred_region
        // Predicated region
        $region81: #{tpu_custom_call.1} parent=79 // pred_check
          %p535 = pneg %p48
        $region82: #{tpu_custom_call.1} parent=79 // pred_check_branch
          %537 = sbr.rel (%p535) target = $region84
        $region83: #{tpu_custom_call.1} parent=79 // pred_region
          %p538 = scmp.lt.s32.totalorder %s28, 1
          %s539 = scalar_select %p538, %s28, 1
          %s540 = smul.addr %s539, 8
          %s541 = scalar_lea.vmem %s0, %s540
        $region84: #{tpu_custom_call.1} parent=79 // pred_fallthru
          _
        // Predicated region
        $region85: #{tpu_custom_call.1} parent=79 // pred_check
          %p542 = pneg %p74
        $region86: #{tpu_custom_call.1} parent=79 // pred_check_branch
          %544 = sbr.rel (%p542) target = $region88
        $region87: #{tpu_custom_call.1} parent=79 // pred_region
          %p545 = scmp.lt.s32.totalorder %s28, 1
          %s546 = scalar_select %p545, %s28, 1
          %s547 = smul.addr %s546, 8
          %s548 = scalar_lea.vmem %s1, %s547
        $region88: #{tpu_custom_call.1} parent=79 // pred_fallthru
          _
        // Predicated region
        $region89: #{tpu_custom_call.1} parent=79 // pred_check
          %p549 = pneg %p100
        $region90: #{tpu_custom_call.1} parent=79 // pred_check_branch
          %551 = sbr.rel (%p549) target = $region92
        $region91: #{tpu_custom_call.1} parent=79 // pred_region
          %p552 = scmp.lt.s32.totalorder %s28, 1
          %s553 = scalar_select %p552, %s28, 1
          %s554 = smul.addr %s553, 8
          %s555 = scalar_lea.vmem %s2, %s554
        $region92: #{tpu_custom_call.1} parent=79 // pred_fallthru
          _
      $region80: #{tpu_custom_call.1} parent=5 // pred_fallthru
        _
      %p556 = scmp.le.s32.totalorder 1, %s28
      %p557 = scmp.lt.s32.totalorder %s28, 3
      %p558 = pnand %p556, %p557
      %p559 = pneg %p558
      // Predicated region
      $region93: #{tpu_custom_call.1} parent=5 // pred_check
        _
      $region94: #{tpu_custom_call.1} parent=5 // pred_check_branch
        %561 = sbr.rel (%p558) target = $region96
      $region95: #{tpu_custom_call.1} parent=5 // pred_region
        %s562 = ssub.s32 %s28, 1
        %p563 = scmp.lt.s32.totalorder %s33, 1
        %s564 = scalar_select %p563, %s33, 1
        %s565 = smul.addr %s564, 8
        %s566 = scalar_lea.vmem %s0, %s565
        %p567 = pneg %p54
        %p568 = pneg %p51
        %p569 = scmp.lt.s32.totalorder %s33, 1
        %s570 = scalar_select %p569, %s33, 1
        %s571 = smul.addr %s570, 8
        %s572 = scalar_lea.vmem %s1, %s571
        %p573 = pneg %p80
        %p574 = pneg %p77
        %p575 = scmp.lt.s32.totalorder %s33, 1
        %s576 = scalar_select %p575, %s33, 1
        %s577 = smul.addr %s576, 8
        %s578 = scalar_lea.vmem %s2, %s577
        %p579 = pneg %p106
        %p580 = pneg %p103
        %p581 = pneg %p127
        %p582 = pneg %p124
        %p583 = pneg %p148
        %p584 = pneg %p145
        %p585 = pneg %p169
        %p586 = pneg %p166
        %p587 = pneg %p190
        %p588 = pneg %p187
        %p589 = pneg %p211
        %p590 = pneg %p208
        %p591 = pneg %p232
        %p592 = pneg %p229
        %p593 = pneg %p253
        %p594 = pneg %p250
        %p595 = pneg %p274
        %p596 = pneg %p271
        %p597 = pneg %p295
        %p598 = pneg %p292
        %p599 = pneg %p316
        %p600 = pneg %p313
        %p601 = pneg %p337
        %p602 = pneg %p334
        %p603 = pneg %p358
        %p604 = pneg %p355
        %p605 = pneg %p379
        %p606 = pneg %p376
        %p607 = pneg %p400
        %p608 = pneg %p397
        %p609 = pneg %p421
        %p610 = pneg %p418
        %p611 = pneg %p442
        %p612 = pneg %p439
        %p613 = pneg %p468
        %p614 = pneg %p465
        %s615 = sand.u32 %s455, 1
        %s616 = scalar_lea.sflag [#allocation3], %s615
        %s617 = sand.u32 %s455, 1
        %s618 = smul.addr %s617, 8
        %s619 = scalar_lea.vmem [#allocation2], %s618
        %p620 = scmp.lt.s32.totalorder %s33, 1
        %s621 = scalar_select %p620, %s33, 1
        %s622 = smul.addr %s621, 8
        %s623 = scalar_lea.vmem %s0, %s622
        %p624 = scmp.lt.s32.totalorder %s33, 1
        %s625 = scalar_select %p624, %s33, 1
        %s626 = smul.addr %s625, 8
        %s627 = scalar_lea.vmem %s1, %s626
        %p628 = scmp.lt.s32.totalorder %s33, 1
        %s629 = scalar_select %p628, %s33, 1
        %s630 = smul.addr %s629, 8
        %s631 = scalar_lea.vmem %s2, %s630
        %v632 = vld [vmem:[%s623] sm:$0xff]
        %v633 = vld [vmem:[%s627] sm:$0xff]
        %v634 = vld [vmem:[%s631] sm:$0xff]
        %v635 = vld [vmem:[%s3] sm:$0xff]
        %v636 = vld [vmem:[%s3 + $0x8] sm:$0xff]
        %v637 = vld [vmem:[%s3 + $0x10] sm:$0xff]
        %v638 = vld [vmem:[%s3 + $0x18] sm:$0xff]
        %v639 = vld [vmem:[%s3 + $0x20] sm:$0xff]
        %v640 = vld [vmem:[%s3 + $0x28] sm:$0xff]
        %v641 = vld [vmem:[%s3 + $0x30] sm:$0xff]
        %v642 = vld [vmem:[%s3 + $0x38] sm:$0xff]
        %v643 = vld [vmem:[%s3 + $0x40] sm:$0xff]
        %v644 = vld [vmem:[%s3 + $0x48] sm:$0xff]
        %v645 = vld [vmem:[%s3 + $0x50] sm:$0xff]
        %v646 = vld [vmem:[%s3 + $0x58] sm:$0xff]
        %v647 = vld [vmem:[%s3 + $0x60] sm:$0xff]
        %v648 = vld [vmem:[%s3 + $0x68] sm:$0xff]
        %v649 = vld [vmem:[%s3 + $0x70] sm:$0xff]
        %v650 = vld [vmem:[%s3 + $0x78] sm:$0xff]
        %v651 = vld [vmem:[%s4] sm:$0x1]
        %v652 = vld [vmem:[%s4 + $0x1] sm:$0x1]
        %v653 = vld [vmem:[%s4 + $0x2] sm:$0x1]
        %v654 = vld [vmem:[%s4 + $0x3] sm:$0x1]
        %v659 = vlaneseq
        %v660 = vshrl.u32 %v659, 7
        %v661 = vsub.s32 0, %v660
        %v662 = vrot.slane %v651, %v661
        %v663 = vlaneseq
        %v664 = vshrl.u32 %v663, 7
        %v665 = vsub.s32 0, %v664
        %v666 = vrot.slane %v652, %v665
        %v667 = vlaneseq
        %v668 = vshrl.u32 %v667, 7
        %v669 = vsub.s32 0, %v668
        %v670 = vrot.slane %v653, %v669
        %v671 = vlaneseq
        %v672 = vshrl.u32 %v671, 7
        %v673 = vsub.s32 0, %v672
        %v674 = vrot.slane %v654, %v673
        %vm679 = vcmask 261120
        %v681 = vsel %vm679, %v632, 0
        %683 = vmatprep.subr.mxu0 0.0
        %684 = vmatpush1.msra.mxu0 0.0
        %685 = vmatprep.subr.mxu0 0.0
        %686 = vmatpush1.msra.mxu0 0.0
        %687 = vmatprep.subr.mxu0 0.0
        %688 = vmatpush1.msra.mxu0 0.0
        %689 = vmatprep.subr.mxu0 0.0
        %690 = vmatpush1.msra.mxu0 0.0
        %691 = vmatprep.subr.mxu0 0.0
        %692 = vmatpush1.msra.mxu0 0.0
        %693 = vmatprep.subr.mxu0 0.0
        %694 = vmatpush1.msra.mxu0 0.0
        %695 = vmatprep.subr.mxu0 0.0
        %696 = vmatpush1.msra.mxu0 0.0
        %697 = vmatprep.subr.mxu0 0.0
        %698 = vmatpush1.msra.mxu0 0.0
        %699 = vmatprep.subr.mxu0 0.0
        %700 = vmatpush1.msra.mxu0 0.0
        %701 = vmatprep.subr.mxu0 0.0
        %702 = vmatpush1.msra.mxu0 0.0
        %703 = vmatprep.subr.mxu0 0.0
        %704 = vmatpush1.msra.mxu0 0.0
        %705 = vmatprep.subr.mxu0 0.0
        %706 = vmatpush1.msra.mxu0 0.0
        %707 = vmatprep.subr.mxu0 0.0
        %708 = vmatpush1.msra.mxu0 %v638
        %709 = vmatprep.subr.mxu0 0.0
        %710 = vmatpush1.msra.mxu0 %v637
        %711 = vmatprep.subr.mxu0 0.0
        %712 = vmatpush1.msra.mxu0 %v636
        %713 = vmatprep.subr.mxu0 0.0
        %714 = vmatpush1.msra.mxu0 %v635
        %715 = vmatprep.subr.mxu0 0.0
        %716 = vmatpush2.msra.mxu0 0.0
        %717 = vmatprep.subr.mxu0 0.0
        %718 = vmatpush2.msra.mxu0 0.0
        %719 = vmatprep.subr.mxu0 0.0
        %720 = vmatpush2.msra.mxu0 0.0
        %721 = vmatprep.subr.mxu0 0.0
        %722 = vmatpush2.msra.mxu0 0.0
        %723 = vmatprep.subr.mxu0 0.0
        %724 = vmatpush2.msra.mxu0 0.0
        %725 = vmatprep.subr.mxu0 0.0
        %726 = vmatpush2.msra.mxu0 0.0
        %727 = vmatprep.subr.mxu0 0.0
        %728 = vmatpush2.msra.mxu0 0.0
        %729 = vmatprep.subr.mxu0 0.0
        %730 = vmatpush2.msra.mxu0 0.0
        %731 = vmatprep.subr.mxu0 0.0
        %732 = vmatpush2.msra.mxu0 0.0
        %733 = vmatprep.subr.mxu0 0.0
        %734 = vmatpush2.msra.mxu0 0.0
        %735 = vmatprep.subr.mxu0 0.0
        %736 = vmatpush2.msra.mxu0 0.0
        %737 = vmatprep.subr.mxu0 0.0
        %738 = vmatpush2.msra.mxu0 0.0
        %739 = vmatprep.subr.mxu0 0.0
        %740 = vmatpush2.msra.mxu0 0.0
        %741 = vmatprep.subr.mxu0 0.0
        %742 = vmatpush2.msra.mxu0 0.0
        %743 = vmatprep.subr.mxu0 0.0
        %744 = vmatpush2.msra.mxu0 0.0
        %745 = vmatprep.subr.mxu0 0.0
        %746 = vmatpush2.msra.mxu0 0.0
        %747 = vmatprep.mubr.f32.mxu0 0.0
        %748 = vmatmul.mubr.f32.gmra.mxu0 %v681
        %v749 = vpop.f32.mrf.mxu0
        %v750 = vadd.f32 %v662, %v749
        %v751 = vpop.f32.mrf.mxu0
        %752 = vdwg.mxu0
        %753 = vmatprep.subr.mxu0 0.0
        %754 = vmatpush1.msra.mxu0 0.0
        %755 = vmatprep.subr.mxu0 0.0
        %756 = vmatpush1.msra.mxu0 0.0
        %757 = vmatprep.subr.mxu0 0.0
        %758 = vmatpush1.msra.mxu0 0.0
        %759 = vmatprep.subr.mxu0 0.0
        %760 = vmatpush1.msra.mxu0 0.0
        %761 = vmatprep.subr.mxu0 0.0
        %762 = vmatpush1.msra.mxu0 0.0
        %763 = vmatprep.subr.mxu0 0.0
        %764 = vmatpush1.msra.mxu0 0.0
        %765 = vmatprep.subr.mxu0 0.0
        %766 = vmatpush1.msra.mxu0 0.0
        %767 = vmatprep.subr.mxu0 0.0
        %768 = vmatpush1.msra.mxu0 0.0
        %769 = vmatprep.subr.mxu0 0.0
        %770 = vmatpush1.msra.mxu0 0.0
        %771 = vmatprep.subr.mxu0 0.0
        %772 = vmatpush1.msra.mxu0 0.0
        %773 = vmatprep.subr.mxu0 0.0
        %774 = vmatpush1.msra.mxu0 0.0
        %775 = vmatprep.subr.mxu0 0.0
        %776 = vmatpush1.msra.mxu0 0.0
        %777 = vmatprep.subr.mxu0 0.0
        %778 = vmatpush1.msra.mxu0 %v642
        %779 = vmatprep.subr.mxu0 0.0
        %780 = vmatpush1.msra.mxu0 %v641
        %781 = vmatprep.subr.mxu0 0.0
        %782 = vmatpush1.msra.mxu0 %v640
        %783 = vmatprep.subr.mxu0 0.0
        %784 = vmatpush1.msra.mxu0 %v639
        %785 = vmatprep.subr.mxu0 0.0
        %786 = vmatpush2.msra.mxu0 0.0
        %787 = vmatprep.subr.mxu0 0.0
        %788 = vmatpush2.msra.mxu0 0.0
        %789 = vmatprep.subr.mxu0 0.0
        %790 = vmatpush2.msra.mxu0 0.0
        %791 = vmatprep.subr.mxu0 0.0
        %792 = vmatpush2.msra.mxu0 0.0
        %793 = vmatprep.subr.mxu0 0.0
        %794 = vmatpush2.msra.mxu0 0.0
        %795 = vmatprep.subr.mxu0 0.0
        %796 = vmatpush2.msra.mxu0 0.0
        %797 = vmatprep.subr.mxu0 0.0
        %798 = vmatpush2.msra.mxu0 0.0
        %799 = vmatprep.subr.mxu0 0.0
        %800 = vmatpush2.msra.mxu0 0.0
        %801 = vmatprep.subr.mxu0 0.0
        %802 = vmatpush2.msra.mxu0 0.0
        %803 = vmatprep.subr.mxu0 0.0
        %804 = vmatpush2.msra.mxu0 0.0
        %805 = vmatprep.subr.mxu0 0.0
        %806 = vmatpush2.msra.mxu0 0.0
        %807 = vmatprep.subr.mxu0 0.0
        %808 = vmatpush2.msra.mxu0 0.0
        %809 = vmatprep.subr.mxu0 0.0
        %810 = vmatpush2.msra.mxu0 0.0
        %811 = vmatprep.subr.mxu0 0.0
        %812 = vmatpush2.msra.mxu0 0.0
        %813 = vmatprep.subr.mxu0 0.0
        %814 = vmatpush2.msra.mxu0 0.0
        %815 = vmatprep.subr.mxu0 0.0
        %816 = vmatpush2.msra.mxu0 0.0
        %817 = vmatprep.mubr.f32.mxu0 0.0
        %818 = vmatmul.mubr.f32.gmra.mxu0 %v681
        %v819 = vpop.f32.mrf.mxu0
        %v820 = vadd.f32 %v666, %v819
        %v821 = vpop.f32.mrf.mxu0
        %822 = vdwg.mxu0
        %823 = vmatprep.subr.mxu0 0.0
        %824 = vmatpush1.msra.mxu0 0.0
        %825 = vmatprep.subr.mxu0 0.0
        %826 = vmatpush1.msra.mxu0 0.0
        %827 = vmatprep.subr.mxu0 0.0
        %828 = vmatpush1.msra.mxu0 0.0
        %829 = vmatprep.subr.mxu0 0.0
        %830 = vmatpush1.msra.mxu0 0.0
        %831 = vmatprep.subr.mxu0 0.0
        %832 = vmatpush1.msra.mxu0 0.0
        %833 = vmatprep.subr.mxu0 0.0
        %834 = vmatpush1.msra.mxu0 0.0
        %835 = vmatprep.subr.mxu0 0.0
        %836 = vmatpush1.msra.mxu0 0.0
        %837 = vmatprep.subr.mxu0 0.0
        %838 = vmatpush1.msra.mxu0 0.0
        %839 = vmatprep.subr.mxu0 0.0
        %840 = vmatpush1.msra.mxu0 0.0
        %841 = vmatprep.subr.mxu0 0.0
        %842 = vmatpush1.msra.mxu0 0.0
        %843 = vmatprep.subr.mxu0 0.0
        %844 = vmatpush1.msra.mxu0 0.0
        %845 = vmatprep.subr.mxu0 0.0
        %846 = vmatpush1.msra.mxu0 0.0
        %847 = vmatprep.subr.mxu0 0.0
        %848 = vmatpush1.msra.mxu0 %v646
        %849 = vmatprep.subr.mxu0 0.0
        %850 = vmatpush1.msra.mxu0 %v645
        %851 = vmatprep.subr.mxu0 0.0
        %852 = vmatpush1.msra.mxu0 %v644
        %853 = vmatprep.subr.mxu0 0.0
        %854 = vmatpush1.msra.mxu0 %v643
        %855 = vmatprep.subr.mxu0 0.0
        %856 = vmatpush2.msra.mxu0 0.0
        %857 = vmatprep.subr.mxu0 0.0
        %858 = vmatpush2.msra.mxu0 0.0
        %859 = vmatprep.subr.mxu0 0.0
        %860 = vmatpush2.msra.mxu0 0.0
        %861 = vmatprep.subr.mxu0 0.0
        %862 = vmatpush2.msra.mxu0 0.0
        %863 = vmatprep.subr.mxu0 0.0
        %864 = vmatpush2.msra.mxu0 0.0
        %865 = vmatprep.subr.mxu0 0.0
        %866 = vmatpush2.msra.mxu0 0.0
        %867 = vmatprep.subr.mxu0 0.0
        %868 = vmatpush2.msra.mxu0 0.0
        %869 = vmatprep.subr.mxu0 0.0
        %870 = vmatpush2.msra.mxu0 0.0
        %871 = vmatprep.subr.mxu0 0.0
        %872 = vmatpush2.msra.mxu0 0.0
        %873 = vmatprep.subr.mxu0 0.0
        %874 = vmatpush2.msra.mxu0 0.0
        %875 = vmatprep.subr.mxu0 0.0
        %876 = vmatpush2.msra.mxu0 0.0
        %877 = vmatprep.subr.mxu0 0.0
        %878 = vmatpush2.msra.mxu0 0.0
        %879 = vmatprep.subr.mxu0 0.0
        %880 = vmatpush2.msra.mxu0 0.0
        %881 = vmatprep.subr.mxu0 0.0
        %882 = vmatpush2.msra.mxu0 0.0
        %883 = vmatprep.subr.mxu0 0.0
        %884 = vmatpush2.msra.mxu0 0.0
        %885 = vmatprep.subr.mxu0 0.0
        %886 = vmatpush2.msra.mxu0 0.0
        %887 = vmatprep.mubr.f32.mxu0 0.0
        %888 = vmatmul.mubr.f32.gmra.mxu0 %v681
        %v889 = vpop.f32.mrf.mxu0
        %v890 = vadd.f32 %v670, %v889
        %v891 = vpop.f32.mrf.mxu0
        %892 = vdwg.mxu0
        %893 = vmatprep.subr.mxu0 0.0
        %894 = vmatpush1.msra.mxu0 0.0
        %895 = vmatprep.subr.mxu0 0.0
        %896 = vmatpush1.msra.mxu0 0.0
        %897 = vmatprep.subr.mxu0 0.0
        %898 = vmatpush1.msra.mxu0 0.0
        %899 = vmatprep.subr.mxu0 0.0
        %900 = vmatpush1.msra.mxu0 0.0
        %901 = vmatprep.subr.mxu0 0.0
        %902 = vmatpush1.msra.mxu0 0.0
        %903 = vmatprep.subr.mxu0 0.0
        %904 = vmatpush1.msra.mxu0 0.0
        %905 = vmatprep.subr.mxu0 0.0
        %906 = vmatpush1.msra.mxu0 0.0
        %907 = vmatprep.subr.mxu0 0.0
        %908 = vmatpush1.msra.mxu0 0.0
        %909 = vmatprep.subr.mxu0 0.0
        %910 = vmatpush1.msra.mxu0 0.0
        %911 = vmatprep.subr.mxu0 0.0
        %912 = vmatpush1.msra.mxu0 0.0
        %913 = vmatprep.subr.mxu0 0.0
        %914 = vmatpush1.msra.mxu0 0.0
        %915 = vmatprep.subr.mxu0 0.0
        %916 = vmatpush1.msra.mxu0 0.0
        %917 = vmatprep.subr.mxu0 0.0
        %918 = vmatpush1.msra.mxu0 %v650
        %919 = vmatprep.subr.mxu0 0.0
        %920 = vmatpush1.msra.mxu0 %v649
        %921 = vmatprep.subr.mxu0 0.0
        %922 = vmatpush1.msra.mxu0 %v648
        %923 = vmatprep.subr.mxu0 0.0
        %924 = vmatpush1.msra.mxu0 %v647
        %925 = vmatprep.subr.mxu0 0.0
        %926 = vmatpush2.msra.mxu0 0.0
        %927 = vmatprep.subr.mxu0 0.0
        %928 = vmatpush2.msra.mxu0 0.0
        %929 = vmatprep.subr.mxu0 0.0
        %930 = vmatpush2.msra.mxu0 0.0
        %931 = vmatprep.subr.mxu0 0.0
        %932 = vmatpush2.msra.mxu0 0.0
        %933 = vmatprep.subr.mxu0 0.0
        %934 = vmatpush2.msra.mxu0 0.0
        %935 = vmatprep.subr.mxu0 0.0
        %936 = vmatpush2.msra.mxu0 0.0
        %937 = vmatprep.subr.mxu0 0.0
        %938 = vmatpush2.msra.mxu0 0.0
        %939 = vmatprep.subr.mxu0 0.0
        %940 = vmatpush2.msra.mxu0 0.0
        %941 = vmatprep.subr.mxu0 0.0
        %942 = vmatpush2.msra.mxu0 0.0
        %943 = vmatprep.subr.mxu0 0.0
        %944 = vmatpush2.msra.mxu0 0.0
        %945 = vmatprep.subr.mxu0 0.0
        %946 = vmatpush2.msra.mxu0 0.0
        %947 = vmatprep.subr.mxu0 0.0
        %948 = vmatpush2.msra.mxu0 0.0
        %949 = vmatprep.subr.mxu0 0.0
        %950 = vmatpush2.msra.mxu0 0.0
        %951 = vmatprep.subr.mxu0 0.0
        %952 = vmatpush2.msra.mxu0 0.0
        %953 = vmatprep.subr.mxu0 0.0
        %954 = vmatpush2.msra.mxu0 0.0
        %955 = vmatprep.subr.mxu0 0.0
        %956 = vmatpush2.msra.mxu0 0.0
        %957 = vmatprep.mubr.f32.mxu0 0.0
        %958 = vmatmul.mubr.f32.gmra.mxu0 %v681
        %v959 = vpop.f32.mrf.mxu0
        %v960 = vadd.f32 %v674, %v959
        %v961 = vpop.f32.mrf.mxu0
        %962 = vdwg.mxu0
        %964 = vrot.lane.b32.xlu0 %v750, 120
        %v965 = vpop.permute.xlu0 %964
        %vm966 = vcmask 64512
        %v967 = vsel %vm966, %v750, 0
        %v969 = vsel %vm966, %v965, 0
        %971 = vmatprep.subr.mxu0 0.0
        %972 = vmatpush1.xpose.msra.mxu0 0.0
        %973 = vmatprep.subr.mxu0 0.0
        %974 = vmatpush1.xpose.msra.mxu0 0.0
        %975 = vmatprep.subr.mxu0 0.0
        %976 = vmatpush1.xpose.msra.mxu0 0.0
        %977 = vmatprep.subr.mxu0 0.0
        %978 = vmatpush1.xpose.msra.mxu0 0.0
        %979 = vmatprep.subr.mxu0 0.0
        %980 = vmatpush1.xpose.msra.mxu0 0.0
        %981 = vmatprep.subr.mxu0 0.0
        %982 = vmatpush1.xpose.msra.mxu0 0.0
        %983 = vmatprep.subr.mxu0 0.0
        %984 = vmatpush1.xpose.msra.mxu0 0.0
        %985 = vmatprep.subr.mxu0 0.0
        %986 = vmatpush1.xpose.msra.mxu0 0.0
        %987 = vmatprep.subr.mxu0 0.0
        %988 = vmatpush1.xpose.msra.mxu0 0.0
        %989 = vmatprep.subr.mxu0 0.0
        %990 = vmatpush1.xpose.msra.mxu0 0.0
        %991 = vmatprep.subr.mxu0 0.0
        %992 = vmatpush1.xpose.msra.mxu0 0.0
        %993 = vmatprep.subr.mxu0 0.0
        %994 = vmatpush1.xpose.msra.mxu0 0.0
        %995 = vmatprep.subr.mxu0 0.0
        %996 = vmatpush1.xpose.msra.mxu0 0.0
        %997 = vmatprep.subr.mxu0 0.0
        %998 = vmatpush1.xpose.msra.mxu0 0.0
        %999 = vmatprep.subr.mxu0 0.0
        %1000 = vmatpush1.xpose.msra.mxu0 0.0
        %1001 = vmatprep.subr.mxu0 0.0
        %1002 = vmatpush1.xpose.msra.mxu0 %v969
        %1003 = vmatprep.subr.mxu0 0.0
        %1004 = vmatpush2.xpose.msra.mxu0 0.0
        %1005 = vmatprep.subr.mxu0 0.0
        %1006 = vmatpush2.xpose.msra.mxu0 0.0
        %1007 = vmatprep.subr.mxu0 0.0
        %1008 = vmatpush2.xpose.msra.mxu0 0.0
        %1009 = vmatprep.subr.mxu0 0.0
        %1010 = vmatpush2.xpose.msra.mxu0 0.0
        %1011 = vmatprep.subr.mxu0 0.0
        %1012 = vmatpush2.xpose.msra.mxu0 0.0
        %1013 = vmatprep.subr.mxu0 0.0
        %1014 = vmatpush2.xpose.msra.mxu0 0.0
        %1015 = vmatprep.subr.mxu0 0.0
        %1016 = vmatpush2.xpose.msra.mxu0 0.0
        %1017 = vmatprep.subr.mxu0 0.0
        %1018 = vmatpush2.xpose.msra.mxu0 0.0
        %1019 = vmatprep.subr.mxu0 0.0
        %1020 = vmatpush2.xpose.msra.mxu0 0.0
        %1021 = vmatprep.subr.mxu0 0.0
        %1022 = vmatpush2.xpose.msra.mxu0 0.0
        %1023 = vmatprep.subr.mxu0 0.0
        %1024 = vmatpush2.xpose.msra.mxu0 0.0
        %1025 = vmatprep.subr.mxu0 0.0
        %1026 = vmatpush2.xpose.msra.mxu0 0.0
        %1027 = vmatprep.subr.mxu0 0.0
        %1028 = vmatpush2.xpose.msra.mxu0 0.0
        %1029 = vmatprep.subr.mxu0 0.0
        %1030 = vmatpush2.xpose.msra.mxu0 0.0
        %1031 = vmatprep.subr.mxu0 0.0
        %1032 = vmatpush2.xpose.msra.mxu0 0.0
        %1033 = vmatprep.subr.mxu0 0.0
        %1034 = vmatpush2.xpose.msra.mxu0 0.0
        %1035 = vmatprep.mubr.f32.mxu0 0.0
        %1036 = vmatmul.mubr.f32.gmra.mxu0 %v967
        %v1037 = vpop.f32.mrf.mxu0
        %v1038 = vadd.f32 0.0, %v1037
        %v1039 = vpop.f32.mrf.mxu0
        %1040 = vdwg.mxu0
        %1042 = vrot.lane.b32.xlu0 %v820, 120
        %v1043 = vpop.permute.xlu0 %1042
        %v1044 = vsel %vm966, %v820, 0
        %v1046 = vsel %vm966, %v1043, 0
        %1048 = vmatprep.subr.mxu0 0.0
        %1049 = vmatpush1.xpose.msra.mxu0 0.0
        %1050 = vmatprep.subr.mxu0 0.0
        %1051 = vmatpush1.xpose.msra.mxu0 0.0
        %1052 = vmatprep.subr.mxu0 0.0
        %1053 = vmatpush1.xpose.msra.mxu0 0.0
        %1054 = vmatprep.subr.mxu0 0.0
        %1055 = vmatpush1.xpose.msra.mxu0 0.0
        %1056 = vmatprep.subr.mxu0 0.0
        %1057 = vmatpush1.xpose.msra.mxu0 0.0
        %1058 = vmatprep.subr.mxu0 0.0
        %1059 = vmatpush1.xpose.msra.mxu0 0.0
        %1060 = vmatprep.subr.mxu0 0.0
        %1061 = vmatpush1.xpose.msra.mxu0 0.0
        %1062 = vmatprep.subr.mxu0 0.0
        %1063 = vmatpush1.xpose.msra.mxu0 0.0
        %1064 = vmatprep.subr.mxu0 0.0
        %1065 = vmatpush1.xpose.msra.mxu0 0.0
        %1066 = vmatprep.subr.mxu0 0.0
        %1067 = vmatpush1.xpose.msra.mxu0 0.0
        %1068 = vmatprep.subr.mxu0 0.0
        %1069 = vmatpush1.xpose.msra.mxu0 0.0
        %1070 = vmatprep.subr.mxu0 0.0
        %1071 = vmatpush1.xpose.msra.mxu0 0.0
        %1072 = vmatprep.subr.mxu0 0.0
        %1073 = vmatpush1.xpose.msra.mxu0 0.0
        %1074 = vmatprep.subr.mxu0 0.0
        %1075 = vmatpush1.xpose.msra.mxu0 0.0
        %1076 = vmatprep.subr.mxu0 0.0
        %1077 = vmatpush1.xpose.msra.mxu0 0.0
        %1078 = vmatprep.subr.mxu0 0.0
        %1079 = vmatpush1.xpose.msra.mxu0 %v1046
        %1080 = vmatprep.subr.mxu0 0.0
        %1081 = vmatpush2.xpose.msra.mxu0 0.0
        %1082 = vmatprep.subr.mxu0 0.0
        %1083 = vmatpush2.xpose.msra.mxu0 0.0
        %1084 = vmatprep.subr.mxu0 0.0
        %1085 = vmatpush2.xpose.msra.mxu0 0.0
        %1086 = vmatprep.subr.mxu0 0.0
        %1087 = vmatpush2.xpose.msra.mxu0 0.0
        %1088 = vmatprep.subr.mxu0 0.0
        %1089 = vmatpush2.xpose.msra.mxu0 0.0
        %1090 = vmatprep.subr.mxu0 0.0
        %1091 = vmatpush2.xpose.msra.mxu0 0.0
        %1092 = vmatprep.subr.mxu0 0.0
        %1093 = vmatpush2.xpose.msra.mxu0 0.0
        %1094 = vmatprep.subr.mxu0 0.0
        %1095 = vmatpush2.xpose.msra.mxu0 0.0
        %1096 = vmatprep.subr.mxu0 0.0
        %1097 = vmatpush2.xpose.msra.mxu0 0.0
        %1098 = vmatprep.subr.mxu0 0.0
        %1099 = vmatpush2.xpose.msra.mxu0 0.0
        %1100 = vmatprep.subr.mxu0 0.0
        %1101 = vmatpush2.xpose.msra.mxu0 0.0
        %1102 = vmatprep.subr.mxu0 0.0
        %1103 = vmatpush2.xpose.msra.mxu0 0.0
        %1104 = vmatprep.subr.mxu0 0.0
        %1105 = vmatpush2.xpose.msra.mxu0 0.0
        %1106 = vmatprep.subr.mxu0 0.0
        %1107 = vmatpush2.xpose.msra.mxu0 0.0
        %1108 = vmatprep.subr.mxu0 0.0
        %1109 = vmatpush2.xpose.msra.mxu0 0.0
        %1110 = vmatprep.subr.mxu0 0.0
        %1111 = vmatpush2.xpose.msra.mxu0 0.0
        %1112 = vmatprep.mubr.f32.mxu0 0.0
        %1113 = vmatmul.mubr.f32.gmra.mxu0 %v1044
        %v1114 = vpop.f32.mrf.mxu0
        %v1115 = vadd.f32 0.0, %v1114
        %v1116 = vpop.f32.mrf.mxu0
        %1117 = vdwg.mxu0
        %1119 = vrot.lane.b32.xlu0 %v890, 120
        %v1120 = vpop.permute.xlu0 %1119
        %v1121 = vsel %vm966, %v890, 0
        %v1123 = vsel %vm966, %v1120, 0
        %1125 = vmatprep.subr.mxu0 0.0
        %1126 = vmatpush1.xpose.msra.mxu0 0.0
        %1127 = vmatprep.subr.mxu0 0.0
        %1128 = vmatpush1.xpose.msra.mxu0 0.0
        %1129 = vmatprep.subr.mxu0 0.0
        %1130 = vmatpush1.xpose.msra.mxu0 0.0
        %1131 = vmatprep.subr.mxu0 0.0
        %1132 = vmatpush1.xpose.msra.mxu0 0.0
        %1133 = vmatprep.subr.mxu0 0.0
        %1134 = vmatpush1.xpose.msra.mxu0 0.0
        %1135 = vmatprep.subr.mxu0 0.0
        %1136 = vmatpush1.xpose.msra.mxu0 0.0
        %1137 = vmatprep.subr.mxu0 0.0
        %1138 = vmatpush1.xpose.msra.mxu0 0.0
        %1139 = vmatprep.subr.mxu0 0.0
        %1140 = vmatpush1.xpose.msra.mxu0 0.0
        %1141 = vmatprep.subr.mxu0 0.0
        %1142 = vmatpush1.xpose.msra.mxu0 0.0
        %1143 = vmatprep.subr.mxu0 0.0
        %1144 = vmatpush1.xpose.msra.mxu0 0.0
        %1145 = vmatprep.subr.mxu0 0.0
        %1146 = vmatpush1.xpose.msra.mxu0 0.0
        %1147 = vmatprep.subr.mxu0 0.0
        %1148 = vmatpush1.xpose.msra.mxu0 0.0
        %1149 = vmatprep.subr.mxu0 0.0
        %1150 = vmatpush1.xpose.msra.mxu0 0.0
        %1151 = vmatprep.subr.mxu0 0.0
        %1152 = vmatpush1.xpose.msra.mxu0 0.0
        %1153 = vmatprep.subr.mxu0 0.0
        %1154 = vmatpush1.xpose.msra.mxu0 0.0
        %1155 = vmatprep.subr.mxu0 0.0
        %1156 = vmatpush1.xpose.msra.mxu0 %v1123
        %1157 = vmatprep.subr.mxu0 0.0
        %1158 = vmatpush2.xpose.msra.mxu0 0.0
        %1159 = vmatprep.subr.mxu0 0.0
        %1160 = vmatpush2.xpose.msra.mxu0 0.0
        %1161 = vmatprep.subr.mxu0 0.0
        %1162 = vmatpush2.xpose.msra.mxu0 0.0
        %1163 = vmatprep.subr.mxu0 0.0
        %1164 = vmatpush2.xpose.msra.mxu0 0.0
        %1165 = vmatprep.subr.mxu0 0.0
        %1166 = vmatpush2.xpose.msra.mxu0 0.0
        %1167 = vmatprep.subr.mxu0 0.0
        %1168 = vmatpush2.xpose.msra.mxu0 0.0
        %1169 = vmatprep.subr.mxu0 0.0
        %1170 = vmatpush2.xpose.msra.mxu0 0.0
        %1171 = vmatprep.subr.mxu0 0.0
        %1172 = vmatpush2.xpose.msra.mxu0 0.0
        %1173 = vmatprep.subr.mxu0 0.0
        %1174 = vmatpush2.xpose.msra.mxu0 0.0
        %1175 = vmatprep.subr.mxu0 0.0
        %1176 = vmatpush2.xpose.msra.mxu0 0.0
        %1177 = vmatprep.subr.mxu0 0.0
        %1178 = vmatpush2.xpose.msra.mxu0 0.0
        %1179 = vmatprep.subr.mxu0 0.0
        %1180 = vmatpush2.xpose.msra.mxu0 0.0
        %1181 = vmatprep.subr.mxu0 0.0
        %1182 = vmatpush2.xpose.msra.mxu0 0.0
        %1183 = vmatprep.subr.mxu0 0.0
        %1184 = vmatpush2.xpose.msra.mxu0 0.0
        %1185 = vmatprep.subr.mxu0 0.0
        %1186 = vmatpush2.xpose.msra.mxu0 0.0
        %1187 = vmatprep.subr.mxu0 0.0
        %1188 = vmatpush2.xpose.msra.mxu0 0.0
        %1189 = vmatprep.mubr.f32.mxu0 0.0
        %1190 = vmatmul.mubr.f32.gmra.mxu0 %v1121
        %v1191 = vpop.f32.mrf.mxu0
        %v1192 = vadd.f32 0.0, %v1191
        %v1193 = vpop.f32.mrf.mxu0
        %1194 = vdwg.mxu0
        %1196 = vrot.lane.b32.xlu0 %v960, 120
        %v1197 = vpop.permute.xlu0 %1196
        %v1198 = vsel %vm966, %v960, 0
        %v1200 = vsel %vm966, %v1197, 0
        %1202 = vmatprep.subr.mxu0 0.0
        %1203 = vmatpush1.xpose.msra.mxu0 0.0
        %1204 = vmatprep.subr.mxu0 0.0
        %1205 = vmatpush1.xpose.msra.mxu0 0.0
        %1206 = vmatprep.subr.mxu0 0.0
        %1207 = vmatpush1.xpose.msra.mxu0 0.0
        %1208 = vmatprep.subr.mxu0 0.0
        %1209 = vmatpush1.xpose.msra.mxu0 0.0
        %1210 = vmatprep.subr.mxu0 0.0
        %1211 = vmatpush1.xpose.msra.mxu0 0.0
        %1212 = vmatprep.subr.mxu0 0.0
        %1213 = vmatpush1.xpose.msra.mxu0 0.0
        %1214 = vmatprep.subr.mxu0 0.0
        %1215 = vmatpush1.xpose.msra.mxu0 0.0
        %1216 = vmatprep.subr.mxu0 0.0
        %1217 = vmatpush1.xpose.msra.mxu0 0.0
        %1218 = vmatprep.subr.mxu0 0.0
        %1219 = vmatpush1.xpose.msra.mxu0 0.0
        %1220 = vmatprep.subr.mxu0 0.0
        %1221 = vmatpush1.xpose.msra.mxu0 0.0
        %1222 = vmatprep.subr.mxu0 0.0
        %1223 = vmatpush1.xpose.msra.mxu0 0.0
        %1224 = vmatprep.subr.mxu0 0.0
        %1225 = vmatpush1.xpose.msra.mxu0 0.0
        %1226 = vmatprep.subr.mxu0 0.0
        %1227 = vmatpush1.xpose.msra.mxu0 0.0
        %1228 = vmatprep.subr.mxu0 0.0
        %1229 = vmatpush1.xpose.msra.mxu0 0.0
        %1230 = vmatprep.subr.mxu0 0.0
        %1231 = vmatpush1.xpose.msra.mxu0 0.0
        %1232 = vmatprep.subr.mxu0 0.0
        %1233 = vmatpush1.xpose.msra.mxu0 %v1200
        %1234 = vmatprep.subr.mxu0 0.0
        %1235 = vmatpush2.xpose.msra.mxu0 0.0
        %1236 = vmatprep.subr.mxu0 0.0
        %1237 = vmatpush2.xpose.msra.mxu0 0.0
        %1238 = vmatprep.subr.mxu0 0.0
        %1239 = vmatpush2.xpose.msra.mxu0 0.0
        %1240 = vmatprep.subr.mxu0 0.0
        %1241 = vmatpush2.xpose.msra.mxu0 0.0
        %1242 = vmatprep.subr.mxu0 0.0
        %1243 = vmatpush2.xpose.msra.mxu0 0.0
        %1244 = vmatprep.subr.mxu0 0.0
        %1245 = vmatpush2.xpose.msra.mxu0 0.0
        %1246 = vmatprep.subr.mxu0 0.0
        %1247 = vmatpush2.xpose.msra.mxu0 0.0
        %1248 = vmatprep.subr.mxu0 0.0
        %1249 = vmatpush2.xpose.msra.mxu0 0.0
        %1250 = vmatprep.subr.mxu0 0.0
        %1251 = vmatpush2.xpose.msra.mxu0 0.0
        %1252 = vmatprep.subr.mxu0 0.0
        %1253 = vmatpush2.xpose.msra.mxu0 0.0
        %1254 = vmatprep.subr.mxu0 0.0
        %1255 = vmatpush2.xpose.msra.mxu0 0.0
        %1256 = vmatprep.subr.mxu0 0.0
        %1257 = vmatpush2.xpose.msra.mxu0 0.0
        %1258 = vmatprep.subr.mxu0 0.0
        %1259 = vmatpush2.xpose.msra.mxu0 0.0
        %1260 = vmatprep.subr.mxu0 0.0
        %1261 = vmatpush2.xpose.msra.mxu0 0.0
        %1262 = vmatprep.subr.mxu0 0.0
        %1263 = vmatpush2.xpose.msra.mxu0 0.0
        %1264 = vmatprep.subr.mxu0 0.0
        %1265 = vmatpush2.xpose.msra.mxu0 0.0
        %1266 = vmatprep.mubr.f32.mxu0 0.0
        %1267 = vmatmul.mubr.f32.gmra.mxu0 %v1198
        %v1268 = vpop.f32.mrf.mxu0
        %v1269 = vadd.f32 0.0, %v1268
        %v1270 = vpop.f32.mrf.mxu0
        %1271 = vdwg.mxu0
        %v1272 = vmul.f32 %v1038, 0.35355338
        %v1273 = vmul.f32 %v1115, 0.35355338
        %v1274 = vmul.f32 %v1192, 0.35355338
        %v1275 = vmul.f32 %v1269, 0.35355338
        %v1276 = vsel %vm966, %v1272, -inf
        %1277 = vmax.xlane.f32.xlu0 %v1276
        %v1278 = vpop.xlane.xlu0 %1277
        %v1279 = vsel %vm966, %v1273, -inf
        %1280 = vmax.xlane.f32.xlu0 %v1279
        %v1281 = vpop.xlane.xlu0 %1280
        %v1282 = vsel %vm966, %v1274, -inf
        %1283 = vmax.xlane.f32.xlu0 %v1282
        %v1284 = vpop.xlane.xlu0 %1283
        %v1285 = vsel %vm966, %v1275, -inf
        %1286 = vmax.xlane.f32.xlu0 %v1285
        %v1287 = vpop.xlane.xlu0 %1286
        %v1288 = vsub.f32 %v1272, %v1278
        %v1289 = vsub.f32 %v1273, %v1281
        %v1290 = vsub.f32 %v1274, %v1284
        %v1291 = vsub.f32 %v1275, %v1287
        %v1292 = vmul.f32 %v1288, 1.442695
        %v1293 = vpow.pop %v1292
        %v1294 = vmul.f32 %v1289, 1.442695
        %v1295 = vpow.pop %v1294
        %v1296 = vmul.f32 %v1290, 1.442695
        %v1297 = vpow.pop %v1296
        %v1298 = vmul.f32 %v1291, 1.442695
        %v1299 = vpow.pop %v1298
        %v1300 = vsel %vm966, %v1293, 0.0
        %1301 = vadd.xlane.f32.xlu0 %v1300
        %v1302 = vpop.xlane.xlu0 %1301
        %v1303 = vsel %vm966, %v1295, 0.0
        %1304 = vadd.xlane.f32.xlu0 %v1303
        %v1305 = vpop.xlane.xlu0 %1304
        %v1306 = vsel %vm966, %v1297, 0.0
        %1307 = vadd.xlane.f32.xlu0 %v1306
        %v1308 = vpop.xlane.xlu0 %1307
        %v1309 = vsel %vm966, %v1299, 0.0
        %1310 = vadd.xlane.f32.xlu0 %v1309
        %v1311 = vpop.xlane.xlu0 %1310
        %v1312 = vrcp.pop %v1302
        %v1313 = vrcp.pop %v1305
        %v1314 = vrcp.pop %v1308
        %v1315 = vrcp.pop %v1311
        %v1316 = vmul.f32 %v1302, %v1312
        %v1317 = vmul.f32 %v1305, %v1313
        %v1318 = vmul.f32 %v1308, %v1314
        %v1319 = vmul.f32 %v1311, %v1315
        %v1320 = vsub.f32 2.0, %v1316
        %v1321 = vsub.f32 2.0, %v1317
        %v1322 = vsub.f32 2.0, %v1318
        %v1323 = vsub.f32 2.0, %v1319
        %v1324 = vmul.f32 %v1312, %v1320
        %v1325 = vmul.f32 %v1313, %v1321
        %v1326 = vmul.f32 %v1314, %v1322
        %v1327 = vmul.f32 %v1315, %v1323
        %v1328 = vmul.f32 %v1293, %v1324
        %v1329 = vmul.f32 %v1295, %v1325
        %v1330 = vmul.f32 %v1297, %v1326
        %v1331 = vmul.f32 %v1299, %v1327
        %1332 = vrot.lane.b32.xlu0 %v750, 112
        %v1333 = vpop.permute.xlu0 %1332
        %v1336 = vsel %vm966, %v1328, 0
        %1338 = vmatprep.subr.mxu0 0.0
        %1339 = vmatpush1.msra.mxu0 0.0
        %1340 = vmatprep.subr.mxu0 0.0
        %1341 = vmatpush1.msra.mxu0 0.0
        %1342 = vmatprep.subr.mxu0 0.0
        %1343 = vmatpush1.msra.mxu0 0.0
        %1344 = vmatprep.subr.mxu0 0.0
        %1345 = vmatpush1.msra.mxu0 0.0
        %1346 = vmatprep.subr.mxu0 0.0
        %1347 = vmatpush1.msra.mxu0 0.0
        %1348 = vmatprep.subr.mxu0 0.0
        %1349 = vmatpush1.msra.mxu0 0.0
        %1350 = vmatprep.subr.mxu0 0.0
        %1351 = vmatpush1.msra.mxu0 0.0
        %1352 = vmatprep.subr.mxu0 0.0
        %1353 = vmatpush1.msra.mxu0 0.0
        %1354 = vmatprep.subr.mxu0 0.0
        %1355 = vmatpush1.msra.mxu0 0.0
        %1356 = vmatprep.subr.mxu0 0.0
        %1357 = vmatpush1.msra.mxu0 0.0
        %1358 = vmatprep.subr.mxu0 0.0
        %1359 = vmatpush1.msra.mxu0 0.0
        %1360 = vmatprep.subr.mxu0 0.0
        %1361 = vmatpush1.msra.mxu0 0.0
        %1362 = vmatprep.subr.mxu0 0.0
        %1363 = vmatpush1.msra.mxu0 0.0
        %1364 = vmatprep.subr.mxu0 0.0
        %1365 = vmatpush1.msra.mxu0 0.0
        %1366 = vmatprep.subr.mxu0 0.0
        %1367 = vmatpush1.msra.mxu0 0.0
        %1368 = vmatprep.subr.mxu0 0.0
        %1369 = vmatpush1.msra.mxu0 %v1333
        %1370 = vmatprep.subr.mxu0 0.0
        %1371 = vmatpush2.msra.mxu0 0.0
        %1372 = vmatprep.subr.mxu0 0.0
        %1373 = vmatpush2.msra.mxu0 0.0
        %1374 = vmatprep.subr.mxu0 0.0
        %1375 = vmatpush2.msra.mxu0 0.0
        %1376 = vmatprep.subr.mxu0 0.0
        %1377 = vmatpush2.msra.mxu0 0.0
        %1378 = vmatprep.subr.mxu0 0.0
        %1379 = vmatpush2.msra.mxu0 0.0
        %1380 = vmatprep.subr.mxu0 0.0
        %1381 = vmatpush2.msra.mxu0 0.0
        %1382 = vmatprep.subr.mxu0 0.0
        %1383 = vmatpush2.msra.mxu0 0.0
        %1384 = vmatprep.subr.mxu0 0.0
        %1385 = vmatpush2.msra.mxu0 0.0
        %1386 = vmatprep.subr.mxu0 0.0
        %1387 = vmatpush2.msra.mxu0 0.0
        %1388 = vmatprep.subr.mxu0 0.0
        %1389 = vmatpush2.msra.mxu0 0.0
        %1390 = vmatprep.subr.mxu0 0.0
        %1391 = vmatpush2.msra.mxu0 0.0
        %1392 = vmatprep.subr.mxu0 0.0
        %1393 = vmatpush2.msra.mxu0 0.0
        %1394 = vmatprep.subr.mxu0 0.0
        %1395 = vmatpush2.msra.mxu0 0.0
        %1396 = vmatprep.subr.mxu0 0.0
        %1397 = vmatpush2.msra.mxu0 0.0
        %1398 = vmatprep.subr.mxu0 0.0
        %1399 = vmatpush2.msra.mxu0 0.0
        %1400 = vmatprep.subr.mxu0 0.0
        %1401 = vmatpush2.msra.mxu0 0.0
        %1402 = vmatprep.mubr.f32.mxu0 0.0
        %1403 = vmatmul.mubr.f32.gmra.mxu0 %v1336
        %v1404 = vpop.f32.mrf.mxu0
        %v1405 = vadd.f32 0.0, %v1404
        %v1406 = vpop.f32.mrf.mxu0
        %1407 = vdwg.mxu0
        %1408 = vrot.lane.b32.xlu0 %v820, 112
        %v1409 = vpop.permute.xlu0 %1408
        %v1412 = vsel %vm966, %v1329, 0
        %1414 = vmatprep.subr.mxu0 0.0
        %1415 = vmatpush1.msra.mxu0 0.0
        %1416 = vmatprep.subr.mxu0 0.0
        %1417 = vmatpush1.msra.mxu0 0.0
        %1418 = vmatprep.subr.mxu0 0.0
        %1419 = vmatpush1.msra.mxu0 0.0
        %1420 = vmatprep.subr.mxu0 0.0
        %1421 = vmatpush1.msra.mxu0 0.0
        %1422 = vmatprep.subr.mxu0 0.0
        %1423 = vmatpush1.msra.mxu0 0.0
        %1424 = vmatprep.subr.mxu0 0.0
        %1425 = vmatpush1.msra.mxu0 0.0
        %1426 = vmatprep.subr.mxu0 0.0
        %1427 = vmatpush1.msra.mxu0 0.0
        %1428 = vmatprep.subr.mxu0 0.0
        %1429 = vmatpush1.msra.mxu0 0.0
        %1430 = vmatprep.subr.mxu0 0.0
        %1431 = vmatpush1.msra.mxu0 0.0
        %1432 = vmatprep.subr.mxu0 0.0
        %1433 = vmatpush1.msra.mxu0 0.0
        %1434 = vmatprep.subr.mxu0 0.0
        %1435 = vmatpush1.msra.mxu0 0.0
        %1436 = vmatprep.subr.mxu0 0.0
        %1437 = vmatpush1.msra.mxu0 0.0
        %1438 = vmatprep.subr.mxu0 0.0
        %1439 = vmatpush1.msra.mxu0 0.0
        %1440 = vmatprep.subr.mxu0 0.0
        %1441 = vmatpush1.msra.mxu0 0.0
        %1442 = vmatprep.subr.mxu0 0.0
        %1443 = vmatpush1.msra.mxu0 0.0
        %1444 = vmatprep.subr.mxu0 0.0
        %1445 = vmatpush1.msra.mxu0 %v1409
        %1446 = vmatprep.subr.mxu0 0.0
        %1447 = vmatpush2.msra.mxu0 0.0
        %1448 = vmatprep.subr.mxu0 0.0
        %1449 = vmatpush2.msra.mxu0 0.0
        %1450 = vmatprep.subr.mxu0 0.0
        %1451 = vmatpush2.msra.mxu0 0.0
        %1452 = vmatprep.subr.mxu0 0.0
        %1453 = vmatpush2.msra.mxu0 0.0
        %1454 = vmatprep.subr.mxu0 0.0
        %1455 = vmatpush2.msra.mxu0 0.0
        %1456 = vmatprep.subr.mxu0 0.0
        %1457 = vmatpush2.msra.mxu0 0.0
        %1458 = vmatprep.subr.mxu0 0.0
        %1459 = vmatpush2.msra.mxu0 0.0
        %1460 = vmatprep.subr.mxu0 0.0
        %1461 = vmatpush2.msra.mxu0 0.0
        %1462 = vmatprep.subr.mxu0 0.0
        %1463 = vmatpush2.msra.mxu0 0.0
        %1464 = vmatprep.subr.mxu0 0.0
        %1465 = vmatpush2.msra.mxu0 0.0
        %1466 = vmatprep.subr.mxu0 0.0
        %1467 = vmatpush2.msra.mxu0 0.0
        %1468 = vmatprep.subr.mxu0 0.0
        %1469 = vmatpush2.msra.mxu0 0.0
        %1470 = vmatprep.subr.mxu0 0.0
        %1471 = vmatpush2.msra.mxu0 0.0
        %1472 = vmatprep.subr.mxu0 0.0
        %1473 = vmatpush2.msra.mxu0 0.0
        %1474 = vmatprep.subr.mxu0 0.0
        %1475 = vmatpush2.msra.mxu0 0.0
        %1476 = vmatprep.subr.mxu0 0.0
        %1477 = vmatpush2.msra.mxu0 0.0
        %1478 = vmatprep.mubr.f32.mxu0 0.0
        %1479 = vmatmul.mubr.f32.gmra.mxu0 %v1412
        %v1480 = vpop.f32.mrf.mxu0
        %v1481 = vadd.f32 0.0, %v1480
        %v1482 = vpop.f32.mrf.mxu0
        %1483 = vdwg.mxu0
        %1484 = vrot.lane.b32.xlu0 %v890, 112
        %v1485 = vpop.permute.xlu0 %1484
        %v1488 = vsel %vm966, %v1330, 0
        %1490 = vmatprep.subr.mxu0 0.0
        %1491 = vmatpush1.msra.mxu0 0.0
        %1492 = vmatprep.subr.mxu0 0.0
        %1493 = vmatpush1.msra.mxu0 0.0
        %1494 = vmatprep.subr.mxu0 0.0
        %1495 = vmatpush1.msra.mxu0 0.0
        %1496 = vmatprep.subr.mxu0 0.0
        %1497 = vmatpush1.msra.mxu0 0.0
        %1498 = vmatprep.subr.mxu0 0.0
        %1499 = vmatpush1.msra.mxu0 0.0
        %1500 = vmatprep.subr.mxu0 0.0
        %1501 = vmatpush1.msra.mxu0 0.0
        %1502 = vmatprep.subr.mxu0 0.0
        %1503 = vmatpush1.msra.mxu0 0.0
        %1504 = vmatprep.subr.mxu0 0.0
        %1505 = vmatpush1.msra.mxu0 0.0
        %1506 = vmatprep.subr.mxu0 0.0
        %1507 = vmatpush1.msra.mxu0 0.0
        %1508 = vmatprep.subr.mxu0 0.0
        %1509 = vmatpush1.msra.mxu0 0.0
        %1510 = vmatprep.subr.mxu0 0.0
        %1511 = vmatpush1.msra.mxu0 0.0
        %1512 = vmatprep.subr.mxu0 0.0
        %1513 = vmatpush1.msra.mxu0 0.0
        %1514 = vmatprep.subr.mxu0 0.0
        %1515 = vmatpush1.msra.mxu0 0.0
        %1516 = vmatprep.subr.mxu0 0.0
        %1517 = vmatpush1.msra.mxu0 0.0
        %1518 = vmatprep.subr.mxu0 0.0
        %1519 = vmatpush1.msra.mxu0 0.0
        %1520 = vmatprep.subr.mxu0 0.0
        %1521 = vmatpush1.msra.mxu0 %v1485
        %1522 = vmatprep.subr.mxu0 0.0
        %1523 = vmatpush2.msra.mxu0 0.0
        %1524 = vmatprep.subr.mxu0 0.0
        %1525 = vmatpush2.msra.mxu0 0.0
        %1526 = vmatprep.subr.mxu0 0.0
        %1527 = vmatpush2.msra.mxu0 0.0
        %1528 = vmatprep.subr.mxu0 0.0
        %1529 = vmatpush2.msra.mxu0 0.0
        %1530 = vmatprep.subr.mxu0 0.0
        %1531 = vmatpush2.msra.mxu0 0.0
        %1532 = vmatprep.subr.mxu0 0.0
        %1533 = vmatpush2.msra.mxu0 0.0
        %1534 = vmatprep.subr.mxu0 0.0
        %1535 = vmatpush2.msra.mxu0 0.0
        %1536 = vmatprep.subr.mxu0 0.0
        %1537 = vmatpush2.msra.mxu0 0.0
        %1538 = vmatprep.subr.mxu0 0.0
        %1539 = vmatpush2.msra.mxu0 0.0
        %1540 = vmatprep.subr.mxu0 0.0
        %1541 = vmatpush2.msra.mxu0 0.0
        %1542 = vmatprep.subr.mxu0 0.0
        %1543 = vmatpush2.msra.mxu0 0.0
        %1544 = vmatprep.subr.mxu0 0.0
        %1545 = vmatpush2.msra.mxu0 0.0
        %1546 = vmatprep.subr.mxu0 0.0
        %1547 = vmatpush2.msra.mxu0 0.0
        %1548 = vmatprep.subr.mxu0 0.0
        %1549 = vmatpush2.msra.mxu0 0.0
        %1550 = vmatprep.subr.mxu0 0.0
        %1551 = vmatpush2.msra.mxu0 0.0
        %1552 = vmatprep.subr.mxu0 0.0
        %1553 = vmatpush2.msra.mxu0 0.0
        %1554 = vmatprep.mubr.f32.mxu0 0.0
        %1555 = vmatmul.mubr.f32.gmra.mxu0 %v1488
        %v1556 = vpop.f32.mrf.mxu0
        %v1557 = vadd.f32 0.0, %v1556
        %v1558 = vpop.f32.mrf.mxu0
        %1559 = vdwg.mxu0
        %1560 = vrot.lane.b32.xlu0 %v960, 112
        %v1561 = vpop.permute.xlu0 %1560
        %v1564 = vsel %vm966, %v1331, 0
        %1566 = vmatprep.subr.mxu0 0.0
        %1567 = vmatpush1.msra.mxu0 0.0
        %1568 = vmatprep.subr.mxu0 0.0
        %1569 = vmatpush1.msra.mxu0 0.0
        %1570 = vmatprep.subr.mxu0 0.0
        %1571 = vmatpush1.msra.mxu0 0.0
        %1572 = vmatprep.subr.mxu0 0.0
        %1573 = vmatpush1.msra.mxu0 0.0
        %1574 = vmatprep.subr.mxu0 0.0
        %1575 = vmatpush1.msra.mxu0 0.0
        %1576 = vmatprep.subr.mxu0 0.0
        %1577 = vmatpush1.msra.mxu0 0.0
        %1578 = vmatprep.subr.mxu0 0.0
        %1579 = vmatpush1.msra.mxu0 0.0
        %1580 = vmatprep.subr.mxu0 0.0
        %1581 = vmatpush1.msra.mxu0 0.0
        %1582 = vmatprep.subr.mxu0 0.0
        %1583 = vmatpush1.msra.mxu0 0.0
        %1584 = vmatprep.subr.mxu0 0.0
        %1585 = vmatpush1.msra.mxu0 0.0
        %1586 = vmatprep.subr.mxu0 0.0
        %1587 = vmatpush1.msra.mxu0 0.0
        %1588 = vmatprep.subr.mxu0 0.0
        %1589 = vmatpush1.msra.mxu0 0.0
        %1590 = vmatprep.subr.mxu0 0.0
        %1591 = vmatpush1.msra.mxu0 0.0
        %1592 = vmatprep.subr.mxu0 0.0
        %1593 = vmatpush1.msra.mxu0 0.0
        %1594 = vmatprep.subr.mxu0 0.0
        %1595 = vmatpush1.msra.mxu0 0.0
        %1596 = vmatprep.subr.mxu0 0.0
        %1597 = vmatpush1.msra.mxu0 %v1561
        %1598 = vmatprep.subr.mxu0 0.0
        %1599 = vmatpush2.msra.mxu0 0.0
        %1600 = vmatprep.subr.mxu0 0.0
        %1601 = vmatpush2.msra.mxu0 0.0
        %1602 = vmatprep.subr.mxu0 0.0
        %1603 = vmatpush2.msra.mxu0 0.0
        %1604 = vmatprep.subr.mxu0 0.0
        %1605 = vmatpush2.msra.mxu0 0.0
        %1606 = vmatprep.subr.mxu0 0.0
        %1607 = vmatpush2.msra.mxu0 0.0
        %1608 = vmatprep.subr.mxu0 0.0
        %1609 = vmatpush2.msra.mxu0 0.0
        %1610 = vmatprep.subr.mxu0 0.0
        %1611 = vmatpush2.msra.mxu0 0.0
        %1612 = vmatprep.subr.mxu0 0.0
        %1613 = vmatpush2.msra.mxu0 0.0
        %1614 = vmatprep.subr.mxu0 0.0
        %1615 = vmatpush2.msra.mxu0 0.0
        %1616 = vmatprep.subr.mxu0 0.0
        %1617 = vmatpush2.msra.mxu0 0.0
        %1618 = vmatprep.subr.mxu0 0.0
        %1619 = vmatpush2.msra.mxu0 0.0
        %1620 = vmatprep.subr.mxu0 0.0
        %1621 = vmatpush2.msra.mxu0 0.0
        %1622 = vmatprep.subr.mxu0 0.0
        %1623 = vmatpush2.msra.mxu0 0.0
        %1624 = vmatprep.subr.mxu0 0.0
        %1625 = vmatpush2.msra.mxu0 0.0
        %1626 = vmatprep.subr.mxu0 0.0
        %1627 = vmatpush2.msra.mxu0 0.0
        %1628 = vmatprep.subr.mxu0 0.0
        %1629 = vmatpush2.msra.mxu0 0.0
        %1630 = vmatprep.mubr.f32.mxu0 0.0
        %1631 = vmatmul.mubr.f32.gmra.mxu0 %v1564
        %v1632 = vpop.f32.mrf.mxu0
        %v1633 = vadd.f32 0.0, %v1632
        %v1634 = vpop.f32.mrf.mxu0
        %1635 = vdwg.mxu0
        %v1636 = vld [vmem:[%s5] sm:$0xff]
        %v1637 = vld [vmem:[%s5 + $0x8] sm:$0xff]
        %v1638 = vld [vmem:[%s5 + $0x10] sm:$0xff]
        %v1639 = vld [vmem:[%s5 + $0x18] sm:$0xff]
        %v1641 = vsel %vm966, %v1405, 0
        %1643 = vmatprep.subr.mxu0 0.0
        %1644 = vmatpush1.msra.mxu0 0.0
        %1645 = vmatprep.subr.mxu0 0.0
        %1646 = vmatpush1.msra.mxu0 0.0
        %1647 = vmatprep.subr.mxu0 0.0
        %1648 = vmatpush1.msra.mxu0 0.0
        %1649 = vmatprep.subr.mxu0 0.0
        %1650 = vmatpush1.msra.mxu0 0.0
        %1651 = vmatprep.subr.mxu0 0.0
        %1652 = vmatpush1.msra.mxu0 0.0
        %1653 = vmatprep.subr.mxu0 0.0
        %1654 = vmatpush1.msra.mxu0 0.0
        %1655 = vmatprep.subr.mxu0 0.0
        %1656 = vmatpush1.msra.mxu0 0.0
        %1657 = vmatprep.subr.mxu0 0.0
        %1658 = vmatpush1.msra.mxu0 0.0
        %1659 = vmatprep.subr.mxu0 0.0
        %1660 = vmatpush1.msra.mxu0 0.0
        %1661 = vmatprep.subr.mxu0 0.0
        %1662 = vmatpush1.msra.mxu0 0.0
        %1663 = vmatprep.subr.mxu0 0.0
        %1664 = vmatpush1.msra.mxu0 0.0
        %1665 = vmatprep.subr.mxu0 0.0
        %1666 = vmatpush1.msra.mxu0 0.0
        %1667 = vmatprep.subr.mxu0 0.0
        %1668 = vmatpush1.msra.mxu0 0.0
        %1669 = vmatprep.subr.mxu0 0.0
        %1670 = vmatpush1.msra.mxu0 0.0
        %1671 = vmatprep.subr.mxu0 0.0
        %1672 = vmatpush1.msra.mxu0 0.0
        %1673 = vmatprep.subr.mxu0 0.0
        %1674 = vmatpush1.msra.mxu0 %v1636
        %1675 = vmatprep.subr.mxu0 0.0
        %1676 = vmatpush2.msra.mxu0 0.0
        %1677 = vmatprep.subr.mxu0 0.0
        %1678 = vmatpush2.msra.mxu0 0.0
        %1679 = vmatprep.subr.mxu0 0.0
        %1680 = vmatpush2.msra.mxu0 0.0
        %1681 = vmatprep.subr.mxu0 0.0
        %1682 = vmatpush2.msra.mxu0 0.0
        %1683 = vmatprep.subr.mxu0 0.0
        %1684 = vmatpush2.msra.mxu0 0.0
        %1685 = vmatprep.subr.mxu0 0.0
        %1686 = vmatpush2.msra.mxu0 0.0
        %1687 = vmatprep.subr.mxu0 0.0
        %1688 = vmatpush2.msra.mxu0 0.0
        %1689 = vmatprep.subr.mxu0 0.0
        %1690 = vmatpush2.msra.mxu0 0.0
        %1691 = vmatprep.subr.mxu0 0.0
        %1692 = vmatpush2.msra.mxu0 0.0
        %1693 = vmatprep.subr.mxu0 0.0
        %1694 = vmatpush2.msra.mxu0 0.0
        %1695 = vmatprep.subr.mxu0 0.0
        %1696 = vmatpush2.msra.mxu0 0.0
        %1697 = vmatprep.subr.mxu0 0.0
        %1698 = vmatpush2.msra.mxu0 0.0
        %1699 = vmatprep.subr.mxu0 0.0
        %1700 = vmatpush2.msra.mxu0 0.0
        %1701 = vmatprep.subr.mxu0 0.0
        %1702 = vmatpush2.msra.mxu0 0.0
        %1703 = vmatprep.subr.mxu0 0.0
        %1704 = vmatpush2.msra.mxu0 0.0
        %1705 = vmatprep.subr.mxu0 0.0
        %1706 = vmatpush2.msra.mxu0 0.0
        %1707 = vmatprep.mubr.f32.mxu0 0.0
        %1708 = vmatmul.mubr.f32.gmra.mxu0 %v1641
        %v1709 = vpop.f32.mrf.mxu0
        %v1710 = vadd.f32 0.0, %v1709
        %v1711 = vpop.f32.mrf.mxu0
        %1712 = vdwg.mxu0
        %v1714 = vsel %vm966, %v1481, 0
        %1716 = vmatprep.subr.mxu0 0.0
        %1717 = vmatpush1.msra.mxu0 0.0
        %1718 = vmatprep.subr.mxu0 0.0
        %1719 = vmatpush1.msra.mxu0 0.0
        %1720 = vmatprep.subr.mxu0 0.0
        %1721 = vmatpush1.msra.mxu0 0.0
        %1722 = vmatprep.subr.mxu0 0.0
        %1723 = vmatpush1.msra.mxu0 0.0
        %1724 = vmatprep.subr.mxu0 0.0
        %1725 = vmatpush1.msra.mxu0 0.0
        %1726 = vmatprep.subr.mxu0 0.0
        %1727 = vmatpush1.msra.mxu0 0.0
        %1728 = vmatprep.subr.mxu0 0.0
        %1729 = vmatpush1.msra.mxu0 0.0
        %1730 = vmatprep.subr.mxu0 0.0
        %1731 = vmatpush1.msra.mxu0 0.0
        %1732 = vmatprep.subr.mxu0 0.0
        %1733 = vmatpush1.msra.mxu0 0.0
        %1734 = vmatprep.subr.mxu0 0.0
        %1735 = vmatpush1.msra.mxu0 0.0
        %1736 = vmatprep.subr.mxu0 0.0
        %1737 = vmatpush1.msra.mxu0 0.0
        %1738 = vmatprep.subr.mxu0 0.0
        %1739 = vmatpush1.msra.mxu0 0.0
        %1740 = vmatprep.subr.mxu0 0.0
        %1741 = vmatpush1.msra.mxu0 0.0
        %1742 = vmatprep.subr.mxu0 0.0
        %1743 = vmatpush1.msra.mxu0 0.0
        %1744 = vmatprep.subr.mxu0 0.0
        %1745 = vmatpush1.msra.mxu0 0.0
        %1746 = vmatprep.subr.mxu0 0.0
        %1747 = vmatpush1.msra.mxu0 %v1637
        %1748 = vmatprep.subr.mxu0 0.0
        %1749 = vmatpush2.msra.mxu0 0.0
        %1750 = vmatprep.subr.mxu0 0.0
        %1751 = vmatpush2.msra.mxu0 0.0
        %1752 = vmatprep.subr.mxu0 0.0
        %1753 = vmatpush2.msra.mxu0 0.0
        %1754 = vmatprep.subr.mxu0 0.0
        %1755 = vmatpush2.msra.mxu0 0.0
        %1756 = vmatprep.subr.mxu0 0.0
        %1757 = vmatpush2.msra.mxu0 0.0
        %1758 = vmatprep.subr.mxu0 0.0
        %1759 = vmatpush2.msra.mxu0 0.0
        %1760 = vmatprep.subr.mxu0 0.0
        %1761 = vmatpush2.msra.mxu0 0.0
        %1762 = vmatprep.subr.mxu0 0.0
        %1763 = vmatpush2.msra.mxu0 0.0
        %1764 = vmatprep.subr.mxu0 0.0
        %1765 = vmatpush2.msra.mxu0 0.0
        %1766 = vmatprep.subr.mxu0 0.0
        %1767 = vmatpush2.msra.mxu0 0.0
        %1768 = vmatprep.subr.mxu0 0.0
        %1769 = vmatpush2.msra.mxu0 0.0
        %1770 = vmatprep.subr.mxu0 0.0
        %1771 = vmatpush2.msra.mxu0 0.0
        %1772 = vmatprep.subr.mxu0 0.0
        %1773 = vmatpush2.msra.mxu0 0.0
        %1774 = vmatprep.subr.mxu0 0.0
        %1775 = vmatpush2.msra.mxu0 0.0
        %1776 = vmatprep.subr.mxu0 0.0
        %1777 = vmatpush2.msra.mxu0 0.0
        %1778 = vmatprep.subr.mxu0 0.0
        %1779 = vmatpush2.msra.mxu0 0.0
        %1780 = vmatprep.mubr.f32.mxu0 0.0
        %1781 = vmatmul.mubr.f32.gmra.mxu0 %v1714
        %v1782 = vpop.f32.mrf.mxu0
        %v1783 = vadd.f32 0.0, %v1782
        %v1784 = vpop.f32.mrf.mxu0
        %1785 = vdwg.mxu0
        %v1787 = vsel %vm966, %v1557, 0
        %1789 = vmatprep.subr.mxu0 0.0
        %1790 = vmatpush1.msra.mxu0 0.0
        %1791 = vmatprep.subr.mxu0 0.0
        %1792 = vmatpush1.msra.mxu0 0.0
        %1793 = vmatprep.subr.mxu0 0.0
        %1794 = vmatpush1.msra.mxu0 0.0
        %1795 = vmatprep.subr.mxu0 0.0
        %1796 = vmatpush1.msra.mxu0 0.0
        %1797 = vmatprep.subr.mxu0 0.0
        %1798 = vmatpush1.msra.mxu0 0.0
        %1799 = vmatprep.subr.mxu0 0.0
        %1800 = vmatpush1.msra.mxu0 0.0
        %1801 = vmatprep.subr.mxu0 0.0
        %1802 = vmatpush1.msra.mxu0 0.0
        %1803 = vmatprep.subr.mxu0 0.0
        %1804 = vmatpush1.msra.mxu0 0.0
        %1805 = vmatprep.subr.mxu0 0.0
        %1806 = vmatpush1.msra.mxu0 0.0
        %1807 = vmatprep.subr.mxu0 0.0
        %1808 = vmatpush1.msra.mxu0 0.0
        %1809 = vmatprep.subr.mxu0 0.0
        %1810 = vmatpush1.msra.mxu0 0.0
        %1811 = vmatprep.subr.mxu0 0.0
        %1812 = vmatpush1.msra.mxu0 0.0
        %1813 = vmatprep.subr.mxu0 0.0
        %1814 = vmatpush1.msra.mxu0 0.0
        %1815 = vmatprep.subr.mxu0 0.0
        %1816 = vmatpush1.msra.mxu0 0.0
        %1817 = vmatprep.subr.mxu0 0.0
        %1818 = vmatpush1.msra.mxu0 0.0
        %1819 = vmatprep.subr.mxu0 0.0
        %1820 = vmatpush1.msra.mxu0 %v1638
        %1821 = vmatprep.subr.mxu0 0.0
        %1822 = vmatpush2.msra.mxu0 0.0
        %1823 = vmatprep.subr.mxu0 0.0
        %1824 = vmatpush2.msra.mxu0 0.0
        %1825 = vmatprep.subr.mxu0 0.0
        %1826 = vmatpush2.msra.mxu0 0.0
        %1827 = vmatprep.subr.mxu0 0.0
        %1828 = vmatpush2.msra.mxu0 0.0
        %1829 = vmatprep.subr.mxu0 0.0
        %1830 = vmatpush2.msra.mxu0 0.0
        %1831 = vmatprep.subr.mxu0 0.0
        %1832 = vmatpush2.msra.mxu0 0.0
        %1833 = vmatprep.subr.mxu0 0.0
        %1834 = vmatpush2.msra.mxu0 0.0
        %1835 = vmatprep.subr.mxu0 0.0
        %1836 = vmatpush2.msra.mxu0 0.0
        %1837 = vmatprep.subr.mxu0 0.0
        %1838 = vmatpush2.msra.mxu0 0.0
        %1839 = vmatprep.subr.mxu0 0.0
        %1840 = vmatpush2.msra.mxu0 0.0
        %1841 = vmatprep.subr.mxu0 0.0
        %1842 = vmatpush2.msra.mxu0 0.0
        %1843 = vmatprep.subr.mxu0 0.0
        %1844 = vmatpush2.msra.mxu0 0.0
        %1845 = vmatprep.subr.mxu0 0.0
        %1846 = vmatpush2.msra.mxu0 0.0
        %1847 = vmatprep.subr.mxu0 0.0
        %1848 = vmatpush2.msra.mxu0 0.0
        %1849 = vmatprep.subr.mxu0 0.0
        %1850 = vmatpush2.msra.mxu0 0.0
        %1851 = vmatprep.subr.mxu0 0.0
        %1852 = vmatpush2.msra.mxu0 0.0
        %1853 = vmatprep.mubr.f32.mxu0 0.0
        %1854 = vmatmul.mubr.f32.gmra.mxu0 %v1787
        %v1855 = vpop.f32.mrf.mxu0
        %v1856 = vadd.f32 0.0, %v1855
        %v1857 = vpop.f32.mrf.mxu0
        %1858 = vdwg.mxu0
        %v1860 = vsel %vm966, %v1633, 0
        %1862 = vmatprep.subr.mxu0 0.0
        %1863 = vmatpush1.msra.mxu0 0.0
        %1864 = vmatprep.subr.mxu0 0.0
        %1865 = vmatpush1.msra.mxu0 0.0
        %1866 = vmatprep.subr.mxu0 0.0
        %1867 = vmatpush1.msra.mxu0 0.0
        %1868 = vmatprep.subr.mxu0 0.0
        %1869 = vmatpush1.msra.mxu0 0.0
        %1870 = vmatprep.subr.mxu0 0.0
        %1871 = vmatpush1.msra.mxu0 0.0
        %1872 = vmatprep.subr.mxu0 0.0
        %1873 = vmatpush1.msra.mxu0 0.0
        %1874 = vmatprep.subr.mxu0 0.0
        %1875 = vmatpush1.msra.mxu0 0.0
        %1876 = vmatprep.subr.mxu0 0.0
        %1877 = vmatpush1.msra.mxu0 0.0
        %1878 = vmatprep.subr.mxu0 0.0
        %1879 = vmatpush1.msra.mxu0 0.0
        %1880 = vmatprep.subr.mxu0 0.0
        %1881 = vmatpush1.msra.mxu0 0.0
        %1882 = vmatprep.subr.mxu0 0.0
        %1883 = vmatpush1.msra.mxu0 0.0
        %1884 = vmatprep.subr.mxu0 0.0
        %1885 = vmatpush1.msra.mxu0 0.0
        %1886 = vmatprep.subr.mxu0 0.0
        %1887 = vmatpush1.msra.mxu0 0.0
        %1888 = vmatprep.subr.mxu0 0.0
        %1889 = vmatpush1.msra.mxu0 0.0
        %1890 = vmatprep.subr.mxu0 0.0
        %1891 = vmatpush1.msra.mxu0 0.0
        %1892 = vmatprep.subr.mxu0 0.0
        %1893 = vmatpush1.msra.mxu0 %v1639
        %1894 = vmatprep.subr.mxu0 0.0
        %1895 = vmatpush2.msra.mxu0 0.0
        %1896 = vmatprep.subr.mxu0 0.0
        %1897 = vmatpush2.msra.mxu0 0.0
        %1898 = vmatprep.subr.mxu0 0.0
        %1899 = vmatpush2.msra.mxu0 0.0
        %1900 = vmatprep.subr.mxu0 0.0
        %1901 = vmatpush2.msra.mxu0 0.0
        %1902 = vmatprep.subr.mxu0 0.0
        %1903 = vmatpush2.msra.mxu0 0.0
        %1904 = vmatprep.subr.mxu0 0.0
        %1905 = vmatpush2.msra.mxu0 0.0
        %1906 = vmatprep.subr.mxu0 0.0
        %1907 = vmatpush2.msra.mxu0 0.0
        %1908 = vmatprep.subr.mxu0 0.0
        %1909 = vmatpush2.msra.mxu0 0.0
        %1910 = vmatprep.subr.mxu0 0.0
        %1911 = vmatpush2.msra.mxu0 0.0
        %1912 = vmatprep.subr.mxu0 0.0
        %1913 = vmatpush2.msra.mxu0 0.0
        %1914 = vmatprep.subr.mxu0 0.0
        %1915 = vmatpush2.msra.mxu0 0.0
        %1916 = vmatprep.subr.mxu0 0.0
        %1917 = vmatpush2.msra.mxu0 0.0
        %1918 = vmatprep.subr.mxu0 0.0
        %1919 = vmatpush2.msra.mxu0 0.0
        %1920 = vmatprep.subr.mxu0 0.0
        %1921 = vmatpush2.msra.mxu0 0.0
        %1922 = vmatprep.subr.mxu0 0.0
        %1923 = vmatpush2.msra.mxu0 0.0
        %1924 = vmatprep.subr.mxu0 0.0
        %1925 = vmatpush2.msra.mxu0 0.0
        %1926 = vmatprep.mubr.f32.mxu0 0.0
        %1927 = vmatmul.mubr.f32.gmra.mxu0 %v1860
        %v1928 = vpop.f32.mrf.mxu0
        %v1929 = vadd.f32 0.0, %v1928
        %v1930 = vpop.f32.mrf.mxu0
        %1931 = vdwg.mxu0
        %v1932 = vsel %vm679, %v1710, 0.0
        %v1933 = vsel %vm679, %v1783, 0.0
        %v1934 = vadd.f32 %v1932, %v1933
        %v1935 = vsel %vm679, %v1856, 0.0
        %v1936 = vadd.f32 %v1934, %v1935
        %v1937 = vsel %vm679, %v1929, 0.0
        %v1938 = vadd.f32 %v1936, %v1937
        %v1939 = vld [vmem:[%s6] sm:$0x1]
        %v1941 = vlaneseq
        %v1942 = vshrl.u32 %v1941, 7
        %v1943 = vsub.s32 0, %v1942
        %v1944 = vrot.slane %v1939, %v1943
        %v1946 = vadd.f32 %v1938, %v1944
        %v1947 = vadd.f32 %v632, %v1946
        %v1948 = vld [vmem:[%s17] sm:$0x1]
        %v1949 = vld [vmem:[%s18] sm:$0x1]
        %v1950 = vsel %vm679, %v1947, 0.0
        %1951 = vadd.xlane.f32.xlu0 %v1950
        %v1952 = vpop.xlane.xlu0 %1951
        %v1953 = vrcp.pop 32.0
        %v1954 = vmul.f32 %v1952, %v1953
        %v1955 = vsub.f32 %v1947, %v1954
        %v1956 = vmul.f32 %v1955, %v1955
        %v1957 = vsel %vm679, %v1956, 0.0
        %1958 = vadd.xlane.f32.xlu0 %v1957
        %v1959 = vpop.xlane.xlu0 %1958
        %v1960 = vmul.f32 %v1959, %v1953
        %v1961 = vadd.f32 %v1960, 1e-05
        %v1962 = vrsqrt.pop %v1961
        %v1963 = vmul.f32 %v1955, %v1962
        %v1964 = vlaneseq
        %v1965 = vshrl.u32 %v1964, 7
        %v1966 = vsub.s32 0, %v1965
        %v1967 = vrot.slane %v1948, %v1966
        %v1968 = vmul.f32 %v1963, %v1967
        %v1969 = vlaneseq
        %v1970 = vshrl.u32 %v1969, 7
        %v1971 = vsub.s32 0, %v1970
        %v1972 = vrot.slane %v1949, %v1971
        %v1973 = vadd.f32 %v1968, %v1972
        %v1974 = vld [vmem:[%s7] sm:$0xff]
        %v1975 = vld [vmem:[%s7 + $0x8] sm:$0xff]
        %v1976 = vld [vmem:[%s7 + $0x10] sm:$0xff]
        %v1977 = vld [vmem:[%s7 + $0x18] sm:$0xff]
        %v1978 = vld [vmem:[%s7 + $0x20] sm:$0xff]
        %v1979 = vld [vmem:[%s7 + $0x28] sm:$0xff]
        %v1980 = vld [vmem:[%s7 + $0x30] sm:$0xff]
        %v1981 = vld [vmem:[%s7 + $0x38] sm:$0xff]
        %v1982 = vld [vmem:[%s7 + $0x40] sm:$0xff]
        %v1983 = vld [vmem:[%s7 + $0x48] sm:$0xff]
        %v1984 = vld [vmem:[%s7 + $0x50] sm:$0xff]
        %v1985 = vld [vmem:[%s7 + $0x58] sm:$0xff]
        %v1986 = vld [vmem:[%s7 + $0x60] sm:$0xff]
        %v1987 = vld [vmem:[%s7 + $0x68] sm:$0xff]
        %v1988 = vld [vmem:[%s7 + $0x70] sm:$0xff]
        %v1989 = vld [vmem:[%s7 + $0x78] sm:$0xff]
        %v1990 = vld [vmem:[%s8] sm:$0x1]
        %v1991 = vld [vmem:[%s8 + $0x1] sm:$0x1]
        %v1992 = vld [vmem:[%s8 + $0x2] sm:$0x1]
        %v1993 = vld [vmem:[%s8 + $0x3] sm:$0x1]
        %v1998 = vlaneseq
        %v1999 = vshrl.u32 %v1998, 7
        %v2000 = vsub.s32 0, %v1999
        %v2001 = vrot.slane %v1990, %v2000
        %v2002 = vlaneseq
        %v2003 = vshrl.u32 %v2002, 7
        %v2004 = vsub.s32 0, %v2003
        %v2005 = vrot.slane %v1991, %v2004
        %v2006 = vlaneseq
        %v2007 = vshrl.u32 %v2006, 7
        %v2008 = vsub.s32 0, %v2007
        %v2009 = vrot.slane %v1992, %v2008
        %v2010 = vlaneseq
        %v2011 = vshrl.u32 %v2010, 7
        %v2012 = vsub.s32 0, %v2011
        %v2013 = vrot.slane %v1993, %v2012
        %v2019 = vsel %vm679, %v1973, 0
        %2021 = vmatprep.subr.mxu0 0.0
        %2022 = vmatpush1.msra.mxu0 0.0
        %2023 = vmatprep.subr.mxu0 0.0
        %2024 = vmatpush1.msra.mxu0 0.0
        %2025 = vmatprep.subr.mxu0 0.0
        %2026 = vmatpush1.msra.mxu0 0.0
        %2027 = vmatprep.subr.mxu0 0.0
        %2028 = vmatpush1.msra.mxu0 0.0
        %2029 = vmatprep.subr.mxu0 0.0
        %2030 = vmatpush1.msra.mxu0 0.0
        %2031 = vmatprep.subr.mxu0 0.0
        %2032 = vmatpush1.msra.mxu0 0.0
        %2033 = vmatprep.subr.mxu0 0.0
        %2034 = vmatpush1.msra.mxu0 0.0
        %2035 = vmatprep.subr.mxu0 0.0
        %2036 = vmatpush1.msra.mxu0 0.0
        %2037 = vmatprep.subr.mxu0 0.0
        %2038 = vmatpush1.msra.mxu0 0.0
        %2039 = vmatprep.subr.mxu0 0.0
        %2040 = vmatpush1.msra.mxu0 0.0
        %2041 = vmatprep.subr.mxu0 0.0
        %2042 = vmatpush1.msra.mxu0 0.0
        %2043 = vmatprep.subr.mxu0 0.0
        %2044 = vmatpush1.msra.mxu0 0.0
        %2045 = vmatprep.subr.mxu0 0.0
        %2046 = vmatpush1.msra.mxu0 %v1977
        %2047 = vmatprep.subr.mxu0 0.0
        %2048 = vmatpush1.msra.mxu0 %v1976
        %2049 = vmatprep.subr.mxu0 0.0
        %2050 = vmatpush1.msra.mxu0 %v1975
        %2051 = vmatprep.subr.mxu0 0.0
        %2052 = vmatpush1.msra.mxu0 %v1974
        %2053 = vmatprep.subr.mxu0 0.0
        %2054 = vmatpush2.msra.mxu0 0.0
        %2055 = vmatprep.subr.mxu0 0.0
        %2056 = vmatpush2.msra.mxu0 0.0
        %2057 = vmatprep.subr.mxu0 0.0
        %2058 = vmatpush2.msra.mxu0 0.0
        %2059 = vmatprep.subr.mxu0 0.0
        %2060 = vmatpush2.msra.mxu0 0.0
        %2061 = vmatprep.subr.mxu0 0.0
        %2062 = vmatpush2.msra.mxu0 0.0
        %2063 = vmatprep.subr.mxu0 0.0
        %2064 = vmatpush2.msra.mxu0 0.0
        %2065 = vmatprep.subr.mxu0 0.0
        %2066 = vmatpush2.msra.mxu0 0.0
        %2067 = vmatprep.subr.mxu0 0.0
        %2068 = vmatpush2.msra.mxu0 0.0
        %2069 = vmatprep.subr.mxu0 0.0
        %2070 = vmatpush2.msra.mxu0 0.0
        %2071 = vmatprep.subr.mxu0 0.0
        %2072 = vmatpush2.msra.mxu0 0.0
        %2073 = vmatprep.subr.mxu0 0.0
        %2074 = vmatpush2.msra.mxu0 0.0
        %2075 = vmatprep.subr.mxu0 0.0
        %2076 = vmatpush2.msra.mxu0 0.0
        %2077 = vmatprep.subr.mxu0 0.0
        %2078 = vmatpush2.msra.mxu0 0.0
        %2079 = vmatprep.subr.mxu0 0.0
        %2080 = vmatpush2.msra.mxu0 0.0
        %2081 = vmatprep.subr.mxu0 0.0
        %2082 = vmatpush2.msra.mxu0 0.0
        %2083 = vmatprep.subr.mxu0 0.0
        %2084 = vmatpush2.msra.mxu0 0.0
        %2085 = vmatprep.mubr.f32.mxu0 0.0
        %2086 = vmatmul.mubr.f32.gmra.mxu0 %v2019
        %v2087 = vpop.f32.mrf.mxu0
        %v2088 = vadd.f32 %v2001, %v2087
        %v2089 = vpop.f32.mrf.mxu0
        %2090 = vdwg.mxu0
        %2091 = vmatprep.subr.mxu0 0.0
        %2092 = vmatpush1.msra.mxu0 0.0
        %2093 = vmatprep.subr.mxu0 0.0
        %2094 = vmatpush1.msra.mxu0 0.0
        %2095 = vmatprep.subr.mxu0 0.0
        %2096 = vmatpush1.msra.mxu0 0.0
        %2097 = vmatprep.subr.mxu0 0.0
        %2098 = vmatpush1.msra.mxu0 0.0
        %2099 = vmatprep.subr.mxu0 0.0
        %2100 = vmatpush1.msra.mxu0 0.0
        %2101 = vmatprep.subr.mxu0 0.0
        %2102 = vmatpush1.msra.mxu0 0.0
        %2103 = vmatprep.subr.mxu0 0.0
        %2104 = vmatpush1.msra.mxu0 0.0
        %2105 = vmatprep.subr.mxu0 0.0
        %2106 = vmatpush1.msra.mxu0 0.0
        %2107 = vmatprep.subr.mxu0 0.0
        %2108 = vmatpush1.msra.mxu0 0.0
        %2109 = vmatprep.subr.mxu0 0.0
        %2110 = vmatpush1.msra.mxu0 0.0
        %2111 = vmatprep.subr.mxu0 0.0
        %2112 = vmatpush1.msra.mxu0 0.0
        %2113 = vmatprep.subr.mxu0 0.0
        %2114 = vmatpush1.msra.mxu0 0.0
        %2115 = vmatprep.subr.mxu0 0.0
        %2116 = vmatpush1.msra.mxu0 %v1981
        %2117 = vmatprep.subr.mxu0 0.0
        %2118 = vmatpush1.msra.mxu0 %v1980
        %2119 = vmatprep.subr.mxu0 0.0
        %2120 = vmatpush1.msra.mxu0 %v1979
        %2121 = vmatprep.subr.mxu0 0.0
        %2122 = vmatpush1.msra.mxu0 %v1978
        %2123 = vmatprep.subr.mxu0 0.0
        %2124 = vmatpush2.msra.mxu0 0.0
        %2125 = vmatprep.subr.mxu0 0.0
        %2126 = vmatpush2.msra.mxu0 0.0
        %2127 = vmatprep.subr.mxu0 0.0
        %2128 = vmatpush2.msra.mxu0 0.0
        %2129 = vmatprep.subr.mxu0 0.0
        %2130 = vmatpush2.msra.mxu0 0.0
        %2131 = vmatprep.subr.mxu0 0.0
        %2132 = vmatpush2.msra.mxu0 0.0
        %2133 = vmatprep.subr.mxu0 0.0
        %2134 = vmatpush2.msra.mxu0 0.0
        %2135 = vmatprep.subr.mxu0 0.0
        %2136 = vmatpush2.msra.mxu0 0.0
        %2137 = vmatprep.subr.mxu0 0.0
        %2138 = vmatpush2.msra.mxu0 0.0
        %2139 = vmatprep.subr.mxu0 0.0
        %2140 = vmatpush2.msra.mxu0 0.0
        %2141 = vmatprep.subr.mxu0 0.0
        %2142 = vmatpush2.msra.mxu0 0.0
        %2143 = vmatprep.subr.mxu0 0.0
        %2144 = vmatpush2.msra.mxu0 0.0
        %2145 = vmatprep.subr.mxu0 0.0
        %2146 = vmatpush2.msra.mxu0 0.0
        %2147 = vmatprep.subr.mxu0 0.0
        %2148 = vmatpush2.msra.mxu0 0.0
        %2149 = vmatprep.subr.mxu0 0.0
        %2150 = vmatpush2.msra.mxu0 0.0
        %2151 = vmatprep.subr.mxu0 0.0
        %2152 = vmatpush2.msra.mxu0 0.0
        %2153 = vmatprep.subr.mxu0 0.0
        %2154 = vmatpush2.msra.mxu0 0.0
        %2155 = vmatprep.mubr.f32.mxu0 0.0
        %2156 = vmatmul.mubr.f32.gmra.mxu0 %v2019
        %v2157 = vpop.f32.mrf.mxu0
        %v2158 = vadd.f32 %v2005, %v2157
        %v2159 = vpop.f32.mrf.mxu0
        %2160 = vdwg.mxu0
        %2161 = vmatprep.subr.mxu0 0.0
        %2162 = vmatpush1.msra.mxu0 0.0
        %2163 = vmatprep.subr.mxu0 0.0
        %2164 = vmatpush1.msra.mxu0 0.0
        %2165 = vmatprep.subr.mxu0 0.0
        %2166 = vmatpush1.msra.mxu0 0.0
        %2167 = vmatprep.subr.mxu0 0.0
        %2168 = vmatpush1.msra.mxu0 0.0
        %2169 = vmatprep.subr.mxu0 0.0
        %2170 = vmatpush1.msra.mxu0 0.0
        %2171 = vmatprep.subr.mxu0 0.0
        %2172 = vmatpush1.msra.mxu0 0.0
        %2173 = vmatprep.subr.mxu0 0.0
        %2174 = vmatpush1.msra.mxu0 0.0
        %2175 = vmatprep.subr.mxu0 0.0
        %2176 = vmatpush1.msra.mxu0 0.0
        %2177 = vmatprep.subr.mxu0 0.0
        %2178 = vmatpush1.msra.mxu0 0.0
        %2179 = vmatprep.subr.mxu0 0.0
        %2180 = vmatpush1.msra.mxu0 0.0
        %2181 = vmatprep.subr.mxu0 0.0
        %2182 = vmatpush1.msra.mxu0 0.0
        %2183 = vmatprep.subr.mxu0 0.0
        %2184 = vmatpush1.msra.mxu0 0.0
        %2185 = vmatprep.subr.mxu0 0.0
        %2186 = vmatpush1.msra.mxu0 %v1985
        %2187 = vmatprep.subr.mxu0 0.0
        %2188 = vmatpush1.msra.mxu0 %v1984
        %2189 = vmatprep.subr.mxu0 0.0
        %2190 = vmatpush1.msra.mxu0 %v1983
        %2191 = vmatprep.subr.mxu0 0.0
        %2192 = vmatpush1.msra.mxu0 %v1982
        %2193 = vmatprep.subr.mxu0 0.0
        %2194 = vmatpush2.msra.mxu0 0.0
        %2195 = vmatprep.subr.mxu0 0.0
        %2196 = vmatpush2.msra.mxu0 0.0
        %2197 = vmatprep.subr.mxu0 0.0
        %2198 = vmatpush2.msra.mxu0 0.0
        %2199 = vmatprep.subr.mxu0 0.0
        %2200 = vmatpush2.msra.mxu0 0.0
        %2201 = vmatprep.subr.mxu0 0.0
        %2202 = vmatpush2.msra.mxu0 0.0
        %2203 = vmatprep.subr.mxu0 0.0
        %2204 = vmatpush2.msra.mxu0 0.0
        %2205 = vmatprep.subr.mxu0 0.0
        %2206 = vmatpush2.msra.mxu0 0.0
        %2207 = vmatprep.subr.mxu0 0.0
        %2208 = vmatpush2.msra.mxu0 0.0
        %2209 = vmatprep.subr.mxu0 0.0
        %2210 = vmatpush2.msra.mxu0 0.0
        %2211 = vmatprep.subr.mxu0 0.0
        %2212 = vmatpush2.msra.mxu0 0.0
        %2213 = vmatprep.subr.mxu0 0.0
        %2214 = vmatpush2.msra.mxu0 0.0
        %2215 = vmatprep.subr.mxu0 0.0
        %2216 = vmatpush2.msra.mxu0 0.0
        %2217 = vmatprep.subr.mxu0 0.0
        %2218 = vmatpush2.msra.mxu0 0.0
        %2219 = vmatprep.subr.mxu0 0.0
        %2220 = vmatpush2.msra.mxu0 0.0
        %2221 = vmatprep.subr.mxu0 0.0
        %2222 = vmatpush2.msra.mxu0 0.0
        %2223 = vmatprep.subr.mxu0 0.0
        %2224 = vmatpush2.msra.mxu0 0.0
        %2225 = vmatprep.mubr.f32.mxu0 0.0
        %2226 = vmatmul.mubr.f32.gmra.mxu0 %v2019
        %v2227 = vpop.f32.mrf.mxu0
        %v2228 = vadd.f32 %v2009, %v2227
        %v2229 = vpop.f32.mrf.mxu0
        %2230 = vdwg.mxu0
        %2231 = vmatprep.subr.mxu0 0.0
        %2232 = vmatpush1.msra.mxu0 0.0
        %2233 = vmatprep.subr.mxu0 0.0
        %2234 = vmatpush1.msra.mxu0 0.0
        %2235 = vmatprep.subr.mxu0 0.0
        %2236 = vmatpush1.msra.mxu0 0.0
        %2237 = vmatprep.subr.mxu0 0.0
        %2238 = vmatpush1.msra.mxu0 0.0
        %2239 = vmatprep.subr.mxu0 0.0
        %2240 = vmatpush1.msra.mxu0 0.0
        %2241 = vmatprep.subr.mxu0 0.0
        %2242 = vmatpush1.msra.mxu0 0.0
        %2243 = vmatprep.subr.mxu0 0.0
        %2244 = vmatpush1.msra.mxu0 0.0
        %2245 = vmatprep.subr.mxu0 0.0
        %2246 = vmatpush1.msra.mxu0 0.0
        %2247 = vmatprep.subr.mxu0 0.0
        %2248 = vmatpush1.msra.mxu0 0.0
        %2249 = vmatprep.subr.mxu0 0.0
        %2250 = vmatpush1.msra.mxu0 0.0
        %2251 = vmatprep.subr.mxu0 0.0
        %2252 = vmatpush1.msra.mxu0 0.0
        %2253 = vmatprep.subr.mxu0 0.0
        %2254 = vmatpush1.msra.mxu0 0.0
        %2255 = vmatprep.subr.mxu0 0.0
        %2256 = vmatpush1.msra.mxu0 %v1989
        %2257 = vmatprep.subr.mxu0 0.0
        %2258 = vmatpush1.msra.mxu0 %v1988
        %2259 = vmatprep.subr.mxu0 0.0
        %2260 = vmatpush1.msra.mxu0 %v1987
        %2261 = vmatprep.subr.mxu0 0.0
        %2262 = vmatpush1.msra.mxu0 %v1986
        %2263 = vmatprep.subr.mxu0 0.0
        %2264 = vmatpush2.msra.mxu0 0.0
        %2265 = vmatprep.subr.mxu0 0.0
        %2266 = vmatpush2.msra.mxu0 0.0
        %2267 = vmatprep.subr.mxu0 0.0
        %2268 = vmatpush2.msra.mxu0 0.0
        %2269 = vmatprep.subr.mxu0 0.0
        %2270 = vmatpush2.msra.mxu0 0.0
        %2271 = vmatprep.subr.mxu0 0.0
        %2272 = vmatpush2.msra.mxu0 0.0
        %2273 = vmatprep.subr.mxu0 0.0
        %2274 = vmatpush2.msra.mxu0 0.0
        %2275 = vmatprep.subr.mxu0 0.0
        %2276 = vmatpush2.msra.mxu0 0.0
        %2277 = vmatprep.subr.mxu0 0.0
        %2278 = vmatpush2.msra.mxu0 0.0
        %2279 = vmatprep.subr.mxu0 0.0
        %2280 = vmatpush2.msra.mxu0 0.0
        %2281 = vmatprep.subr.mxu0 0.0
        %2282 = vmatpush2.msra.mxu0 0.0
        %2283 = vmatprep.subr.mxu0 0.0
        %2284 = vmatpush2.msra.mxu0 0.0
        %2285 = vmatprep.subr.mxu0 0.0
        %2286 = vmatpush2.msra.mxu0 0.0
        %2287 = vmatprep.subr.mxu0 0.0
        %2288 = vmatpush2.msra.mxu0 0.0
        %2289 = vmatprep.subr.mxu0 0.0
        %2290 = vmatpush2.msra.mxu0 0.0
        %2291 = vmatprep.subr.mxu0 0.0
        %2292 = vmatpush2.msra.mxu0 0.0
        %2293 = vmatprep.subr.mxu0 0.0
        %2294 = vmatpush2.msra.mxu0 0.0
        %2295 = vmatprep.mubr.f32.mxu0 0.0
        %2296 = vmatmul.mubr.f32.gmra.mxu0 %v2019
        %v2297 = vpop.f32.mrf.mxu0
        %v2298 = vadd.f32 %v2013, %v2297
        %v2299 = vpop.f32.mrf.mxu0
        %2300 = vdwg.mxu0
        %v2301 = vld [vmem:[%s9] sm:$0xff]
        %v2302 = vld [vmem:[%s9 + $0x8] sm:$0xff]
        %v2303 = vld [vmem:[%s9 + $0x10] sm:$0xff]
        %v2304 = vld [vmem:[%s9 + $0x18] sm:$0xff]
        %v2305 = vld [vmem:[%s9 + $0x20] sm:$0xff]
        %v2306 = vld [vmem:[%s9 + $0x28] sm:$0xff]
        %v2307 = vld [vmem:[%s9 + $0x30] sm:$0xff]
        %v2308 = vld [vmem:[%s9 + $0x38] sm:$0xff]
        %v2309 = vld [vmem:[%s9 + $0x40] sm:$0xff]
        %v2310 = vld [vmem:[%s9 + $0x48] sm:$0xff]
        %v2311 = vld [vmem:[%s9 + $0x50] sm:$0xff]
        %v2312 = vld [vmem:[%s9 + $0x58] sm:$0xff]
        %v2313 = vld [vmem:[%s9 + $0x60] sm:$0xff]
        %v2314 = vld [vmem:[%s9 + $0x68] sm:$0xff]
        %v2315 = vld [vmem:[%s9 + $0x70] sm:$0xff]
        %v2316 = vld [vmem:[%s9 + $0x78] sm:$0xff]
        %v2317 = vld [vmem:[%s10] sm:$0x1]
        %v2318 = vld [vmem:[%s10 + $0x1] sm:$0x1]
        %v2319 = vld [vmem:[%s10 + $0x2] sm:$0x1]
        %v2320 = vld [vmem:[%s10 + $0x3] sm:$0x1]
        %v2325 = vlaneseq
        %v2326 = vshrl.u32 %v2325, 7
        %v2327 = vsub.s32 0, %v2326
        %v2328 = vrot.slane %v2317, %v2327
        %v2329 = vlaneseq
        %v2330 = vshrl.u32 %v2329, 7
        %v2331 = vsub.s32 0, %v2330
        %v2332 = vrot.slane %v2318, %v2331
        %v2333 = vlaneseq
        %v2334 = vshrl.u32 %v2333, 7
        %v2335 = vsub.s32 0, %v2334
        %v2336 = vrot.slane %v2319, %v2335
        %v2337 = vlaneseq
        %v2338 = vshrl.u32 %v2337, 7
        %v2339 = vsub.s32 0, %v2338
        %v2340 = vrot.slane %v2320, %v2339
        %v2346 = vsel %vm679, %v633, 0
        %2348 = vmatprep.subr.mxu0 0.0
        %2349 = vmatpush1.msra.mxu0 0.0
        %2350 = vmatprep.subr.mxu0 0.0
        %2351 = vmatpush1.msra.mxu0 0.0
        %2352 = vmatprep.subr.mxu0 0.0
        %2353 = vmatpush1.msra.mxu0 0.0
        %2354 = vmatprep.subr.mxu0 0.0
        %2355 = vmatpush1.msra.mxu0 0.0
        %2356 = vmatprep.subr.mxu0 0.0
        %2357 = vmatpush1.msra.mxu0 0.0
        %2358 = vmatprep.subr.mxu0 0.0
        %2359 = vmatpush1.msra.mxu0 0.0
        %2360 = vmatprep.subr.mxu0 0.0
        %2361 = vmatpush1.msra.mxu0 0.0
        %2362 = vmatprep.subr.mxu0 0.0
        %2363 = vmatpush1.msra.mxu0 0.0
        %2364 = vmatprep.subr.mxu0 0.0
        %2365 = vmatpush1.msra.mxu0 0.0
        %2366 = vmatprep.subr.mxu0 0.0
        %2367 = vmatpush1.msra.mxu0 0.0
        %2368 = vmatprep.subr.mxu0 0.0
        %2369 = vmatpush1.msra.mxu0 0.0
        %2370 = vmatprep.subr.mxu0 0.0
        %2371 = vmatpush1.msra.mxu0 0.0
        %2372 = vmatprep.subr.mxu0 0.0
        %2373 = vmatpush1.msra.mxu0 %v2304
        %2374 = vmatprep.subr.mxu0 0.0
        %2375 = vmatpush1.msra.mxu0 %v2303
        %2376 = vmatprep.subr.mxu0 0.0
        %2377 = vmatpush1.msra.mxu0 %v2302
        %2378 = vmatprep.subr.mxu0 0.0
        %2379 = vmatpush1.msra.mxu0 %v2301
        %2380 = vmatprep.subr.mxu0 0.0
        %2381 = vmatpush2.msra.mxu0 0.0
        %2382 = vmatprep.subr.mxu0 0.0
        %2383 = vmatpush2.msra.mxu0 0.0
        %2384 = vmatprep.subr.mxu0 0.0
        %2385 = vmatpush2.msra.mxu0 0.0
        %2386 = vmatprep.subr.mxu0 0.0
        %2387 = vmatpush2.msra.mxu0 0.0
        %2388 = vmatprep.subr.mxu0 0.0
        %2389 = vmatpush2.msra.mxu0 0.0
        %2390 = vmatprep.subr.mxu0 0.0
        %2391 = vmatpush2.msra.mxu0 0.0
        %2392 = vmatprep.subr.mxu0 0.0
        %2393 = vmatpush2.msra.mxu0 0.0
        %2394 = vmatprep.subr.mxu0 0.0
        %2395 = vmatpush2.msra.mxu0 0.0
        %2396 = vmatprep.subr.mxu0 0.0
        %2397 = vmatpush2.msra.mxu0 0.0
        %2398 = vmatprep.subr.mxu0 0.0
        %2399 = vmatpush2.msra.mxu0 0.0
        %2400 = vmatprep.subr.mxu0 0.0
        %2401 = vmatpush2.msra.mxu0 0.0
        %2402 = vmatprep.subr.mxu0 0.0
        %2403 = vmatpush2.msra.mxu0 0.0
        %2404 = vmatprep.subr.mxu0 0.0
        %2405 = vmatpush2.msra.mxu0 0.0
        %2406 = vmatprep.subr.mxu0 0.0
        %2407 = vmatpush2.msra.mxu0 0.0
        %2408 = vmatprep.subr.mxu0 0.0
        %2409 = vmatpush2.msra.mxu0 0.0
        %2410 = vmatprep.subr.mxu0 0.0
        %2411 = vmatpush2.msra.mxu0 0.0
        %2412 = vmatprep.mubr.f32.mxu0 0.0
        %2413 = vmatmul.mubr.f32.gmra.mxu0 %v2346
        %v2414 = vpop.f32.mrf.mxu0
        %v2415 = vadd.f32 %v2328, %v2414
        %v2416 = vpop.f32.mrf.mxu0
        %2417 = vdwg.mxu0
        %2418 = vmatprep.subr.mxu0 0.0
        %2419 = vmatpush1.msra.mxu0 0.0
        %2420 = vmatprep.subr.mxu0 0.0
        %2421 = vmatpush1.msra.mxu0 0.0
        %2422 = vmatprep.subr.mxu0 0.0
        %2423 = vmatpush1.msra.mxu0 0.0
        %2424 = vmatprep.subr.mxu0 0.0
        %2425 = vmatpush1.msra.mxu0 0.0
        %2426 = vmatprep.subr.mxu0 0.0
        %2427 = vmatpush1.msra.mxu0 0.0
        %2428 = vmatprep.subr.mxu0 0.0
        %2429 = vmatpush1.msra.mxu0 0.0
        %2430 = vmatprep.subr.mxu0 0.0
        %2431 = vmatpush1.msra.mxu0 0.0
        %2432 = vmatprep.subr.mxu0 0.0
        %2433 = vmatpush1.msra.mxu0 0.0
        %2434 = vmatprep.subr.mxu0 0.0
        %2435 = vmatpush1.msra.mxu0 0.0
        %2436 = vmatprep.subr.mxu0 0.0
        %2437 = vmatpush1.msra.mxu0 0.0
        %2438 = vmatprep.subr.mxu0 0.0
        %2439 = vmatpush1.msra.mxu0 0.0
        %2440 = vmatprep.subr.mxu0 0.0
        %2441 = vmatpush1.msra.mxu0 0.0
        %2442 = vmatprep.subr.mxu0 0.0
        %2443 = vmatpush1.msra.mxu0 %v2308
        %2444 = vmatprep.subr.mxu0 0.0
        %2445 = vmatpush1.msra.mxu0 %v2307
        %2446 = vmatprep.subr.mxu0 0.0
        %2447 = vmatpush1.msra.mxu0 %v2306
        %2448 = vmatprep.subr.mxu0 0.0
        %2449 = vmatpush1.msra.mxu0 %v2305
        %2450 = vmatprep.subr.mxu0 0.0
        %2451 = vmatpush2.msra.mxu0 0.0
        %2452 = vmatprep.subr.mxu0 0.0
        %2453 = vmatpush2.msra.mxu0 0.0
        %2454 = vmatprep.subr.mxu0 0.0
        %2455 = vmatpush2.msra.mxu0 0.0
        %2456 = vmatprep.subr.mxu0 0.0
        %2457 = vmatpush2.msra.mxu0 0.0
        %2458 = vmatprep.subr.mxu0 0.0
        %2459 = vmatpush2.msra.mxu0 0.0
        %2460 = vmatprep.subr.mxu0 0.0
        %2461 = vmatpush2.msra.mxu0 0.0
        %2462 = vmatprep.subr.mxu0 0.0
        %2463 = vmatpush2.msra.mxu0 0.0
        %2464 = vmatprep.subr.mxu0 0.0
        %2465 = vmatpush2.msra.mxu0 0.0
        %2466 = vmatprep.subr.mxu0 0.0
        %2467 = vmatpush2.msra.mxu0 0.0
        %2468 = vmatprep.subr.mxu0 0.0
        %2469 = vmatpush2.msra.mxu0 0.0
        %2470 = vmatprep.subr.mxu0 0.0
        %2471 = vmatpush2.msra.mxu0 0.0
        %2472 = vmatprep.subr.mxu0 0.0
        %2473 = vmatpush2.msra.mxu0 0.0
        %2474 = vmatprep.subr.mxu0 0.0
        %2475 = vmatpush2.msra.mxu0 0.0
        %2476 = vmatprep.subr.mxu0 0.0
        %2477 = vmatpush2.msra.mxu0 0.0
        %2478 = vmatprep.subr.mxu0 0.0
        %2479 = vmatpush2.msra.mxu0 0.0
        %2480 = vmatprep.subr.mxu0 0.0
        %2481 = vmatpush2.msra.mxu0 0.0
        %2482 = vmatprep.mubr.f32.mxu0 0.0
        %2483 = vmatmul.mubr.f32.gmra.mxu0 %v2346
        %v2484 = vpop.f32.mrf.mxu0
        %v2485 = vadd.f32 %v2332, %v2484
        %v2486 = vpop.f32.mrf.mxu0
        %2487 = vdwg.mxu0
        %2488 = vmatprep.subr.mxu0 0.0
        %2489 = vmatpush1.msra.mxu0 0.0
        %2490 = vmatprep.subr.mxu0 0.0
        %2491 = vmatpush1.msra.mxu0 0.0
        %2492 = vmatprep.subr.mxu0 0.0
        %2493 = vmatpush1.msra.mxu0 0.0
        %2494 = vmatprep.subr.mxu0 0.0
        %2495 = vmatpush1.msra.mxu0 0.0
        %2496 = vmatprep.subr.mxu0 0.0
        %2497 = vmatpush1.msra.mxu0 0.0
        %2498 = vmatprep.subr.mxu0 0.0
        %2499 = vmatpush1.msra.mxu0 0.0
        %2500 = vmatprep.subr.mxu0 0.0
        %2501 = vmatpush1.msra.mxu0 0.0
        %2502 = vmatprep.subr.mxu0 0.0
        %2503 = vmatpush1.msra.mxu0 0.0
        %2504 = vmatprep.subr.mxu0 0.0
        %2505 = vmatpush1.msra.mxu0 0.0
        %2506 = vmatprep.subr.mxu0 0.0
        %2507 = vmatpush1.msra.mxu0 0.0
        %2508 = vmatprep.subr.mxu0 0.0
        %2509 = vmatpush1.msra.mxu0 0.0
        %2510 = vmatprep.subr.mxu0 0.0
        %2511 = vmatpush1.msra.mxu0 0.0
        %2512 = vmatprep.subr.mxu0 0.0
        %2513 = vmatpush1.msra.mxu0 %v2312
        %2514 = vmatprep.subr.mxu0 0.0
        %2515 = vmatpush1.msra.mxu0 %v2311
        %2516 = vmatprep.subr.mxu0 0.0
        %2517 = vmatpush1.msra.mxu0 %v2310
        %2518 = vmatprep.subr.mxu0 0.0
        %2519 = vmatpush1.msra.mxu0 %v2309
        %2520 = vmatprep.subr.mxu0 0.0
        %2521 = vmatpush2.msra.mxu0 0.0
        %2522 = vmatprep.subr.mxu0 0.0
        %2523 = vmatpush2.msra.mxu0 0.0
        %2524 = vmatprep.subr.mxu0 0.0
        %2525 = vmatpush2.msra.mxu0 0.0
        %2526 = vmatprep.subr.mxu0 0.0
        %2527 = vmatpush2.msra.mxu0 0.0
        %2528 = vmatprep.subr.mxu0 0.0
        %2529 = vmatpush2.msra.mxu0 0.0
        %2530 = vmatprep.subr.mxu0 0.0
        %2531 = vmatpush2.msra.mxu0 0.0
        %2532 = vmatprep.subr.mxu0 0.0
        %2533 = vmatpush2.msra.mxu0 0.0
        %2534 = vmatprep.subr.mxu0 0.0
        %2535 = vmatpush2.msra.mxu0 0.0
        %2536 = vmatprep.subr.mxu0 0.0
        %2537 = vmatpush2.msra.mxu0 0.0
        %2538 = vmatprep.subr.mxu0 0.0
        %2539 = vmatpush2.msra.mxu0 0.0
        %2540 = vmatprep.subr.mxu0 0.0
        %2541 = vmatpush2.msra.mxu0 0.0
        %2542 = vmatprep.subr.mxu0 0.0
        %2543 = vmatpush2.msra.mxu0 0.0
        %2544 = vmatprep.subr.mxu0 0.0
        %2545 = vmatpush2.msra.mxu0 0.0
        %2546 = vmatprep.subr.mxu0 0.0
        %2547 = vmatpush2.msra.mxu0 0.0
        %2548 = vmatprep.subr.mxu0 0.0
        %2549 = vmatpush2.msra.mxu0 0.0
        %2550 = vmatprep.subr.mxu0 0.0
        %2551 = vmatpush2.msra.mxu0 0.0
        %2552 = vmatprep.mubr.f32.mxu0 0.0
        %2553 = vmatmul.mubr.f32.gmra.mxu0 %v2346
        %v2554 = vpop.f32.mrf.mxu0
        %v2555 = vadd.f32 %v2336, %v2554
        %v2556 = vpop.f32.mrf.mxu0
        %2557 = vdwg.mxu0
        %2558 = vmatprep.subr.mxu0 0.0
        %2559 = vmatpush1.msra.mxu0 0.0
        %2560 = vmatprep.subr.mxu0 0.0
        %2561 = vmatpush1.msra.mxu0 0.0
        %2562 = vmatprep.subr.mxu0 0.0
        %2563 = vmatpush1.msra.mxu0 0.0
        %2564 = vmatprep.subr.mxu0 0.0
        %2565 = vmatpush1.msra.mxu0 0.0
        %2566 = vmatprep.subr.mxu0 0.0
        %2567 = vmatpush1.msra.mxu0 0.0
        %2568 = vmatprep.subr.mxu0 0.0
        %2569 = vmatpush1.msra.mxu0 0.0
        %2570 = vmatprep.subr.mxu0 0.0
        %2571 = vmatpush1.msra.mxu0 0.0
        %2572 = vmatprep.subr.mxu0 0.0
        %2573 = vmatpush1.msra.mxu0 0.0
        %2574 = vmatprep.subr.mxu0 0.0
        %2575 = vmatpush1.msra.mxu0 0.0
        %2576 = vmatprep.subr.mxu0 0.0
        %2577 = vmatpush1.msra.mxu0 0.0
        %2578 = vmatprep.subr.mxu0 0.0
        %2579 = vmatpush1.msra.mxu0 0.0
        %2580 = vmatprep.subr.mxu0 0.0
        %2581 = vmatpush1.msra.mxu0 0.0
        %2582 = vmatprep.subr.mxu0 0.0
        %2583 = vmatpush1.msra.mxu0 %v2316
        %2584 = vmatprep.subr.mxu0 0.0
        %2585 = vmatpush1.msra.mxu0 %v2315
        %2586 = vmatprep.subr.mxu0 0.0
        %2587 = vmatpush1.msra.mxu0 %v2314
        %2588 = vmatprep.subr.mxu0 0.0
        %2589 = vmatpush1.msra.mxu0 %v2313
        %2590 = vmatprep.subr.mxu0 0.0
        %2591 = vmatpush2.msra.mxu0 0.0
        %2592 = vmatprep.subr.mxu0 0.0
        %2593 = vmatpush2.msra.mxu0 0.0
        %2594 = vmatprep.subr.mxu0 0.0
        %2595 = vmatpush2.msra.mxu0 0.0
        %2596 = vmatprep.subr.mxu0 0.0
        %2597 = vmatpush2.msra.mxu0 0.0
        %2598 = vmatprep.subr.mxu0 0.0
        %2599 = vmatpush2.msra.mxu0 0.0
        %2600 = vmatprep.subr.mxu0 0.0
        %2601 = vmatpush2.msra.mxu0 0.0
        %2602 = vmatprep.subr.mxu0 0.0
        %2603 = vmatpush2.msra.mxu0 0.0
        %2604 = vmatprep.subr.mxu0 0.0
        %2605 = vmatpush2.msra.mxu0 0.0
        %2606 = vmatprep.subr.mxu0 0.0
        %2607 = vmatpush2.msra.mxu0 0.0
        %2608 = vmatprep.subr.mxu0 0.0
        %2609 = vmatpush2.msra.mxu0 0.0
        %2610 = vmatprep.subr.mxu0 0.0
        %2611 = vmatpush2.msra.mxu0 0.0
        %2612 = vmatprep.subr.mxu0 0.0
        %2613 = vmatpush2.msra.mxu0 0.0
        %2614 = vmatprep.subr.mxu0 0.0
        %2615 = vmatpush2.msra.mxu0 0.0
        %2616 = vmatprep.subr.mxu0 0.0
        %2617 = vmatpush2.msra.mxu0 0.0
        %2618 = vmatprep.subr.mxu0 0.0
        %2619 = vmatpush2.msra.mxu0 0.0
        %2620 = vmatprep.subr.mxu0 0.0
        %2621 = vmatpush2.msra.mxu0 0.0
        %2622 = vmatprep.mubr.f32.mxu0 0.0
        %2623 = vmatmul.mubr.f32.gmra.mxu0 %v2346
        %v2624 = vpop.f32.mrf.mxu0
        %v2625 = vadd.f32 %v2340, %v2624
        %v2626 = vpop.f32.mrf.mxu0
        %2627 = vdwg.mxu0
        %v2629 = vsel %vm966, %v2088, 0
        %v2632 = vsel %vm966, %v2415, 0
        %2634 = vmatprep.subr.mxu0 0.0
        %2635 = vmatpush1.xpose.msra.mxu0 0.0
        %2636 = vmatprep.subr.mxu0 0.0
        %2637 = vmatpush1.xpose.msra.mxu0 0.0
        %2638 = vmatprep.subr.mxu0 0.0
        %2639 = vmatpush1.xpose.msra.mxu0 0.0
        %2640 = vmatprep.subr.mxu0 0.0
        %2641 = vmatpush1.xpose.msra.mxu0 0.0
        %2642 = vmatprep.subr.mxu0 0.0
        %2643 = vmatpush1.xpose.msra.mxu0 0.0
        %2644 = vmatprep.subr.mxu0 0.0
        %2645 = vmatpush1.xpose.msra.mxu0 0.0
        %2646 = vmatprep.subr.mxu0 0.0
        %2647 = vmatpush1.xpose.msra.mxu0 0.0
        %2648 = vmatprep.subr.mxu0 0.0
        %2649 = vmatpush1.xpose.msra.mxu0 0.0
        %2650 = vmatprep.subr.mxu0 0.0
        %2651 = vmatpush1.xpose.msra.mxu0 0.0
        %2652 = vmatprep.subr.mxu0 0.0
        %2653 = vmatpush1.xpose.msra.mxu0 0.0
        %2654 = vmatprep.subr.mxu0 0.0
        %2655 = vmatpush1.xpose.msra.mxu0 0.0
        %2656 = vmatprep.subr.mxu0 0.0
        %2657 = vmatpush1.xpose.msra.mxu0 0.0
        %2658 = vmatprep.subr.mxu0 0.0
        %2659 = vmatpush1.xpose.msra.mxu0 0.0
        %2660 = vmatprep.subr.mxu0 0.0
        %2661 = vmatpush1.xpose.msra.mxu0 0.0
        %2662 = vmatprep.subr.mxu0 0.0
        %2663 = vmatpush1.xpose.msra.mxu0 0.0
        %2664 = vmatprep.subr.mxu0 0.0
        %2665 = vmatpush1.xpose.msra.mxu0 %v2632
        %2666 = vmatprep.subr.mxu0 0.0
        %2667 = vmatpush2.xpose.msra.mxu0 0.0
        %2668 = vmatprep.subr.mxu0 0.0
        %2669 = vmatpush2.xpose.msra.mxu0 0.0
        %2670 = vmatprep.subr.mxu0 0.0
        %2671 = vmatpush2.xpose.msra.mxu0 0.0
        %2672 = vmatprep.subr.mxu0 0.0
        %2673 = vmatpush2.xpose.msra.mxu0 0.0
        %2674 = vmatprep.subr.mxu0 0.0
        %2675 = vmatpush2.xpose.msra.mxu0 0.0
        %2676 = vmatprep.subr.mxu0 0.0
        %2677 = vmatpush2.xpose.msra.mxu0 0.0
        %2678 = vmatprep.subr.mxu0 0.0
        %2679 = vmatpush2.xpose.msra.mxu0 0.0
        %2680 = vmatprep.subr.mxu0 0.0
        %2681 = vmatpush2.xpose.msra.mxu0 0.0
        %2682 = vmatprep.subr.mxu0 0.0
        %2683 = vmatpush2.xpose.msra.mxu0 0.0
        %2684 = vmatprep.subr.mxu0 0.0
        %2685 = vmatpush2.xpose.msra.mxu0 0.0
        %2686 = vmatprep.subr.mxu0 0.0
        %2687 = vmatpush2.xpose.msra.mxu0 0.0
        %2688 = vmatprep.subr.mxu0 0.0
        %2689 = vmatpush2.xpose.msra.mxu0 0.0
        %2690 = vmatprep.subr.mxu0 0.0
        %2691 = vmatpush2.xpose.msra.mxu0 0.0
        %2692 = vmatprep.subr.mxu0 0.0
        %2693 = vmatpush2.xpose.msra.mxu0 0.0
        %2694 = vmatprep.subr.mxu0 0.0
        %2695 = vmatpush2.xpose.msra.mxu0 0.0
        %2696 = vmatprep.subr.mxu0 0.0
        %2697 = vmatpush2.xpose.msra.mxu0 0.0
        %2698 = vmatprep.mubr.f32.mxu0 0.0
        %2699 = vmatmul.mubr.f32.gmra.mxu0 %v2629
        %v2700 = vpop.f32.mrf.mxu0
        %v2701 = vadd.f32 0.0, %v2700
        %v2702 = vpop.f32.mrf.mxu0
        %2703 = vdwg.mxu0
        %v2705 = vsel %vm966, %v2158, 0
        %v2708 = vsel %vm966, %v2485, 0
        %2710 = vmatprep.subr.mxu0 0.0
        %2711 = vmatpush1.xpose.msra.mxu0 0.0
        %2712 = vmatprep.subr.mxu0 0.0
        %2713 = vmatpush1.xpose.msra.mxu0 0.0
        %2714 = vmatprep.subr.mxu0 0.0
        %2715 = vmatpush1.xpose.msra.mxu0 0.0
        %2716 = vmatprep.subr.mxu0 0.0
        %2717 = vmatpush1.xpose.msra.mxu0 0.0
        %2718 = vmatprep.subr.mxu0 0.0
        %2719 = vmatpush1.xpose.msra.mxu0 0.0
        %2720 = vmatprep.subr.mxu0 0.0
        %2721 = vmatpush1.xpose.msra.mxu0 0.0
        %2722 = vmatprep.subr.mxu0 0.0
        %2723 = vmatpush1.xpose.msra.mxu0 0.0
        %2724 = vmatprep.subr.mxu0 0.0
        %2725 = vmatpush1.xpose.msra.mxu0 0.0
        %2726 = vmatprep.subr.mxu0 0.0
        %2727 = vmatpush1.xpose.msra.mxu0 0.0
        %2728 = vmatprep.subr.mxu0 0.0
        %2729 = vmatpush1.xpose.msra.mxu0 0.0
        %2730 = vmatprep.subr.mxu0 0.0
        %2731 = vmatpush1.xpose.msra.mxu0 0.0
        %2732 = vmatprep.subr.mxu0 0.0
        %2733 = vmatpush1.xpose.msra.mxu0 0.0
        %2734 = vmatprep.subr.mxu0 0.0
        %2735 = vmatpush1.xpose.msra.mxu0 0.0
        %2736 = vmatprep.subr.mxu0 0.0
        %2737 = vmatpush1.xpose.msra.mxu0 0.0
        %2738 = vmatprep.subr.mxu0 0.0
        %2739 = vmatpush1.xpose.msra.mxu0 0.0
        %2740 = vmatprep.subr.mxu0 0.0
        %2741 = vmatpush1.xpose.msra.mxu0 %v2708
        %2742 = vmatprep.subr.mxu0 0.0
        %2743 = vmatpush2.xpose.msra.mxu0 0.0
        %2744 = vmatprep.subr.mxu0 0.0
        %2745 = vmatpush2.xpose.msra.mxu0 0.0
        %2746 = vmatprep.subr.mxu0 0.0
        %2747 = vmatpush2.xpose.msra.mxu0 0.0
        %2748 = vmatprep.subr.mxu0 0.0
        %2749 = vmatpush2.xpose.msra.mxu0 0.0
        %2750 = vmatprep.subr.mxu0 0.0
        %2751 = vmatpush2.xpose.msra.mxu0 0.0
        %2752 = vmatprep.subr.mxu0 0.0
        %2753 = vmatpush2.xpose.msra.mxu0 0.0
        %2754 = vmatprep.subr.mxu0 0.0
        %2755 = vmatpush2.xpose.msra.mxu0 0.0
        %2756 = vmatprep.subr.mxu0 0.0
        %2757 = vmatpush2.xpose.msra.mxu0 0.0
        %2758 = vmatprep.subr.mxu0 0.0
        %2759 = vmatpush2.xpose.msra.mxu0 0.0
        %2760 = vmatprep.subr.mxu0 0.0
        %2761 = vmatpush2.xpose.msra.mxu0 0.0
        %2762 = vmatprep.subr.mxu0 0.0
        %2763 = vmatpush2.xpose.msra.mxu0 0.0
        %2764 = vmatprep.subr.mxu0 0.0
        %2765 = vmatpush2.xpose.msra.mxu0 0.0
        %2766 = vmatprep.subr.mxu0 0.0
        %2767 = vmatpush2.xpose.msra.mxu0 0.0
        %2768 = vmatprep.subr.mxu0 0.0
        %2769 = vmatpush2.xpose.msra.mxu0 0.0
        %2770 = vmatprep.subr.mxu0 0.0
        %2771 = vmatpush2.xpose.msra.mxu0 0.0
        %2772 = vmatprep.subr.mxu0 0.0
        %2773 = vmatpush2.xpose.msra.mxu0 0.0
        %2774 = vmatprep.mubr.f32.mxu0 0.0
        %2775 = vmatmul.mubr.f32.gmra.mxu0 %v2705
        %v2776 = vpop.f32.mrf.mxu0
        %v2777 = vadd.f32 0.0, %v2776
        %v2778 = vpop.f32.mrf.mxu0
        %2779 = vdwg.mxu0
        %v2781 = vsel %vm966, %v2228, 0
        %v2784 = vsel %vm966, %v2555, 0
        %2786 = vmatprep.subr.mxu0 0.0
        %2787 = vmatpush1.xpose.msra.mxu0 0.0
        %2788 = vmatprep.subr.mxu0 0.0
        %2789 = vmatpush1.xpose.msra.mxu0 0.0
        %2790 = vmatprep.subr.mxu0 0.0
        %2791 = vmatpush1.xpose.msra.mxu0 0.0
        %2792 = vmatprep.subr.mxu0 0.0
        %2793 = vmatpush1.xpose.msra.mxu0 0.0
        %2794 = vmatprep.subr.mxu0 0.0
        %2795 = vmatpush1.xpose.msra.mxu0 0.0
        %2796 = vmatprep.subr.mxu0 0.0
        %2797 = vmatpush1.xpose.msra.mxu0 0.0
        %2798 = vmatprep.subr.mxu0 0.0
        %2799 = vmatpush1.xpose.msra.mxu0 0.0
        %2800 = vmatprep.subr.mxu0 0.0
        %2801 = vmatpush1.xpose.msra.mxu0 0.0
        %2802 = vmatprep.subr.mxu0 0.0
        %2803 = vmatpush1.xpose.msra.mxu0 0.0
        %2804 = vmatprep.subr.mxu0 0.0
        %2805 = vmatpush1.xpose.msra.mxu0 0.0
        %2806 = vmatprep.subr.mxu0 0.0
        %2807 = vmatpush1.xpose.msra.mxu0 0.0
        %2808 = vmatprep.subr.mxu0 0.0
        %2809 = vmatpush1.xpose.msra.mxu0 0.0
        %2810 = vmatprep.subr.mxu0 0.0
        %2811 = vmatpush1.xpose.msra.mxu0 0.0
        %2812 = vmatprep.subr.mxu0 0.0
        %2813 = vmatpush1.xpose.msra.mxu0 0.0
        %2814 = vmatprep.subr.mxu0 0.0
        %2815 = vmatpush1.xpose.msra.mxu0 0.0
        %2816 = vmatprep.subr.mxu0 0.0
        %2817 = vmatpush1.xpose.msra.mxu0 %v2784
        %2818 = vmatprep.subr.mxu0 0.0
        %2819 = vmatpush2.xpose.msra.mxu0 0.0
        %2820 = vmatprep.subr.mxu0 0.0
        %2821 = vmatpush2.xpose.msra.mxu0 0.0
        %2822 = vmatprep.subr.mxu0 0.0
        %2823 = vmatpush2.xpose.msra.mxu0 0.0
        %2824 = vmatprep.subr.mxu0 0.0
        %2825 = vmatpush2.xpose.msra.mxu0 0.0
        %2826 = vmatprep.subr.mxu0 0.0
        %2827 = vmatpush2.xpose.msra.mxu0 0.0
        %2828 = vmatprep.subr.mxu0 0.0
        %2829 = vmatpush2.xpose.msra.mxu0 0.0
        %2830 = vmatprep.subr.mxu0 0.0
        %2831 = vmatpush2.xpose.msra.mxu0 0.0
        %2832 = vmatprep.subr.mxu0 0.0
        %2833 = vmatpush2.xpose.msra.mxu0 0.0
        %2834 = vmatprep.subr.mxu0 0.0
        %2835 = vmatpush2.xpose.msra.mxu0 0.0
        %2836 = vmatprep.subr.mxu0 0.0
        %2837 = vmatpush2.xpose.msra.mxu0 0.0
        %2838 = vmatprep.subr.mxu0 0.0
        %2839 = vmatpush2.xpose.msra.mxu0 0.0
        %2840 = vmatprep.subr.mxu0 0.0
        %2841 = vmatpush2.xpose.msra.mxu0 0.0
        %2842 = vmatprep.subr.mxu0 0.0
        %2843 = vmatpush2.xpose.msra.mxu0 0.0
        %2844 = vmatprep.subr.mxu0 0.0
        %2845 = vmatpush2.xpose.msra.mxu0 0.0
        %2846 = vmatprep.subr.mxu0 0.0
        %2847 = vmatpush2.xpose.msra.mxu0 0.0
        %2848 = vmatprep.subr.mxu0 0.0
        %2849 = vmatpush2.xpose.msra.mxu0 0.0
        %2850 = vmatprep.mubr.f32.mxu0 0.0
        %2851 = vmatmul.mubr.f32.gmra.mxu0 %v2781
        %v2852 = vpop.f32.mrf.mxu0
        %v2853 = vadd.f32 0.0, %v2852
        %v2854 = vpop.f32.mrf.mxu0
        %2855 = vdwg.mxu0
        %v2857 = vsel %vm966, %v2298, 0
        %v2860 = vsel %vm966, %v2625, 0
        %2862 = vmatprep.subr.mxu0 0.0
        %2863 = vmatpush1.xpose.msra.mxu0 0.0
        %2864 = vmatprep.subr.mxu0 0.0
        %2865 = vmatpush1.xpose.msra.mxu0 0.0
        %2866 = vmatprep.subr.mxu0 0.0
        %2867 = vmatpush1.xpose.msra.mxu0 0.0
        %2868 = vmatprep.subr.mxu0 0.0
        %2869 = vmatpush1.xpose.msra.mxu0 0.0
        %2870 = vmatprep.subr.mxu0 0.0
        %2871 = vmatpush1.xpose.msra.mxu0 0.0
        %2872 = vmatprep.subr.mxu0 0.0
        %2873 = vmatpush1.xpose.msra.mxu0 0.0
        %2874 = vmatprep.subr.mxu0 0.0
        %2875 = vmatpush1.xpose.msra.mxu0 0.0
        %2876 = vmatprep.subr.mxu0 0.0
        %2877 = vmatpush1.xpose.msra.mxu0 0.0
        %2878 = vmatprep.subr.mxu0 0.0
        %2879 = vmatpush1.xpose.msra.mxu0 0.0
        %2880 = vmatprep.subr.mxu0 0.0
        %2881 = vmatpush1.xpose.msra.mxu0 0.0
        %2882 = vmatprep.subr.mxu0 0.0
        %2883 = vmatpush1.xpose.msra.mxu0 0.0
        %2884 = vmatprep.subr.mxu0 0.0
        %2885 = vmatpush1.xpose.msra.mxu0 0.0
        %2886 = vmatprep.subr.mxu0 0.0
        %2887 = vmatpush1.xpose.msra.mxu0 0.0
        %2888 = vmatprep.subr.mxu0 0.0
        %2889 = vmatpush1.xpose.msra.mxu0 0.0
        %2890 = vmatprep.subr.mxu0 0.0
        %2891 = vmatpush1.xpose.msra.mxu0 0.0
        %2892 = vmatprep.subr.mxu0 0.0
        %2893 = vmatpush1.xpose.msra.mxu0 %v2860
        %2894 = vmatprep.subr.mxu0 0.0
        %2895 = vmatpush2.xpose.msra.mxu0 0.0
        %2896 = vmatprep.subr.mxu0 0.0
        %2897 = vmatpush2.xpose.msra.mxu0 0.0
        %2898 = vmatprep.subr.mxu0 0.0
        %2899 = vmatpush2.xpose.msra.mxu0 0.0
        %2900 = vmatprep.subr.mxu0 0.0
        %2901 = vmatpush2.xpose.msra.mxu0 0.0
        %2902 = vmatprep.subr.mxu0 0.0
        %2903 = vmatpush2.xpose.msra.mxu0 0.0
        %2904 = vmatprep.subr.mxu0 0.0
        %2905 = vmatpush2.xpose.msra.mxu0 0.0
        %2906 = vmatprep.subr.mxu0 0.0
        %2907 = vmatpush2.xpose.msra.mxu0 0.0
        %2908 = vmatprep.subr.mxu0 0.0
        %2909 = vmatpush2.xpose.msra.mxu0 0.0
        %2910 = vmatprep.subr.mxu0 0.0
        %2911 = vmatpush2.xpose.msra.mxu0 0.0
        %2912 = vmatprep.subr.mxu0 0.0
        %2913 = vmatpush2.xpose.msra.mxu0 0.0
        %2914 = vmatprep.subr.mxu0 0.0
        %2915 = vmatpush2.xpose.msra.mxu0 0.0
        %2916 = vmatprep.subr.mxu0 0.0
        %2917 = vmatpush2.xpose.msra.mxu0 0.0
        %2918 = vmatprep.subr.mxu0 0.0
        %2919 = vmatpush2.xpose.msra.mxu0 0.0
        %2920 = vmatprep.subr.mxu0 0.0
        %2921 = vmatpush2.xpose.msra.mxu0 0.0
        %2922 = vmatprep.subr.mxu0 0.0
        %2923 = vmatpush2.xpose.msra.mxu0 0.0
        %2924 = vmatprep.subr.mxu0 0.0
        %2925 = vmatpush2.xpose.msra.mxu0 0.0
        %2926 = vmatprep.mubr.f32.mxu0 0.0
        %2927 = vmatmul.mubr.f32.gmra.mxu0 %v2857
        %v2928 = vpop.f32.mrf.mxu0
        %v2929 = vadd.f32 0.0, %v2928
        %v2930 = vpop.f32.mrf.mxu0
        %2931 = vdwg.mxu0
        %v2932 = vmul.f32 %v2701, 0.35355338
        %v2933 = vmul.f32 %v2777, 0.35355338
        %v2934 = vmul.f32 %v2853, 0.35355338
        %v2935 = vmul.f32 %v2929, 0.35355338
        %v2936 = vadd.f32 %v2932, %v634
        %v2937 = vadd.f32 %v2933, %v634
        %v2938 = vadd.f32 %v2934, %v634
        %v2939 = vadd.f32 %v2935, %v634
        %v2940 = vsel %vm966, %v2936, -inf
        %2941 = vmax.xlane.f32.xlu0 %v2940
        %v2942 = vpop.xlane.xlu0 %2941
        %v2943 = vsel %vm966, %v2937, -inf
        %2944 = vmax.xlane.f32.xlu0 %v2943
        %v2945 = vpop.xlane.xlu0 %2944
        %v2946 = vsel %vm966, %v2938, -inf
        %2947 = vmax.xlane.f32.xlu0 %v2946
        %v2948 = vpop.xlane.xlu0 %2947
        %v2949 = vsel %vm966, %v2939, -inf
        %2950 = vmax.xlane.f32.xlu0 %v2949
        %v2951 = vpop.xlane.xlu0 %2950
        %v2952 = vsub.f32 %v2936, %v2942
        %v2953 = vsub.f32 %v2937, %v2945
        %v2954 = vsub.f32 %v2938, %v2948
        %v2955 = vsub.f32 %v2939, %v2951
        %v2956 = vmul.f32 %v2952, 1.442695
        %v2957 = vpow.pop %v2956
        %v2958 = vmul.f32 %v2953, 1.442695
        %v2959 = vpow.pop %v2958
        %v2960 = vmul.f32 %v2954, 1.442695
        %v2961 = vpow.pop %v2960
        %v2962 = vmul.f32 %v2955, 1.442695
        %v2963 = vpow.pop %v2962
        %v2964 = vsel %vm966, %v2957, 0.0
        %2965 = vadd.xlane.f32.xlu0 %v2964
        %v2966 = vpop.xlane.xlu0 %2965
        %v2967 = vsel %vm966, %v2959, 0.0
        %2968 = vadd.xlane.f32.xlu0 %v2967
        %v2969 = vpop.xlane.xlu0 %2968
        %v2970 = vsel %vm966, %v2961, 0.0
        %2971 = vadd.xlane.f32.xlu0 %v2970
        %v2972 = vpop.xlane.xlu0 %2971
        %v2973 = vsel %vm966, %v2963, 0.0
        %2974 = vadd.xlane.f32.xlu0 %v2973
        %v2975 = vpop.xlane.xlu0 %2974
        %v2976 = vrcp.pop %v2966
        %v2977 = vrcp.pop %v2969
        %v2978 = vrcp.pop %v2972
        %v2979 = vrcp.pop %v2975
        %v2980 = vmul.f32 %v2966, %v2976
        %v2981 = vmul.f32 %v2969, %v2977
        %v2982 = vmul.f32 %v2972, %v2978
        %v2983 = vmul.f32 %v2975, %v2979
        %v2984 = vsub.f32 2.0, %v2980
        %v2985 = vsub.f32 2.0, %v2981
        %v2986 = vsub.f32 2.0, %v2982
        %v2987 = vsub.f32 2.0, %v2983
        %v2988 = vmul.f32 %v2976, %v2984
        %v2989 = vmul.f32 %v2977, %v2985
        %v2990 = vmul.f32 %v2978, %v2986
        %v2991 = vmul.f32 %v2979, %v2987
        %v2992 = vmul.f32 %v2957, %v2988
        %v2993 = vmul.f32 %v2959, %v2989
        %v2994 = vmul.f32 %v2961, %v2990
        %v2995 = vmul.f32 %v2963, %v2991
        %2996 = vrot.lane.b32.xlu0 %v2415, 120
        %v2997 = vpop.permute.xlu0 %2996
        %v3000 = vsel %vm966, %v2992, 0
        %3002 = vmatprep.subr.mxu0 0.0
        %3003 = vmatpush1.msra.mxu0 0.0
        %3004 = vmatprep.subr.mxu0 0.0
        %3005 = vmatpush1.msra.mxu0 0.0
        %3006 = vmatprep.subr.mxu0 0.0
        %3007 = vmatpush1.msra.mxu0 0.0
        %3008 = vmatprep.subr.mxu0 0.0
        %3009 = vmatpush1.msra.mxu0 0.0
        %3010 = vmatprep.subr.mxu0 0.0
        %3011 = vmatpush1.msra.mxu0 0.0
        %3012 = vmatprep.subr.mxu0 0.0
        %3013 = vmatpush1.msra.mxu0 0.0
        %3014 = vmatprep.subr.mxu0 0.0
        %3015 = vmatpush1.msra.mxu0 0.0
        %3016 = vmatprep.subr.mxu0 0.0
        %3017 = vmatpush1.msra.mxu0 0.0
        %3018 = vmatprep.subr.mxu0 0.0
        %3019 = vmatpush1.msra.mxu0 0.0
        %3020 = vmatprep.subr.mxu0 0.0
        %3021 = vmatpush1.msra.mxu0 0.0
        %3022 = vmatprep.subr.mxu0 0.0
        %3023 = vmatpush1.msra.mxu0 0.0
        %3024 = vmatprep.subr.mxu0 0.0
        %3025 = vmatpush1.msra.mxu0 0.0
        %3026 = vmatprep.subr.mxu0 0.0
        %3027 = vmatpush1.msra.mxu0 0.0
        %3028 = vmatprep.subr.mxu0 0.0
        %3029 = vmatpush1.msra.mxu0 0.0
        %3030 = vmatprep.subr.mxu0 0.0
        %3031 = vmatpush1.msra.mxu0 0.0
        %3032 = vmatprep.subr.mxu0 0.0
        %3033 = vmatpush1.msra.mxu0 %v2997
        %3034 = vmatprep.subr.mxu0 0.0
        %3035 = vmatpush2.msra.mxu0 0.0
        %3036 = vmatprep.subr.mxu0 0.0
        %3037 = vmatpush2.msra.mxu0 0.0
        %3038 = vmatprep.subr.mxu0 0.0
        %3039 = vmatpush2.msra.mxu0 0.0
        %3040 = vmatprep.subr.mxu0 0.0
        %3041 = vmatpush2.msra.mxu0 0.0
        %3042 = vmatprep.subr.mxu0 0.0
        %3043 = vmatpush2.msra.mxu0 0.0
        %3044 = vmatprep.subr.mxu0 0.0
        %3045 = vmatpush2.msra.mxu0 0.0
        %3046 = vmatprep.subr.mxu0 0.0
        %3047 = vmatpush2.msra.mxu0 0.0
        %3048 = vmatprep.subr.mxu0 0.0
        %3049 = vmatpush2.msra.mxu0 0.0
        %3050 = vmatprep.subr.mxu0 0.0
        %3051 = vmatpush2.msra.mxu0 0.0
        %3052 = vmatprep.subr.mxu0 0.0
        %3053 = vmatpush2.msra.mxu0 0.0
        %3054 = vmatprep.subr.mxu0 0.0
        %3055 = vmatpush2.msra.mxu0 0.0
        %3056 = vmatprep.subr.mxu0 0.0
        %3057 = vmatpush2.msra.mxu0 0.0
        %3058 = vmatprep.subr.mxu0 0.0
        %3059 = vmatpush2.msra.mxu0 0.0
        %3060 = vmatprep.subr.mxu0 0.0
        %3061 = vmatpush2.msra.mxu0 0.0
        %3062 = vmatprep.subr.mxu0 0.0
        %3063 = vmatpush2.msra.mxu0 0.0
        %3064 = vmatprep.subr.mxu0 0.0
        %3065 = vmatpush2.msra.mxu0 0.0
        %3066 = vmatprep.mubr.f32.mxu0 0.0
        %3067 = vmatmul.mubr.f32.gmra.mxu0 %v3000
        %v3068 = vpop.f32.mrf.mxu0
        %v3069 = vadd.f32 0.0, %v3068
        %v3070 = vpop.f32.mrf.mxu0
        %3071 = vdwg.mxu0
        %3072 = vrot.lane.b32.xlu0 %v2485, 120
        %v3073 = vpop.permute.xlu0 %3072
        %v3076 = vsel %vm966, %v2993, 0
        %3078 = vmatprep.subr.mxu0 0.0
        %3079 = vmatpush1.msra.mxu0 0.0
        %3080 = vmatprep.subr.mxu0 0.0
        %3081 = vmatpush1.msra.mxu0 0.0
        %3082 = vmatprep.subr.mxu0 0.0
        %3083 = vmatpush1.msra.mxu0 0.0
        %3084 = vmatprep.subr.mxu0 0.0
        %3085 = vmatpush1.msra.mxu0 0.0
        %3086 = vmatprep.subr.mxu0 0.0
        %3087 = vmatpush1.msra.mxu0 0.0
        %3088 = vmatprep.subr.mxu0 0.0
        %3089 = vmatpush1.msra.mxu0 0.0
        %3090 = vmatprep.subr.mxu0 0.0
        %3091 = vmatpush1.msra.mxu0 0.0
        %3092 = vmatprep.subr.mxu0 0.0
        %3093 = vmatpush1.msra.mxu0 0.0
        %3094 = vmatprep.subr.mxu0 0.0
        %3095 = vmatpush1.msra.mxu0 0.0
        %3096 = vmatprep.subr.mxu0 0.0
        %3097 = vmatpush1.msra.mxu0 0.0
        %3098 = vmatprep.subr.mxu0 0.0
        %3099 = vmatpush1.msra.mxu0 0.0
        %3100 = vmatprep.subr.mxu0 0.0
        %3101 = vmatpush1.msra.mxu0 0.0
        %3102 = vmatprep.subr.mxu0 0.0
        %3103 = vmatpush1.msra.mxu0 0.0
        %3104 = vmatprep.subr.mxu0 0.0
        %3105 = vmatpush1.msra.mxu0 0.0
        %3106 = vmatprep.subr.mxu0 0.0
        %3107 = vmatpush1.msra.mxu0 0.0
        %3108 = vmatprep.subr.mxu0 0.0
        %3109 = vmatpush1.msra.mxu0 %v3073
        %3110 = vmatprep.subr.mxu0 0.0
        %3111 = vmatpush2.msra.mxu0 0.0
        %3112 = vmatprep.subr.mxu0 0.0
        %3113 = vmatpush2.msra.mxu0 0.0
        %3114 = vmatprep.subr.mxu0 0.0
        %3115 = vmatpush2.msra.mxu0 0.0
        %3116 = vmatprep.subr.mxu0 0.0
        %3117 = vmatpush2.msra.mxu0 0.0
        %3118 = vmatprep.subr.mxu0 0.0
        %3119 = vmatpush2.msra.mxu0 0.0
        %3120 = vmatprep.subr.mxu0 0.0
        %3121 = vmatpush2.msra.mxu0 0.0
        %3122 = vmatprep.subr.mxu0 0.0
        %3123 = vmatpush2.msra.mxu0 0.0
        %3124 = vmatprep.subr.mxu0 0.0
        %3125 = vmatpush2.msra.mxu0 0.0
        %3126 = vmatprep.subr.mxu0 0.0
        %3127 = vmatpush2.msra.mxu0 0.0
        %3128 = vmatprep.subr.mxu0 0.0
        %3129 = vmatpush2.msra.mxu0 0.0
        %3130 = vmatprep.subr.mxu0 0.0
        %3131 = vmatpush2.msra.mxu0 0.0
        %3132 = vmatprep.subr.mxu0 0.0
        %3133 = vmatpush2.msra.mxu0 0.0
        %3134 = vmatprep.subr.mxu0 0.0
        %3135 = vmatpush2.msra.mxu0 0.0
        %3136 = vmatprep.subr.mxu0 0.0
        %3137 = vmatpush2.msra.mxu0 0.0
        %3138 = vmatprep.subr.mxu0 0.0
        %3139 = vmatpush2.msra.mxu0 0.0
        %3140 = vmatprep.subr.mxu0 0.0
        %3141 = vmatpush2.msra.mxu0 0.0
        %3142 = vmatprep.mubr.f32.mxu0 0.0
        %3143 = vmatmul.mubr.f32.gmra.mxu0 %v3076
        %v3144 = vpop.f32.mrf.mxu0
        %v3145 = vadd.f32 0.0, %v3144
        %v3146 = vpop.f32.mrf.mxu0
        %3147 = vdwg.mxu0
        %3148 = vrot.lane.b32.xlu0 %v2555, 120
        %v3149 = vpop.permute.xlu0 %3148
        %v3152 = vsel %vm966, %v2994, 0
        %3154 = vmatprep.subr.mxu0 0.0
        %3155 = vmatpush1.msra.mxu0 0.0
        %3156 = vmatprep.subr.mxu0 0.0
        %3157 = vmatpush1.msra.mxu0 0.0
        %3158 = vmatprep.subr.mxu0 0.0
        %3159 = vmatpush1.msra.mxu0 0.0
        %3160 = vmatprep.subr.mxu0 0.0
        %3161 = vmatpush1.msra.mxu0 0.0
        %3162 = vmatprep.subr.mxu0 0.0
        %3163 = vmatpush1.msra.mxu0 0.0
        %3164 = vmatprep.subr.mxu0 0.0
        %3165 = vmatpush1.msra.mxu0 0.0
        %3166 = vmatprep.subr.mxu0 0.0
        %3167 = vmatpush1.msra.mxu0 0.0
        %3168 = vmatprep.subr.mxu0 0.0
        %3169 = vmatpush1.msra.mxu0 0.0
        %3170 = vmatprep.subr.mxu0 0.0
        %3171 = vmatpush1.msra.mxu0 0.0
        %3172 = vmatprep.subr.mxu0 0.0
        %3173 = vmatpush1.msra.mxu0 0.0
        %3174 = vmatprep.subr.mxu0 0.0
        %3175 = vmatpush1.msra.mxu0 0.0
        %3176 = vmatprep.subr.mxu0 0.0
        %3177 = vmatpush1.msra.mxu0 0.0
        %3178 = vmatprep.subr.mxu0 0.0
        %3179 = vmatpush1.msra.mxu0 0.0
        %3180 = vmatprep.subr.mxu0 0.0
        %3181 = vmatpush1.msra.mxu0 0.0
        %3182 = vmatprep.subr.mxu0 0.0
        %3183 = vmatpush1.msra.mxu0 0.0
        %3184 = vmatprep.subr.mxu0 0.0
        %3185 = vmatpush1.msra.mxu0 %v3149
        %3186 = vmatprep.subr.mxu0 0.0
        %3187 = vmatpush2.msra.mxu0 0.0
        %3188 = vmatprep.subr.mxu0 0.0
        %3189 = vmatpush2.msra.mxu0 0.0
        %3190 = vmatprep.subr.mxu0 0.0
        %3191 = vmatpush2.msra.mxu0 0.0
        %3192 = vmatprep.subr.mxu0 0.0
        %3193 = vmatpush2.msra.mxu0 0.0
        %3194 = vmatprep.subr.mxu0 0.0
        %3195 = vmatpush2.msra.mxu0 0.0
        %3196 = vmatprep.subr.mxu0 0.0
        %3197 = vmatpush2.msra.mxu0 0.0
        %3198 = vmatprep.subr.mxu0 0.0
        %3199 = vmatpush2.msra.mxu0 0.0
        %3200 = vmatprep.subr.mxu0 0.0
        %3201 = vmatpush2.msra.mxu0 0.0
        %3202 = vmatprep.subr.mxu0 0.0
        %3203 = vmatpush2.msra.mxu0 0.0
        %3204 = vmatprep.subr.mxu0 0.0
        %3205 = vmatpush2.msra.mxu0 0.0
        %3206 = vmatprep.subr.mxu0 0.0
        %3207 = vmatpush2.msra.mxu0 0.0
        %3208 = vmatprep.subr.mxu0 0.0
        %3209 = vmatpush2.msra.mxu0 0.0
        %3210 = vmatprep.subr.mxu0 0.0
        %3211 = vmatpush2.msra.mxu0 0.0
        %3212 = vmatprep.subr.mxu0 0.0
        %3213 = vmatpush2.msra.mxu0 0.0
        %3214 = vmatprep.subr.mxu0 0.0
        %3215 = vmatpush2.msra.mxu0 0.0
        %3216 = vmatprep.subr.mxu0 0.0
        %3217 = vmatpush2.msra.mxu0 0.0
        %3218 = vmatprep.mubr.f32.mxu0 0.0
        %3219 = vmatmul.mubr.f32.gmra.mxu0 %v3152
        %v3220 = vpop.f32.mrf.mxu0
        %v3221 = vadd.f32 0.0, %v3220
        %v3222 = vpop.f32.mrf.mxu0
        %3223 = vdwg.mxu0
        %3224 = vrot.lane.b32.xlu0 %v2625, 120
        %v3225 = vpop.permute.xlu0 %3224
        %v3228 = vsel %vm966, %v2995, 0
        %3230 = vmatprep.subr.mxu0 0.0
        %3231 = vmatpush1.msra.mxu0 0.0
        %3232 = vmatprep.subr.mxu0 0.0
        %3233 = vmatpush1.msra.mxu0 0.0
        %3234 = vmatprep.subr.mxu0 0.0
        %3235 = vmatpush1.msra.mxu0 0.0
        %3236 = vmatprep.subr.mxu0 0.0
        %3237 = vmatpush1.msra.mxu0 0.0
        %3238 = vmatprep.subr.mxu0 0.0
        %3239 = vmatpush1.msra.mxu0 0.0
        %3240 = vmatprep.subr.mxu0 0.0
        %3241 = vmatpush1.msra.mxu0 0.0
        %3242 = vmatprep.subr.mxu0 0.0
        %3243 = vmatpush1.msra.mxu0 0.0
        %3244 = vmatprep.subr.mxu0 0.0
        %3245 = vmatpush1.msra.mxu0 0.0
        %3246 = vmatprep.subr.mxu0 0.0
        %3247 = vmatpush1.msra.mxu0 0.0
        %3248 = vmatprep.subr.mxu0 0.0
        %3249 = vmatpush1.msra.mxu0 0.0
        %3250 = vmatprep.subr.mxu0 0.0
        %3251 = vmatpush1.msra.mxu0 0.0
        %3252 = vmatprep.subr.mxu0 0.0
        %3253 = vmatpush1.msra.mxu0 0.0
        %3254 = vmatprep.subr.mxu0 0.0
        %3255 = vmatpush1.msra.mxu0 0.0
        %3256 = vmatprep.subr.mxu0 0.0
        %3257 = vmatpush1.msra.mxu0 0.0
        %3258 = vmatprep.subr.mxu0 0.0
        %3259 = vmatpush1.msra.mxu0 0.0
        %3260 = vmatprep.subr.mxu0 0.0
        %3261 = vmatpush1.msra.mxu0 %v3225
        %3262 = vmatprep.subr.mxu0 0.0
        %3263 = vmatpush2.msra.mxu0 0.0
        %3264 = vmatprep.subr.mxu0 0.0
        %3265 = vmatpush2.msra.mxu0 0.0
        %3266 = vmatprep.subr.mxu0 0.0
        %3267 = vmatpush2.msra.mxu0 0.0
        %3268 = vmatprep.subr.mxu0 0.0
        %3269 = vmatpush2.msra.mxu0 0.0
        %3270 = vmatprep.subr.mxu0 0.0
        %3271 = vmatpush2.msra.mxu0 0.0
        %3272 = vmatprep.subr.mxu0 0.0
        %3273 = vmatpush2.msra.mxu0 0.0
        %3274 = vmatprep.subr.mxu0 0.0
        %3275 = vmatpush2.msra.mxu0 0.0
        %3276 = vmatprep.subr.mxu0 0.0
        %3277 = vmatpush2.msra.mxu0 0.0
        %3278 = vmatprep.subr.mxu0 0.0
        %3279 = vmatpush2.msra.mxu0 0.0
        %3280 = vmatprep.subr.mxu0 0.0
        %3281 = vmatpush2.msra.mxu0 0.0
        %3282 = vmatprep.subr.mxu0 0.0
        %3283 = vmatpush2.msra.mxu0 0.0
        %3284 = vmatprep.subr.mxu0 0.0
        %3285 = vmatpush2.msra.mxu0 0.0
        %3286 = vmatprep.subr.mxu0 0.0
        %3287 = vmatpush2.msra.mxu0 0.0
        %3288 = vmatprep.subr.mxu0 0.0
        %3289 = vmatpush2.msra.mxu0 0.0
        %3290 = vmatprep.subr.mxu0 0.0
        %3291 = vmatpush2.msra.mxu0 0.0
        %3292 = vmatprep.subr.mxu0 0.0
        %3293 = vmatpush2.msra.mxu0 0.0
        %3294 = vmatprep.mubr.f32.mxu0 0.0
        %3295 = vmatmul.mubr.f32.gmra.mxu0 %v3228
        %v3296 = vpop.f32.mrf.mxu0
        %v3297 = vadd.f32 0.0, %v3296
        %v3298 = vpop.f32.mrf.mxu0
        %3299 = vdwg.mxu0
        %v3300 = vld [vmem:[%s11] sm:$0xff]
        %v3301 = vld [vmem:[%s11 + $0x8] sm:$0xff]
        %v3302 = vld [vmem:[%s11 + $0x10] sm:$0xff]
        %v3303 = vld [vmem:[%s11 + $0x18] sm:$0xff]
        %v3305 = vsel %vm966, %v3069, 0
        %3307 = vmatprep.subr.mxu0 0.0
        %3308 = vmatpush1.msra.mxu0 0.0
        %3309 = vmatprep.subr.mxu0 0.0
        %3310 = vmatpush1.msra.mxu0 0.0
        %3311 = vmatprep.subr.mxu0 0.0
        %3312 = vmatpush1.msra.mxu0 0.0
        %3313 = vmatprep.subr.mxu0 0.0
        %3314 = vmatpush1.msra.mxu0 0.0
        %3315 = vmatprep.subr.mxu0 0.0
        %3316 = vmatpush1.msra.mxu0 0.0
        %3317 = vmatprep.subr.mxu0 0.0
        %3318 = vmatpush1.msra.mxu0 0.0
        %3319 = vmatprep.subr.mxu0 0.0
        %3320 = vmatpush1.msra.mxu0 0.0
        %3321 = vmatprep.subr.mxu0 0.0
        %3322 = vmatpush1.msra.mxu0 0.0
        %3323 = vmatprep.subr.mxu0 0.0
        %3324 = vmatpush1.msra.mxu0 0.0
        %3325 = vmatprep.subr.mxu0 0.0
        %3326 = vmatpush1.msra.mxu0 0.0
        %3327 = vmatprep.subr.mxu0 0.0
        %3328 = vmatpush1.msra.mxu0 0.0
        %3329 = vmatprep.subr.mxu0 0.0
        %3330 = vmatpush1.msra.mxu0 0.0
        %3331 = vmatprep.subr.mxu0 0.0
        %3332 = vmatpush1.msra.mxu0 0.0
        %3333 = vmatprep.subr.mxu0 0.0
        %3334 = vmatpush1.msra.mxu0 0.0
        %3335 = vmatprep.subr.mxu0 0.0
        %3336 = vmatpush1.msra.mxu0 0.0
        %3337 = vmatprep.subr.mxu0 0.0
        %3338 = vmatpush1.msra.mxu0 %v3300
        %3339 = vmatprep.subr.mxu0 0.0
        %3340 = vmatpush2.msra.mxu0 0.0
        %3341 = vmatprep.subr.mxu0 0.0
        %3342 = vmatpush2.msra.mxu0 0.0
        %3343 = vmatprep.subr.mxu0 0.0
        %3344 = vmatpush2.msra.mxu0 0.0
        %3345 = vmatprep.subr.mxu0 0.0
        %3346 = vmatpush2.msra.mxu0 0.0
        %3347 = vmatprep.subr.mxu0 0.0
        %3348 = vmatpush2.msra.mxu0 0.0
        %3349 = vmatprep.subr.mxu0 0.0
        %3350 = vmatpush2.msra.mxu0 0.0
        %3351 = vmatprep.subr.mxu0 0.0
        %3352 = vmatpush2.msra.mxu0 0.0
        %3353 = vmatprep.subr.mxu0 0.0
        %3354 = vmatpush2.msra.mxu0 0.0
        %3355 = vmatprep.subr.mxu0 0.0
        %3356 = vmatpush2.msra.mxu0 0.0
        %3357 = vmatprep.subr.mxu0 0.0
        %3358 = vmatpush2.msra.mxu0 0.0
        %3359 = vmatprep.subr.mxu0 0.0
        %3360 = vmatpush2.msra.mxu0 0.0
        %3361 = vmatprep.subr.mxu0 0.0
        %3362 = vmatpush2.msra.mxu0 0.0
        %3363 = vmatprep.subr.mxu0 0.0
        %3364 = vmatpush2.msra.mxu0 0.0
        %3365 = vmatprep.subr.mxu0 0.0
        %3366 = vmatpush2.msra.mxu0 0.0
        %3367 = vmatprep.subr.mxu0 0.0
        %3368 = vmatpush2.msra.mxu0 0.0
        %3369 = vmatprep.subr.mxu0 0.0
        %3370 = vmatpush2.msra.mxu0 0.0
        %3371 = vmatprep.mubr.f32.mxu0 0.0
        %3372 = vmatmul.mubr.f32.gmra.mxu0 %v3305
        %v3373 = vpop.f32.mrf.mxu0
        %v3374 = vadd.f32 0.0, %v3373
        %v3375 = vpop.f32.mrf.mxu0
        %3376 = vdwg.mxu0
        %v3378 = vsel %vm966, %v3145, 0
        %3380 = vmatprep.subr.mxu0 0.0
        %3381 = vmatpush1.msra.mxu0 0.0
        %3382 = vmatprep.subr.mxu0 0.0
        %3383 = vmatpush1.msra.mxu0 0.0
        %3384 = vmatprep.subr.mxu0 0.0
        %3385 = vmatpush1.msra.mxu0 0.0
        %3386 = vmatprep.subr.mxu0 0.0
        %3387 = vmatpush1.msra.mxu0 0.0
        %3388 = vmatprep.subr.mxu0 0.0
        %3389 = vmatpush1.msra.mxu0 0.0
        %3390 = vmatprep.subr.mxu0 0.0
        %3391 = vmatpush1.msra.mxu0 0.0
        %3392 = vmatprep.subr.mxu0 0.0
        %3393 = vmatpush1.msra.mxu0 0.0
        %3394 = vmatprep.subr.mxu0 0.0
        %3395 = vmatpush1.msra.mxu0 0.0
        %3396 = vmatprep.subr.mxu0 0.0
        %3397 = vmatpush1.msra.mxu0 0.0
        %3398 = vmatprep.subr.mxu0 0.0
        %3399 = vmatpush1.msra.mxu0 0.0
        %3400 = vmatprep.subr.mxu0 0.0
        %3401 = vmatpush1.msra.mxu0 0.0
        %3402 = vmatprep.subr.mxu0 0.0
        %3403 = vmatpush1.msra.mxu0 0.0
        %3404 = vmatprep.subr.mxu0 0.0
        %3405 = vmatpush1.msra.mxu0 0.0
        %3406 = vmatprep.subr.mxu0 0.0
        %3407 = vmatpush1.msra.mxu0 0.0
        %3408 = vmatprep.subr.mxu0 0.0
        %3409 = vmatpush1.msra.mxu0 0.0
        %3410 = vmatprep.subr.mxu0 0.0
        %3411 = vmatpush1.msra.mxu0 %v3301
        %3412 = vmatprep.subr.mxu0 0.0
        %3413 = vmatpush2.msra.mxu0 0.0
        %3414 = vmatprep.subr.mxu0 0.0
        %3415 = vmatpush2.msra.mxu0 0.0
        %3416 = vmatprep.subr.mxu0 0.0
        %3417 = vmatpush2.msra.mxu0 0.0
        %3418 = vmatprep.subr.mxu0 0.0
        %3419 = vmatpush2.msra.mxu0 0.0
        %3420 = vmatprep.subr.mxu0 0.0
        %3421 = vmatpush2.msra.mxu0 0.0
        %3422 = vmatprep.subr.mxu0 0.0
        %3423 = vmatpush2.msra.mxu0 0.0
        %3424 = vmatprep.subr.mxu0 0.0
        %3425 = vmatpush2.msra.mxu0 0.0
        %3426 = vmatprep.subr.mxu0 0.0
        %3427 = vmatpush2.msra.mxu0 0.0
        %3428 = vmatprep.subr.mxu0 0.0
        %3429 = vmatpush2.msra.mxu0 0.0
        %3430 = vmatprep.subr.mxu0 0.0
        %3431 = vmatpush2.msra.mxu0 0.0
        %3432 = vmatprep.subr.mxu0 0.0
        %3433 = vmatpush2.msra.mxu0 0.0
        %3434 = vmatprep.subr.mxu0 0.0
        %3435 = vmatpush2.msra.mxu0 0.0
        %3436 = vmatprep.subr.mxu0 0.0
        %3437 = vmatpush2.msra.mxu0 0.0
        %3438 = vmatprep.subr.mxu0 0.0
        %3439 = vmatpush2.msra.mxu0 0.0
        %3440 = vmatprep.subr.mxu0 0.0
        %3441 = vmatpush2.msra.mxu0 0.0
        %3442 = vmatprep.subr.mxu0 0.0
        %3443 = vmatpush2.msra.mxu0 0.0
        %3444 = vmatprep.mubr.f32.mxu0 0.0
        %3445 = vmatmul.mubr.f32.gmra.mxu0 %v3378
        %v3446 = vpop.f32.mrf.mxu0
        %v3447 = vadd.f32 0.0, %v3446
        %v3448 = vpop.f32.mrf.mxu0
        %3449 = vdwg.mxu0
        %v3451 = vsel %vm966, %v3221, 0
        %3453 = vmatprep.subr.mxu0 0.0
        %3454 = vmatpush1.msra.mxu0 0.0
        %3455 = vmatprep.subr.mxu0 0.0
        %3456 = vmatpush1.msra.mxu0 0.0
        %3457 = vmatprep.subr.mxu0 0.0
        %3458 = vmatpush1.msra.mxu0 0.0
        %3459 = vmatprep.subr.mxu0 0.0
        %3460 = vmatpush1.msra.mxu0 0.0
        %3461 = vmatprep.subr.mxu0 0.0
        %3462 = vmatpush1.msra.mxu0 0.0
        %3463 = vmatprep.subr.mxu0 0.0
        %3464 = vmatpush1.msra.mxu0 0.0
        %3465 = vmatprep.subr.mxu0 0.0
        %3466 = vmatpush1.msra.mxu0 0.0
        %3467 = vmatprep.subr.mxu0 0.0
        %3468 = vmatpush1.msra.mxu0 0.0
        %3469 = vmatprep.subr.mxu0 0.0
        %3470 = vmatpush1.msra.mxu0 0.0
        %3471 = vmatprep.subr.mxu0 0.0
        %3472 = vmatpush1.msra.mxu0 0.0
        %3473 = vmatprep.subr.mxu0 0.0
        %3474 = vmatpush1.msra.mxu0 0.0
        %3475 = vmatprep.subr.mxu0 0.0
        %3476 = vmatpush1.msra.mxu0 0.0
        %3477 = vmatprep.subr.mxu0 0.0
        %3478 = vmatpush1.msra.mxu0 0.0
        %3479 = vmatprep.subr.mxu0 0.0
        %3480 = vmatpush1.msra.mxu0 0.0
        %3481 = vmatprep.subr.mxu0 0.0
        %3482 = vmatpush1.msra.mxu0 0.0
        %3483 = vmatprep.subr.mxu0 0.0
        %3484 = vmatpush1.msra.mxu0 %v3302
        %3485 = vmatprep.subr.mxu0 0.0
        %3486 = vmatpush2.msra.mxu0 0.0
        %3487 = vmatprep.subr.mxu0 0.0
        %3488 = vmatpush2.msra.mxu0 0.0
        %3489 = vmatprep.subr.mxu0 0.0
        %3490 = vmatpush2.msra.mxu0 0.0
        %3491 = vmatprep.subr.mxu0 0.0
        %3492 = vmatpush2.msra.mxu0 0.0
        %3493 = vmatprep.subr.mxu0 0.0
        %3494 = vmatpush2.msra.mxu0 0.0
        %3495 = vmatprep.subr.mxu0 0.0
        %3496 = vmatpush2.msra.mxu0 0.0
        %3497 = vmatprep.subr.mxu0 0.0
        %3498 = vmatpush2.msra.mxu0 0.0
        %3499 = vmatprep.subr.mxu0 0.0
        %3500 = vmatpush2.msra.mxu0 0.0
        %3501 = vmatprep.subr.mxu0 0.0
        %3502 = vmatpush2.msra.mxu0 0.0
        %3503 = vmatprep.subr.mxu0 0.0
        %3504 = vmatpush2.msra.mxu0 0.0
        %3505 = vmatprep.subr.mxu0 0.0
        %3506 = vmatpush2.msra.mxu0 0.0
        %3507 = vmatprep.subr.mxu0 0.0
        %3508 = vmatpush2.msra.mxu0 0.0
        %3509 = vmatprep.subr.mxu0 0.0
        %3510 = vmatpush2.msra.mxu0 0.0
        %3511 = vmatprep.subr.mxu0 0.0
        %3512 = vmatpush2.msra.mxu0 0.0
        %3513 = vmatprep.subr.mxu0 0.0
        %3514 = vmatpush2.msra.mxu0 0.0
        %3515 = vmatprep.subr.mxu0 0.0
        %3516 = vmatpush2.msra.mxu0 0.0
        %3517 = vmatprep.mubr.f32.mxu0 0.0
        %3518 = vmatmul.mubr.f32.gmra.mxu0 %v3451
        %v3519 = vpop.f32.mrf.mxu0
        %v3520 = vadd.f32 0.0, %v3519
        %v3521 = vpop.f32.mrf.mxu0
        %3522 = vdwg.mxu0
        %v3524 = vsel %vm966, %v3297, 0
        %3526 = vmatprep.subr.mxu0 0.0
        %3527 = vmatpush1.msra.mxu0 0.0
        %3528 = vmatprep.subr.mxu0 0.0
        %3529 = vmatpush1.msra.mxu0 0.0
        %3530 = vmatprep.subr.mxu0 0.0
        %3531 = vmatpush1.msra.mxu0 0.0
        %3532 = vmatprep.subr.mxu0 0.0
        %3533 = vmatpush1.msra.mxu0 0.0
        %3534 = vmatprep.subr.mxu0 0.0
        %3535 = vmatpush1.msra.mxu0 0.0
        %3536 = vmatprep.subr.mxu0 0.0
        %3537 = vmatpush1.msra.mxu0 0.0
        %3538 = vmatprep.subr.mxu0 0.0
        %3539 = vmatpush1.msra.mxu0 0.0
        %3540 = vmatprep.subr.mxu0 0.0
        %3541 = vmatpush1.msra.mxu0 0.0
        %3542 = vmatprep.subr.mxu0 0.0
        %3543 = vmatpush1.msra.mxu0 0.0
        %3544 = vmatprep.subr.mxu0 0.0
        %3545 = vmatpush1.msra.mxu0 0.0
        %3546 = vmatprep.subr.mxu0 0.0
        %3547 = vmatpush1.msra.mxu0 0.0
        %3548 = vmatprep.subr.mxu0 0.0
        %3549 = vmatpush1.msra.mxu0 0.0
        %3550 = vmatprep.subr.mxu0 0.0
        %3551 = vmatpush1.msra.mxu0 0.0
        %3552 = vmatprep.subr.mxu0 0.0
        %3553 = vmatpush1.msra.mxu0 0.0
        %3554 = vmatprep.subr.mxu0 0.0
        %3555 = vmatpush1.msra.mxu0 0.0
        %3556 = vmatprep.subr.mxu0 0.0
        %3557 = vmatpush1.msra.mxu0 %v3303
        %3558 = vmatprep.subr.mxu0 0.0
        %3559 = vmatpush2.msra.mxu0 0.0
        %3560 = vmatprep.subr.mxu0 0.0
        %3561 = vmatpush2.msra.mxu0 0.0
        %3562 = vmatprep.subr.mxu0 0.0
        %3563 = vmatpush2.msra.mxu0 0.0
        %3564 = vmatprep.subr.mxu0 0.0
        %3565 = vmatpush2.msra.mxu0 0.0
        %3566 = vmatprep.subr.mxu0 0.0
        %3567 = vmatpush2.msra.mxu0 0.0
        %3568 = vmatprep.subr.mxu0 0.0
        %3569 = vmatpush2.msra.mxu0 0.0
        %3570 = vmatprep.subr.mxu0 0.0
        %3571 = vmatpush2.msra.mxu0 0.0
        %3572 = vmatprep.subr.mxu0 0.0
        %3573 = vmatpush2.msra.mxu0 0.0
        %3574 = vmatprep.subr.mxu0 0.0
        %3575 = vmatpush2.msra.mxu0 0.0
        %3576 = vmatprep.subr.mxu0 0.0
        %3577 = vmatpush2.msra.mxu0 0.0
        %3578 = vmatprep.subr.mxu0 0.0
        %3579 = vmatpush2.msra.mxu0 0.0
        %3580 = vmatprep.subr.mxu0 0.0
        %3581 = vmatpush2.msra.mxu0 0.0
        %3582 = vmatprep.subr.mxu0 0.0
        %3583 = vmatpush2.msra.mxu0 0.0
        %3584 = vmatprep.subr.mxu0 0.0
        %3585 = vmatpush2.msra.mxu0 0.0
        %3586 = vmatprep.subr.mxu0 0.0
        %3587 = vmatpush2.msra.mxu0 0.0
        %3588 = vmatprep.subr.mxu0 0.0
        %3589 = vmatpush2.msra.mxu0 0.0
        %3590 = vmatprep.mubr.f32.mxu0 0.0
        %3591 = vmatmul.mubr.f32.gmra.mxu0 %v3524
        %v3592 = vpop.f32.mrf.mxu0
        %v3593 = vadd.f32 0.0, %v3592
        %v3594 = vpop.f32.mrf.mxu0
        %3595 = vdwg.mxu0
        %v3596 = vsel %vm679, %v3374, 0.0
        %v3597 = vsel %vm679, %v3447, 0.0
        %v3598 = vadd.f32 %v3596, %v3597
        %v3599 = vsel %vm679, %v3520, 0.0
        %v3600 = vadd.f32 %v3598, %v3599
        %v3601 = vsel %vm679, %v3593, 0.0
        %v3602 = vadd.f32 %v3600, %v3601
        %v3603 = vld [vmem:[%s12] sm:$0x1]
        %v3605 = vlaneseq
        %v3606 = vshrl.u32 %v3605, 7
        %v3607 = vsub.s32 0, %v3606
        %v3608 = vrot.slane %v3603, %v3607
        %v3610 = vadd.f32 %v3602, %v3608
        %v3611 = vadd.f32 %v1973, %v3610
        %v3612 = vld [vmem:[%s17 + $0x1] sm:$0x1]
        %v3613 = vld [vmem:[%s18 + $0x1] sm:$0x1]
        %v3614 = vsel %vm679, %v3611, 0.0
        %3615 = vadd.xlane.f32.xlu0 %v3614
        %v3616 = vpop.xlane.xlu0 %3615
        %v3617 = vmul.f32 %v3616, %v1953
        %v3618 = vsub.f32 %v3611, %v3617
        %v3619 = vmul.f32 %v3618, %v3618
        %v3620 = vsel %vm679, %v3619, 0.0
        %3621 = vadd.xlane.f32.xlu0 %v3620
        %v3622 = vpop.xlane.xlu0 %3621
        %v3623 = vmul.f32 %v3622, %v1953
        %v3624 = vadd.f32 %v3623, 1e-05
        %v3625 = vrsqrt.pop %v3624
        %v3626 = vmul.f32 %v3618, %v3625
        %v3627 = vlaneseq
        %v3628 = vshrl.u32 %v3627, 7
        %v3629 = vsub.s32 0, %v3628
        %v3630 = vrot.slane %v3612, %v3629
        %v3631 = vmul.f32 %v3626, %v3630
        %v3632 = vlaneseq
        %v3633 = vshrl.u32 %v3632, 7
        %v3634 = vsub.s32 0, %v3633
        %v3635 = vrot.slane %v3613, %v3634
        %v3636 = vadd.f32 %v3631, %v3635
        %v3637 = vld [vmem:[%s13] sm:$0xff]
        %v3638 = vld [vmem:[%s13 + $0x8] sm:$0xff]
        %v3639 = vld [vmem:[%s13 + $0x10] sm:$0xff]
        %v3640 = vld [vmem:[%s13 + $0x18] sm:$0xff]
        %v3641 = vld [vmem:[%s14] sm:$0x1]
        %v3643 = vlaneseq
        %v3644 = vshrl.u32 %v3643, 7
        %v3645 = vsub.s32 0, %v3644
        %v3646 = vrot.slane %v3641, %v3645
        %v3649 = vsel %vm679, %v3636, 0
        %3651 = vmatprep.subr.mxu0 0.0
        %3652 = vmatpush1.msra.mxu0 0.0
        %3653 = vmatprep.subr.mxu0 0.0
        %3654 = vmatpush1.msra.mxu0 0.0
        %3655 = vmatprep.subr.mxu0 0.0
        %3656 = vmatpush1.msra.mxu0 0.0
        %3657 = vmatprep.subr.mxu0 0.0
        %3658 = vmatpush1.msra.mxu0 0.0
        %3659 = vmatprep.subr.mxu0 0.0
        %3660 = vmatpush1.msra.mxu0 0.0
        %3661 = vmatprep.subr.mxu0 0.0
        %3662 = vmatpush1.msra.mxu0 0.0
        %3663 = vmatprep.subr.mxu0 0.0
        %3664 = vmatpush1.msra.mxu0 0.0
        %3665 = vmatprep.subr.mxu0 0.0
        %3666 = vmatpush1.msra.mxu0 0.0
        %3667 = vmatprep.subr.mxu0 0.0
        %3668 = vmatpush1.msra.mxu0 0.0
        %3669 = vmatprep.subr.mxu0 0.0
        %3670 = vmatpush1.msra.mxu0 0.0
        %3671 = vmatprep.subr.mxu0 0.0
        %3672 = vmatpush1.msra.mxu0 0.0
        %3673 = vmatprep.subr.mxu0 0.0
        %3674 = vmatpush1.msra.mxu0 0.0
        %3675 = vmatprep.subr.mxu0 0.0
        %3676 = vmatpush1.msra.mxu0 %v3640
        %3677 = vmatprep.subr.mxu0 0.0
        %3678 = vmatpush1.msra.mxu0 %v3639
        %3679 = vmatprep.subr.mxu0 0.0
        %3680 = vmatpush1.msra.mxu0 %v3638
        %3681 = vmatprep.subr.mxu0 0.0
        %3682 = vmatpush1.msra.mxu0 %v3637
        %3683 = vmatprep.subr.mxu0 0.0
        %3684 = vmatpush2.msra.mxu0 0.0
        %3685 = vmatprep.subr.mxu0 0.0
        %3686 = vmatpush2.msra.mxu0 0.0
        %3687 = vmatprep.subr.mxu0 0.0
        %3688 = vmatpush2.msra.mxu0 0.0
        %3689 = vmatprep.subr.mxu0 0.0
        %3690 = vmatpush2.msra.mxu0 0.0
        %3691 = vmatprep.subr.mxu0 0.0
        %3692 = vmatpush2.msra.mxu0 0.0
        %3693 = vmatprep.subr.mxu0 0.0
        %3694 = vmatpush2.msra.mxu0 0.0
        %3695 = vmatprep.subr.mxu0 0.0
        %3696 = vmatpush2.msra.mxu0 0.0
        %3697 = vmatprep.subr.mxu0 0.0
        %3698 = vmatpush2.msra.mxu0 0.0
        %3699 = vmatprep.subr.mxu0 0.0
        %3700 = vmatpush2.msra.mxu0 0.0
        %3701 = vmatprep.subr.mxu0 0.0
        %3702 = vmatpush2.msra.mxu0 0.0
        %3703 = vmatprep.subr.mxu0 0.0
        %3704 = vmatpush2.msra.mxu0 0.0
        %3705 = vmatprep.subr.mxu0 0.0
        %3706 = vmatpush2.msra.mxu0 0.0
        %3707 = vmatprep.subr.mxu0 0.0
        %3708 = vmatpush2.msra.mxu0 0.0
        %3709 = vmatprep.subr.mxu0 0.0
        %3710 = vmatpush2.msra.mxu0 0.0
        %3711 = vmatprep.subr.mxu0 0.0
        %3712 = vmatpush2.msra.mxu0 0.0
        %3713 = vmatprep.subr.mxu0 0.0
        %3714 = vmatpush2.msra.mxu0 0.0
        %3715 = vmatprep.mubr.f32.mxu0 0.0
        %3716 = vmatmul.mubr.f32.gmra.mxu0 %v3649
        %v3717 = vpop.f32.mrf.mxu0
        %v3718 = vadd.f32 %v3646, %v3717
        %v3719 = vpop.f32.mrf.mxu0
        %3720 = vdwg.mxu0
        %v3721 = vmax.f32 %v3718, 0.0
        %v3722 = vld [vmem:[%s15] sm:$0xff]
        %v3723 = vld [vmem:[%s15 + $0x8] sm:$0xff]
        %v3724 = vld [vmem:[%s15 + $0x10] sm:$0xff]
        %v3725 = vld [vmem:[%s15 + $0x18] sm:$0xff]
        %v3726 = vld [vmem:[%s15 + $0x20] sm:$0xff]
        %v3727 = vld [vmem:[%s15 + $0x28] sm:$0xff]
        %v3728 = vld [vmem:[%s15 + $0x30] sm:$0xff]
        %v3729 = vld [vmem:[%s15 + $0x38] sm:$0xff]
        %v3730 = vld [vmem:[%s16] sm:$0x1]
        %v3732 = vlaneseq
        %v3733 = vshrl.u32 %v3732, 7
        %v3734 = vsub.s32 0, %v3733
        %v3735 = vrot.slane %v3730, %v3734
        %vm3737 = vcmask 523264
        %v3739 = vsel %vm3737, %v3721, 0
        %3741 = vmatprep.subr.mxu0 0.0
        %3742 = vmatpush1.msra.mxu0 0.0
        %3743 = vmatprep.subr.mxu0 0.0
        %3744 = vmatpush1.msra.mxu0 0.0
        %3745 = vmatprep.subr.mxu0 0.0
        %3746 = vmatpush1.msra.mxu0 0.0
        %3747 = vmatprep.subr.mxu0 0.0
        %3748 = vmatpush1.msra.mxu0 0.0
        %3749 = vmatprep.subr.mxu0 0.0
        %3750 = vmatpush1.msra.mxu0 0.0
        %3751 = vmatprep.subr.mxu0 0.0
        %3752 = vmatpush1.msra.mxu0 0.0
        %3753 = vmatprep.subr.mxu0 0.0
        %3754 = vmatpush1.msra.mxu0 0.0
        %3755 = vmatprep.subr.mxu0 0.0
        %3756 = vmatpush1.msra.mxu0 0.0
        %3757 = vmatprep.subr.mxu0 0.0
        %3758 = vmatpush1.msra.mxu0 %v3729
        %3759 = vmatprep.subr.mxu0 0.0
        %3760 = vmatpush1.msra.mxu0 %v3728
        %3761 = vmatprep.subr.mxu0 0.0
        %3762 = vmatpush1.msra.mxu0 %v3727
        %3763 = vmatprep.subr.mxu0 0.0
        %3764 = vmatpush1.msra.mxu0 %v3726
        %3765 = vmatprep.subr.mxu0 0.0
        %3766 = vmatpush1.msra.mxu0 %v3725
        %3767 = vmatprep.subr.mxu0 0.0
        %3768 = vmatpush1.msra.mxu0 %v3724
        %3769 = vmatprep.subr.mxu0 0.0
        %3770 = vmatpush1.msra.mxu0 %v3723
        %3771 = vmatprep.subr.mxu0 0.0
        %3772 = vmatpush1.msra.mxu0 %v3722
        %3773 = vmatprep.subr.mxu0 0.0
        %3774 = vmatpush2.msra.mxu0 0.0
        %3775 = vmatprep.subr.mxu0 0.0
        %3776 = vmatpush2.msra.mxu0 0.0
        %3777 = vmatprep.subr.mxu0 0.0
        %3778 = vmatpush2.msra.mxu0 0.0
        %3779 = vmatprep.subr.mxu0 0.0
        %3780 = vmatpush2.msra.mxu0 0.0
        %3781 = vmatprep.subr.mxu0 0.0
        %3782 = vmatpush2.msra.mxu0 0.0
        %3783 = vmatprep.subr.mxu0 0.0
        %3784 = vmatpush2.msra.mxu0 0.0
        %3785 = vmatprep.subr.mxu0 0.0
        %3786 = vmatpush2.msra.mxu0 0.0
        %3787 = vmatprep.subr.mxu0 0.0
        %3788 = vmatpush2.msra.mxu0 0.0
        %3789 = vmatprep.subr.mxu0 0.0
        %3790 = vmatpush2.msra.mxu0 0.0
        %3791 = vmatprep.subr.mxu0 0.0
        %3792 = vmatpush2.msra.mxu0 0.0
        %3793 = vmatprep.subr.mxu0 0.0
        %3794 = vmatpush2.msra.mxu0 0.0
        %3795 = vmatprep.subr.mxu0 0.0
        %3796 = vmatpush2.msra.mxu0 0.0
        %3797 = vmatprep.subr.mxu0 0.0
        %3798 = vmatpush2.msra.mxu0 0.0
        %3799 = vmatprep.subr.mxu0 0.0
        %3800 = vmatpush2.msra.mxu0 0.0
        %3801 = vmatprep.subr.mxu0 0.0
        %3802 = vmatpush2.msra.mxu0 0.0
        %3803 = vmatprep.subr.mxu0 0.0
        %3804 = vmatpush2.msra.mxu0 0.0
        %3805 = vmatprep.mubr.f32.mxu0 0.0
        %3806 = vmatmul.mubr.f32.gmra.mxu0 %v3739
        %v3807 = vpop.f32.mrf.mxu0
        %v3808 = vadd.f32 %v3735, %v3807
        %v3809 = vpop.f32.mrf.mxu0
        %3810 = vdwg.mxu0
        %v3811 = vadd.f32 %v3636, %v3808
        %v3812 = vld [vmem:[%s17 + $0x2] sm:$0x1]
        %v3813 = vld [vmem:[%s18 + $0x2] sm:$0x1]
        %v3814 = vsel %vm679, %v3811, 0.0
        %3815 = vadd.xlane.f32.xlu0 %v3814
        %v3816 = vpop.xlane.xlu0 %3815
        %v3817 = vmul.f32 %v3816, %v1953
        %v3818 = vsub.f32 %v3811, %v3817
        %v3819 = vmul.f32 %v3818, %v3818
        %v3820 = vsel %vm679, %v3819, 0.0
        %3821 = vadd.xlane.f32.xlu0 %v3820
        %v3822 = vpop.xlane.xlu0 %3821
        %v3823 = vmul.f32 %v3822, %v1953
        %v3824 = vadd.f32 %v3823, 1e-05
        %v3825 = vrsqrt.pop %v3824
        %v3826 = vmul.f32 %v3818, %v3825
        %v3827 = vlaneseq
        %v3828 = vshrl.u32 %v3827, 7
        %v3829 = vsub.s32 0, %v3828
        %v3830 = vrot.slane %v3812, %v3829
        %v3831 = vmul.f32 %v3826, %v3830
        %v3832 = vlaneseq
        %v3833 = vshrl.u32 %v3832, 7
        %v3834 = vsub.s32 0, %v3833
        %v3835 = vrot.slane %v3813, %v3834
        %v3836 = vadd.f32 %v3831, %v3835
        %3837 = vst.msk [vmem:[%s619] sm:$0xff] %vm679, %v3836
        %s3838 = sand.u32 %s455, 1
        %s3839 = scalar_lea.sflag [#allocation3], %s3838
        %s3840 = sand.u32 %s455, 1
        %s3841 = smul.addr %s3840, 8
        %s3842 = scalar_lea.vmem [#allocation2], %s3841
        // Predicated region
        $region97: #{tpu_custom_call.1} parent=95 // pred_check
          %p3843 = pneg %p465
        $region98: #{tpu_custom_call.1} parent=95 // pred_check_branch
          %3845 = sbr.rel (%p3843) target = $region100
        $region99: #{tpu_custom_call.1} parent=95 // pred_region
          %s3847 = ssub.s32 128, 128
          %3848 = vsyncadd %s3839, %s3847
          %s3849 = smul.addr %s33, 128
          %s3850 = scalar_lea.hbm %s19, %s3849
          %s3852 = sshll.u32 %s3842, 4
          %s3853 = int_to_ptr.vmem [resolvable:$true] %s3852
          %3855 = dma.vmem_to_hbm [thread:$0]  %s3853, 128, %s3850, %s3839
        $region100: #{tpu_custom_call.1} parent=95 // pred_fallthru
          _
      $region96: #{tpu_custom_call.1} parent=5 // pred_fallthru
        _
      %p3856 = scmp.le.s32.totalorder 2, %s28
      // Predicated region
      $region101: #{tpu_custom_call.1} parent=5 // pred_check
        %p3857 = pneg %p3856
      $region102: #{tpu_custom_call.1} parent=5 // pred_check_branch
        %3859 = sbr.rel (%p3857) target = $region104
      $region103: #{tpu_custom_call.1} parent=5 // pred_region
        %s3860 = ssub.s32 %s28, 2
        // Predicated region
        $region105: #{tpu_custom_call.1} parent=103 // pred_check
          %p3861 = pneg %p471
        $region106: #{tpu_custom_call.1} parent=103 // pred_check_branch
          %3863 = sbr.rel (%p3861) target = $region108
        $region107: #{tpu_custom_call.1} parent=103 // pred_region
          %s3864 = sand.u32 %s456, 1
          %s3865 = scalar_lea.sflag [#allocation3], %s3864
          %s3866 = sand.u32 %s456, 1
          %s3867 = smul.addr %s3866, 8
          %s3868 = scalar_lea.vmem [#allocation2], %s3867
          %3869 = dma.done %s3865, 128
        $region108: #{tpu_custom_call.1} parent=103 // pred_fallthru
          _
      $region104: #{tpu_custom_call.1} parent=5 // pred_fallthru
        _
    $region6: #{tpu_custom_call.1} parent=1 // loop_footer
      %s32 = sadd.s32 1, %s28
    $region7: #{tpu_custom_call.1} parent=1 // loop_footer_branch
      %27 = sbr.rel target = $region3
    $region8: #{tpu_custom_call.1} parent=1 // loop_exit
      _
    %3870 = vsyncpa [#allocation3], 1
    %s3871 = scalar_lea.sflag [#allocation3], 1
    %3872 = vsyncpa %s3871, 1

</llo_original>
